<compile_context>
chip_gen: v7x
topology: tpu7x:2x2x1
jax: 0.10.0
libtpu: 0.0.40
codegen_flags: <defaults>
</compile_context>

<pallas_src>
import functools

import jax
import jax.numpy as jnp
from jax import lax
from jax.experimental import pallas as pl
from jax.experimental.pallas import tpu as pltpu

LEAK = 0.2
NEG_INF = -9e15
OUT_PAD = 128          # lane-dense padded width of the (B, 3) property output


def _leaky(x):
    # valid because LEAK < 1: max(x, 0.2x) == leaky_relu(x, 0.2)
    return jnp.maximum(x, LEAK * x)


def _full_spec(arr):
    """Grid-invariant BlockSpec covering the whole (weight) array."""
    nd = arr.ndim
    return pl.BlockSpec(arr.shape, lambda b, _nd=nd: (0,) * _nd)


def _auto_batch_tile(batch, n_nodes, n_relations):
    """Batch tile: fill MXU rows (~256) but keep >=2 parallel grid steps (v7x)
    and a modest per-step VMEM working set (v7x has 64 MiB)."""
    if batch <= 1:
        return 1
    rows_target = max(1, 256 // max(n_nodes, 1))
    bytes_per_graph = 4 * n_relations * n_nodes * n_nodes + 8 * n_nodes * n_nodes
    vmem_cap = max(1, (8 << 20) // max(bytes_per_graph, 1))
    two_steps = -(-batch // 2)          # ceil(B/2): at least two grid steps
    return int(max(1, min(rows_target, vmem_cap, two_steps)))


# ----------------------------------------------------------------------------
# Fused kernel: all GAT layers + property head for one batch tile.
# ----------------------------------------------------------------------------
def _fused_kernel(x_ref, adj_ref, *refs, n_layers, n_relations, b_tile, n_nodes):
    o_ref = refs[-1]
    layer_refs = refs[:4 * n_layers]
    w1a_ref, w1b_ref, hb1_ref, w2_ref, hb2_ref = refs[4 * n_layers:-1]

    T, N, R = b_tile, n_nodes, n_relations
    M = T * N

    # Bond mask material, loaded/widened ONCE per tile and reused by all layers.
    adj_f = adj_ref[...].astype(jnp.float32)                   # (T, R, N, N)

    # Pack the whole batch tile along rows: (T, N, c_in) -> (T*N, c_in)
    h2 = x_ref[...].reshape(M, x_ref.shape[-1])

    for li in range(n_layers):
        w_ref, b_ref, asrc_ref, adstT_ref = layer_refs[4 * li:4 * li + 4]
        c = w_ref.shape[1] // R                                 # c_out this layer

        # --- 3 batch-packed MXU ops per layer -------------------------------
        nf2 = jnp.dot(h2, w_ref[...],
                      preferred_element_type=jnp.float32) + b_ref[...]      # (M, R*c)
        s_src = jnp.dot(nf2, asrc_ref[...],
                        preferred_element_type=jnp.float32)                 # (M, R)
        # s_dstT[r, m] = nf_r[m] · a_dst[r]  (nodes land in lanes, no relayout)
        s_dstT = lax.dot_general(adstT_ref[...], nf2, (((1,), (1,)), ((), ())),
                                 preferred_element_type=jnp.float32)        # (R, M)

        # --- per-graph attention / softmax / aggregation --------------------
        outs = []
        for b in range(T):
            nf_b = nf2[b * N:(b + 1) * N, :]                    # (N, R*c)
            masked, nf_blocks = [], []
            for r in range(R):
                col = s_src[b * N:(b + 1) * N, r:r + 1]         # (N, 1)
                row = s_dstT[r:r + 1, b * N:(b + 1) * N]        # (1, N)
                logit = _leaky(col + row)                       # (N, N)
                masked.append(jnp.where(adj_f[b, r] > 0.5, logit, NEG_INF))
                nf_blocks.append(nf_b[:, r * c:(r + 1) * c])    # (N, c)
            m_all = jnp.concatenate(masked, axis=1)             # (N, R*N)
            nf_stack = jnp.concatenate(nf_blocks, axis=0)       # (R*N, c)
            mx = jnp.max(m_all, axis=1, keepdims=True)
            p = jnp.exp(m_all - mx)
            denom = jnp.sum(p, axis=1, keepdims=True)
            agg = jnp.dot(p, nf_stack,
                          preferred_element_type=jnp.float32)   # (N, c)
            outs.append(agg / denom)                            # exact softmax norm
        h2 = jnp.concatenate(outs, axis=0)                      # (M, c)

        if li < n_layers - 1:
            h2 = _leaky(h2)
            # TODO(synk): Dropout(0.2) between GAT layers is identity (eval mode).

    # --- property head: mean/max pooling per graph + 2-layer MLP, batched ---
    c_out = h2.shape[-1]
    h3 = h2.reshape(T, N, c_out)
    mean = jnp.mean(h3, axis=1)                                 # (T, c_out)
    mxp = jnp.max(h3, axis=1)                                   # (T, c_out)
    z = (jnp.dot(mean, w1a_ref[...], preferred_element_type=jnp.float32)
         + jnp.dot(mxp, w1b_ref[...], preferred_element_type=jnp.float32)
         + hb1_ref[...])
    z = _leaky(z)
    # TODO(synk): head Dropout(0.2) is identity (eval mode).
    out = jnp.dot(z, w2_ref[...],
                  preferred_element_type=jnp.float32) + hb2_ref[...]        # (T, 128)
    o_ref[...] = out.reshape(1, T, OUT_PAD)                     # lane-dense store


# ----------------------------------------------------------------------------
# Full RewardModel forward (single pallas_call over batch tiles).
# ----------------------------------------------------------------------------
def reward_model_forward(x, bonds, params, b_tile=None):
    B, N, c_in = x.shape
    R = bonds.shape[-1]
    gat = params["gat"]
    head = params["head"]
    n_layers = len(gat)

    T = int(b_tile) if b_tile else _auto_batch_tile(B, N, R)
    n_tiles = -(-B // T)
    B_pad = n_tiles * T
    if B_pad != B:
        x = jnp.pad(x, ((0, B_pad - B), (0, 0), (0, 0)))
        bonds = jnp.pad(bonds, ((0, B_pad - B), (0, 0), (0, 0), (0, 0)))

    # Compact int8 adjacency (B, R, N, N): ~4x less HBM traffic than an f32
    # mask; the 0 / -9e15 masking happens inside the kernel on the VPU.
    adj = jnp.transpose(bonds, (0, 3, 1, 2)).astype(jnp.int8)

    inputs = [x, adj]
    in_specs = [
        pl.BlockSpec((T, N, c_in), lambda b: (b, 0, 0)),
        pl.BlockSpec((T, R, N, N), lambda b: (b, 0, 0, 0)),
    ]
    for lp in gat:
        for name in ("w", "b", "a_src_bd", "a_dst_bdT"):
            arr = lp[name]
            inputs.append(arr)
            in_specs.append(_full_spec(arr))

    # Head weights; last Linear padded to 128 output lanes for a dense store.
    c_out = head["w2"].shape[0]
    w2p = jnp.zeros((c_out, OUT_PAD), jnp.float32).at[:, :3].set(head["w2"])
    b2p = jnp.zeros((1, OUT_PAD), jnp.float32).at[:, :3].set(head["b2"])
    for arr in (head["w1a"], head["w1b"], head["b1"], w2p, b2p):
        inputs.append(arr)
        in_specs.append(_full_spec(arr))

    kernel = functools.partial(_fused_kernel, n_layers=n_layers,
                               n_relations=R, b_tile=T, n_nodes=N)
    out = pl.pallas_call(
        kernel,
        out_shape=jax.ShapeDtypeStruct((n_tiles, T, OUT_PAD), jnp.float32),
        grid=(n_tiles,),
        in_specs=in_specs,
        out_specs=pl.BlockSpec((1, T, OUT_PAD), lambda b: (b, 0, 0)),
        compiler_params=pltpu.CompilerParams(dimension_semantics=("parallel",)),
    )(*inputs)
    return out.reshape(B_pad, OUT_PAD)[:B, :3]                  # (B, 3)


# ----------------------------------------------------------------------------
# Deterministic synthetic parameters (xavier-like scales).
#   * projection weights pre-packed as (c_in, R*c_out)  (relation r at lanes
#     [r*c_out, (r+1)*c_out), matching torch's view(bs, n, R, c_out)).
#   * attention vectors pre-packed as block-diagonal matrices so the kernel
#     computes all relation scores with two matmuls.
# ----------------------------------------------------------------------------
def _block_diag_from(a_part):
    """(R, c) -> block-diagonal (R*c, R): column r holds a_part[r] at rows r*c:(r+1)*c."""
    R, c = a_part.shape
    eye = jnp.eye(R, dtype=a_part.dtype)
    return (a_part[:, :, None] * eye[:, None, :]).reshape(R * c, R)


def _init_gat_params(key, c_in, c_out, n_relations):
    k1, k2, k3 = jax.random.split(key, 3)
    scale_w = 1.414 / jnp.sqrt(jnp.float32(c_in + c_out))
    scale_a = 1.414 / jnp.sqrt(jnp.float32(2 * c_out))
    w = jax.random.normal(k1, (c_in, n_relations * c_out), jnp.float32) * scale_w
    b = jax.random.normal(k2, (1, n_relations * c_out), jnp.float32) * 0.01
    a = jax.random.normal(k3, (n_relations, 2 * c_out), jnp.float32) * scale_a
    a_src_bd = _block_diag_from(a[:, :c_out])                   # (R*c, R)
    a_dst_bd = _block_diag_from(a[:, c_out:])                   # (R*c, R)
    return {"w": w, "b": b, "a_src_bd": a_src_bd, "a_dst_bdT": a_dst_bd.T}


def init_reward_model_params(key, c_in, c_out, c_hidden=None,
                             n_relations=5, n_layers=3):
    c_hidden = c_hidden if c_hidden else c_out
    keys = jax.random.split(key, n_layers + 4)
    gat = []
    cin = c_in
    for li in range(n_layers):
        cout = c_hidden if li < n_layers - 1 else c_out
        gat.append(_init_gat_params(keys[li], cin, cout, n_relations))
        cin = c_hidden
    k1, k2, k3, k4 = keys[n_layers:n_layers + 4]
    s1 = 1.0 / jnp.sqrt(jnp.float32(2 * c_out))
    s2 = 1.0 / jnp.sqrt(jnp.float32(c_out))
    w1 = jax.random.normal(k1, (2 * c_out, c_out), jnp.float32) * s1
    b1 = jax.random.normal(k2, (1, c_out), jnp.float32) * 0.01
    w2 = jax.random.normal(k3, (c_out, 3), jnp.float32) * s2
    b2 = jax.random.normal(k4, (1, 3), jnp.float32) * 0.01
    head = {"w1a": w1[:c_out], "w1b": w1[c_out:], "b1": b1, "w2": w2, "b2": b2}
    return {"gat": gat, "head": head}


if __name__ == "__main__":
    B, N = 4, 8          # batch, ligand_size (nodes)
    C_IN, C_OUT = 16, 8  # input / output feature dims (c_hidden defaults to c_out)
    R = 5                # bond relation types
    N_LAYERS = 3

    key = jax.random.PRNGKey(0)
    kx, kb, kp = jax.random.split(key, 3)

    # synthetic atom features and one-hot bond adjacency (with self-connections)
    x = jax.random.normal(kx, (B, N, C_IN), jnp.float32)
    bond_types = jax.random.randint(kb, (B, N, N), 0, R)
    bonds = jax.nn.one_hot(bond_types, R, dtype=jnp.float32)    # (B, N, N, R)

    params = init_reward_model_params(kp, C_IN, C_OUT,
                                      n_relations=R, n_layers=N_LAYERS)

    fwd = jax.jit(reward_model_forward)
    props = fwd(x, bonds, params)
    jax.block_until_ready(props)
    assert props.shape == (B, 3) and props.dtype == jnp.float32
    assert bool(jnp.all(jnp.isfinite(props)))
    print("KERNEL_OK")
</pallas_src>

<mosaic_0001>
module attributes {stable_mosaic.version = 11 : i64} {
  func.func @_fused_kernel(%arg0: i32, %arg1: memref<2x8x16xf32, #tpu.memory_space<vmem>>, %arg2: memref<2x5x8x8xi8, #tpu.memory_space<vmem>>, %arg3: memref<16x40xf32, #tpu.memory_space<vmem>>, %arg4: memref<1x40xf32, #tpu.memory_space<vmem>>, %arg5: memref<40x5xf32, #tpu.memory_space<vmem>>, %arg6: memref<5x40xf32, #tpu.memory_space<vmem>>, %arg7: memref<8x40xf32, #tpu.memory_space<vmem>>, %arg8: memref<1x40xf32, #tpu.memory_space<vmem>>, %arg9: memref<40x5xf32, #tpu.memory_space<vmem>>, %arg10: memref<5x40xf32, #tpu.memory_space<vmem>>, %arg11: memref<8x40xf32, #tpu.memory_space<vmem>>, %arg12: memref<1x40xf32, #tpu.memory_space<vmem>>, %arg13: memref<40x5xf32, #tpu.memory_space<vmem>>, %arg14: memref<5x40xf32, #tpu.memory_space<vmem>>, %arg15: memref<8x8xf32, #tpu.memory_space<vmem>>, %arg16: memref<8x8xf32, #tpu.memory_space<vmem>>, %arg17: memref<1x8xf32, #tpu.memory_space<vmem>>, %arg18: memref<8x128xf32, #tpu.memory_space<vmem>>, %arg19: memref<1x128xf32, #tpu.memory_space<vmem>>, %arg20: memref<1x2x128xf32, #tpu.memory_space<vmem>>) attributes {dimension_semantics = [#tpu.dimension_semantics<parallel>], iteration_bounds = array<i64: 2>, scalar_prefetch = 0 : i64, scratch_operands = 0 : i64, tpu.core_type = #tpu.core_type<tc>, window_params = [{transform_indices = @transform_0, window_bounds = array<i64: 2, 8, 16>}, {transform_indices = @transform_1, window_bounds = array<i64: 2, 5, 8, 8>}, {pipeline_mode = #tpu.pipeline_mode<synchronous>, transform_indices = @transform_2, window_bounds = array<i64: 16, 40>}, {pipeline_mode = #tpu.pipeline_mode<synchronous>, transform_indices = @transform_3, window_bounds = array<i64: 1, 40>}, {pipeline_mode = #tpu.pipeline_mode<synchronous>, transform_indices = @transform_4, window_bounds = array<i64: 40, 5>}, {pipeline_mode = #tpu.pipeline_mode<synchronous>, transform_indices = @transform_5, window_bounds = array<i64: 5, 40>}, {pipeline_mode = #tpu.pipeline_mode<synchronous>, transform_indices = @transform_6, window_bounds = array<i64: 8, 40>}, {pipeline_mode = #tpu.pipeline_mode<synchronous>, transform_indices = @transform_7, window_bounds = array<i64: 1, 40>}, {pipeline_mode = #tpu.pipeline_mode<synchronous>, transform_indices = @transform_8, window_bounds = array<i64: 40, 5>}, {pipeline_mode = #tpu.pipeline_mode<synchronous>, transform_indices = @transform_9, window_bounds = array<i64: 5, 40>}, {pipeline_mode = #tpu.pipeline_mode<synchronous>, transform_indices = @transform_10, window_bounds = array<i64: 8, 40>}, {pipeline_mode = #tpu.pipeline_mode<synchronous>, transform_indices = @transform_11, window_bounds = array<i64: 1, 40>}, {pipeline_mode = #tpu.pipeline_mode<synchronous>, transform_indices = @transform_12, window_bounds = array<i64: 40, 5>}, {pipeline_mode = #tpu.pipeline_mode<synchronous>, transform_indices = @transform_13, window_bounds = array<i64: 5, 40>}, {pipeline_mode = #tpu.pipeline_mode<synchronous>, transform_indices = @transform_14, window_bounds = array<i64: 8, 8>}, {pipeline_mode = #tpu.pipeline_mode<synchronous>, transform_indices = @transform_15, window_bounds = array<i64: 8, 8>}, {pipeline_mode = #tpu.pipeline_mode<synchronous>, transform_indices = @transform_16, window_bounds = array<i64: 1, 8>}, {pipeline_mode = #tpu.pipeline_mode<synchronous>, transform_indices = @transform_17, window_bounds = array<i64: 8, 128>}, {pipeline_mode = #tpu.pipeline_mode<synchronous>, transform_indices = @transform_18, window_bounds = array<i64: 1, 128>}, {transform_indices = @transform_19, window_bounds = array<i64: 1, 2, 128>}]} {
    %c0 = arith.constant 0 : index
    %c0_0 = arith.constant 0 : index
    %c0_1 = arith.constant 0 : index
    %c0_2 = arith.constant 0 : index
    %0 = vector.load %arg2[%c0, %c0_0, %c0_1, %c0_2] : memref<2x5x8x8xi8, #tpu.memory_space<vmem>>, vector<2x5x8x8xi8>
    %1 = arith.sitofp %0 : vector<2x5x8x8xi8> to vector<2x5x8x8xf32>
    %c0_3 = arith.constant 0 : index
    %c0_4 = arith.constant 0 : index
    %c0_5 = arith.constant 0 : index
    %2 = vector.load %arg1[%c0_3, %c0_4, %c0_5] : memref<2x8x16xf32, #tpu.memory_space<vmem>>, vector<2x8x16xf32>
    %3 = vector.shape_cast %2 : vector<2x8x16xf32> to vector<16x16xf32>
    %c0_6 = arith.constant 0 : index
    %c0_7 = arith.constant 0 : index
    %4 = vector.load %arg3[%c0_6, %c0_7] : memref<16x40xf32, #tpu.memory_space<vmem>>, vector<16x40xf32>
    %cst = arith.constant dense<0.000000e+00> : vector<16x40xf32>
    %5 = tpu.matmul %3, %4, %cst {dimension_numbers = #tpu.dot_dimension_numbers<[1], [0], [0], [1], [0, 0, 1, 1], [], []>} : vector<16x16xf32>, vector<16x40xf32>, vector<16x40xf32> -> vector<16x40xf32>
    %c0_8 = arith.constant 0 : index
    %c0_9 = arith.constant 0 : index
    %6 = vector.load %arg4[%c0_8, %c0_9] : memref<1x40xf32, #tpu.memory_space<vmem>>, vector<1x40xf32>
    %7 = vector.broadcast %6 : vector<1x40xf32> to vector<16x40xf32>
    %8 = arith.addf %5, %7 : vector<16x40xf32>
    %c0_10 = arith.constant 0 : index
    %c0_11 = arith.constant 0 : index
    %9 = vector.load %arg5[%c0_10, %c0_11] : memref<40x5xf32, #tpu.memory_space<vmem>>, vector<40x5xf32>
    %cst_12 = arith.constant dense<0.000000e+00> : vector<16x5xf32>
    %10 = tpu.matmul %8, %9, %cst_12 {dimension_numbers = #tpu.dot_dimension_numbers<[1], [0], [0], [1], [0, 0, 1, 1], [], []>} : vector<16x40xf32>, vector<40x5xf32>, vector<16x5xf32> -> vector<16x5xf32>
    %c0_13 = arith.constant 0 : index
    %c0_14 = arith.constant 0 : index
    %11 = vector.load %arg6[%c0_13, %c0_14] : memref<5x40xf32, #tpu.memory_space<vmem>>, vector<5x40xf32>
    %cst_15 = arith.constant dense<0.000000e+00> : vector<5x16xf32>
    %12 = tpu.matmul %11, %8, %cst_15 {dimension_numbers = #tpu.dot_dimension_numbers<[1], [1], [0], [0], [0, 0, 1, 0], [], []>} : vector<5x40xf32>, vector<16x40xf32>, vector<5x16xf32> -> vector<5x16xf32>
    %13 = vector.extract_strided_slice %8 {offsets = [0, 0], sizes = [8, 40], strides = [1, 1]} : vector<16x40xf32> to vector<8x40xf32>
    %14 = vector.extract_strided_slice %10 {offsets = [0, 0], sizes = [8, 1], strides = [1, 1]} : vector<16x5xf32> to vector<8x1xf32>
    %15 = vector.extract_strided_slice %12 {offsets = [0, 0], sizes = [1, 8], strides = [1, 1]} : vector<5x16xf32> to vector<1x8xf32>
    %16 = vector.broadcast %14 : vector<8x1xf32> to vector<8x8xf32>
    %17 = vector.broadcast %15 : vector<1x8xf32> to vector<8x8xf32>
    %18 = arith.addf %16, %17 : vector<8x8xf32>
    %cst_16 = arith.constant 2.000000e-01 : f32
    %19 = vector.broadcast %cst_16 : f32 to vector<8x8xf32>
    %20 = arith.mulf %19, %18 : vector<8x8xf32>
    %21 = arith.maximumf %18, %20 : vector<8x8xf32>
    %22 = vector.extract_strided_slice %1 {offsets = [0, 0, 0, 0], sizes = [1, 1, 8, 8], strides = [1, 1, 1, 1]} : vector<2x5x8x8xf32> to vector<1x1x8x8xf32>
    %23 = vector.shape_cast %22 : vector<1x1x8x8xf32> to vector<8x8xf32>
    %cst_17 = arith.constant 5.000000e-01 : f32
    %24 = vector.broadcast %cst_17 : f32 to vector<8x8xf32>
    %25 = arith.cmpf ogt, %23, %24 : vector<8x8xf32>
    %cst_18 = arith.constant -9.000000e+15 : f32
    %26 = vector.broadcast %cst_18 : f32 to vector<8x8xf32>
    %27 = arith.select %25, %21, %26 : vector<8x8xi1>, vector<8x8xf32>
    %28 = vector.extract_strided_slice %13 {offsets = [0, 0], sizes = [8, 8], strides = [1, 1]} : vector<8x40xf32> to vector<8x8xf32>
    %29 = vector.extract_strided_slice %10 {offsets = [0, 1], sizes = [8, 1], strides = [1, 1]} : vector<16x5xf32> to vector<8x1xf32>
    %30 = vector.extract_strided_slice %12 {offsets = [1, 0], sizes = [1, 8], strides = [1, 1]} : vector<5x16xf32> to vector<1x8xf32>
    %31 = vector.broadcast %29 : vector<8x1xf32> to vector<8x8xf32>
    %32 = vector.broadcast %30 : vector<1x8xf32> to vector<8x8xf32>
    %33 = arith.addf %31, %32 : vector<8x8xf32>
    %cst_19 = arith.constant 2.000000e-01 : f32
    %34 = vector.broadcast %cst_19 : f32 to vector<8x8xf32>
    %35 = arith.mulf %34, %33 : vector<8x8xf32>
    %36 = arith.maximumf %33, %35 : vector<8x8xf32>
    %37 = vector.extract_strided_slice %1 {offsets = [0, 1, 0, 0], sizes = [1, 1, 8, 8], strides = [1, 1, 1, 1]} : vector<2x5x8x8xf32> to vector<1x1x8x8xf32>
    %38 = vector.shape_cast %37 : vector<1x1x8x8xf32> to vector<8x8xf32>
    %cst_20 = arith.constant 5.000000e-01 : f32
    %39 = vector.broadcast %cst_20 : f32 to vector<8x8xf32>
    %40 = arith.cmpf ogt, %38, %39 : vector<8x8xf32>
    %cst_21 = arith.constant -9.000000e+15 : f32
    %41 = vector.broadcast %cst_21 : f32 to vector<8x8xf32>
    %42 = arith.select %40, %36, %41 : vector<8x8xi1>, vector<8x8xf32>
    %43 = vector.extract_strided_slice %13 {offsets = [0, 8], sizes = [8, 8], strides = [1, 1]} : vector<8x40xf32> to vector<8x8xf32>
    %44 = vector.extract_strided_slice %10 {offsets = [0, 2], sizes = [8, 1], strides = [1, 1]} : vector<16x5xf32> to vector<8x1xf32>
    %45 = vector.extract_strided_slice %12 {offsets = [2, 0], sizes = [1, 8], strides = [1, 1]} : vector<5x16xf32> to vector<1x8xf32>
    %46 = vector.broadcast %44 : vector<8x1xf32> to vector<8x8xf32>
    %47 = vector.broadcast %45 : vector<1x8xf32> to vector<8x8xf32>
    %48 = arith.addf %46, %47 : vector<8x8xf32>
    %cst_22 = arith.constant 2.000000e-01 : f32
    %49 = vector.broadcast %cst_22 : f32 to vector<8x8xf32>
    %50 = arith.mulf %49, %48 : vector<8x8xf32>
    %51 = arith.maximumf %48, %50 : vector<8x8xf32>
    %52 = vector.extract_strided_slice %1 {offsets = [0, 2, 0, 0], sizes = [1, 1, 8, 8], strides = [1, 1, 1, 1]} : vector<2x5x8x8xf32> to vector<1x1x8x8xf32>
    %53 = vector.shape_cast %52 : vector<1x1x8x8xf32> to vector<8x8xf32>
    %cst_23 = arith.constant 5.000000e-01 : f32
    %54 = vector.broadcast %cst_23 : f32 to vector<8x8xf32>
    %55 = arith.cmpf ogt, %53, %54 : vector<8x8xf32>
    %cst_24 = arith.constant -9.000000e+15 : f32
    %56 = vector.broadcast %cst_24 : f32 to vector<8x8xf32>
    %57 = arith.select %55, %51, %56 : vector<8x8xi1>, vector<8x8xf32>
    %58 = vector.extract_strided_slice %13 {offsets = [0, 16], sizes = [8, 8], strides = [1, 1]} : vector<8x40xf32> to vector<8x8xf32>
    %59 = vector.extract_strided_slice %10 {offsets = [0, 3], sizes = [8, 1], strides = [1, 1]} : vector<16x5xf32> to vector<8x1xf32>
    %60 = vector.extract_strided_slice %12 {offsets = [3, 0], sizes = [1, 8], strides = [1, 1]} : vector<5x16xf32> to vector<1x8xf32>
    %61 = vector.broadcast %59 : vector<8x1xf32> to vector<8x8xf32>
    %62 = vector.broadcast %60 : vector<1x8xf32> to vector<8x8xf32>
    %63 = arith.addf %61, %62 : vector<8x8xf32>
    %cst_25 = arith.constant 2.000000e-01 : f32
    %64 = vector.broadcast %cst_25 : f32 to vector<8x8xf32>
    %65 = arith.mulf %64, %63 : vector<8x8xf32>
    %66 = arith.maximumf %63, %65 : vector<8x8xf32>
    %67 = vector.extract_strided_slice %1 {offsets = [0, 3, 0, 0], sizes = [1, 1, 8, 8], strides = [1, 1, 1, 1]} : vector<2x5x8x8xf32> to vector<1x1x8x8xf32>
    %68 = vector.shape_cast %67 : vector<1x1x8x8xf32> to vector<8x8xf32>
    %cst_26 = arith.constant 5.000000e-01 : f32
    %69 = vector.broadcast %cst_26 : f32 to vector<8x8xf32>
    %70 = arith.cmpf ogt, %68, %69 : vector<8x8xf32>
    %cst_27 = arith.constant -9.000000e+15 : f32
    %71 = vector.broadcast %cst_27 : f32 to vector<8x8xf32>
    %72 = arith.select %70, %66, %71 : vector<8x8xi1>, vector<8x8xf32>
    %73 = vector.extract_strided_slice %13 {offsets = [0, 24], sizes = [8, 8], strides = [1, 1]} : vector<8x40xf32> to vector<8x8xf32>
    %74 = vector.extract_strided_slice %10 {offsets = [0, 4], sizes = [8, 1], strides = [1, 1]} : vector<16x5xf32> to vector<8x1xf32>
    %75 = vector.extract_strided_slice %12 {offsets = [4, 0], sizes = [1, 8], strides = [1, 1]} : vector<5x16xf32> to vector<1x8xf32>
    %76 = vector.broadcast %74 : vector<8x1xf32> to vector<8x8xf32>
    %77 = vector.broadcast %75 : vector<1x8xf32> to vector<8x8xf32>
    %78 = arith.addf %76, %77 : vector<8x8xf32>
    %cst_28 = arith.constant 2.000000e-01 : f32
    %79 = vector.broadcast %cst_28 : f32 to vector<8x8xf32>
    %80 = arith.mulf %79, %78 : vector<8x8xf32>
    %81 = arith.maximumf %78, %80 : vector<8x8xf32>
    %82 = vector.extract_strided_slice %1 {offsets = [0, 4, 0, 0], sizes = [1, 1, 8, 8], strides = [1, 1, 1, 1]} : vector<2x5x8x8xf32> to vector<1x1x8x8xf32>
    %83 = vector.shape_cast %82 : vector<1x1x8x8xf32> to vector<8x8xf32>
    %cst_29 = arith.constant 5.000000e-01 : f32
    %84 = vector.broadcast %cst_29 : f32 to vector<8x8xf32>
    %85 = arith.cmpf ogt, %83, %84 : vector<8x8xf32>
    %cst_30 = arith.constant -9.000000e+15 : f32
    %86 = vector.broadcast %cst_30 : f32 to vector<8x8xf32>
    %87 = arith.select %85, %81, %86 : vector<8x8xi1>, vector<8x8xf32>
    %88 = vector.extract_strided_slice %13 {offsets = [0, 32], sizes = [8, 8], strides = [1, 1]} : vector<8x40xf32> to vector<8x8xf32>
    %89 = tpu.concatenate %27, %42, %57, %72, %87 in 1 : vector<8x8xf32>, vector<8x8xf32>, vector<8x8xf32>, vector<8x8xf32>, vector<8x8xf32> -> vector<8x40xf32>
    %90 = tpu.concatenate %28, %43, %58, %73, %88 in 0 : vector<8x8xf32>, vector<8x8xf32>, vector<8x8xf32>, vector<8x8xf32>, vector<8x8xf32> -> vector<40x8xf32>
    %cst_31 = arith.constant dense<0xFF800000> : vector<8xf32>
    %91 = vector.multi_reduction <maximumf>, %89, %cst_31 [1] : vector<8x40xf32> to vector<8xf32>
    %92 = vector.shape_cast %91 : vector<8xf32> to vector<8x1xf32>
    %93 = vector.broadcast %92 : vector<8x1xf32> to vector<8x40xf32>
    %94 = arith.subf %89, %93 : vector<8x40xf32>
    %95 = math.exp %94 : vector<8x40xf32>
    %cst_32 = arith.constant dense<0.000000e+00> : vector<8xf32>
    %96 = vector.multi_reduction <add>, %95, %cst_32 [1] : vector<8x40xf32> to vector<8xf32>
    %97 = vector.shape_cast %96 : vector<8xf32> to vector<8x1xf32>
    %cst_33 = arith.constant dense<0.000000e+00> : vector<8x8xf32>
    %98 = tpu.matmul %95, %90, %cst_33 {dimension_numbers = #tpu.dot_dimension_numbers<[1], [0], [0], [1], [0, 0, 1, 1], [], []>} : vector<8x40xf32>, vector<40x8xf32>, vector<8x8xf32> -> vector<8x8xf32>
    %99 = vector.broadcast %97 : vector<8x1xf32> to vector<8x8xf32>
    %100 = arith.divf %98, %99 : vector<8x8xf32>
    %101 = vector.extract_strided_slice %8 {offsets = [8, 0], sizes = [8, 40], strides = [1, 1]} : vector<16x40xf32> to vector<8x40xf32>
    %102 = vector.extract_strided_slice %10 {offsets = [8, 0], sizes = [8, 1], strides = [1, 1]} : vector<16x5xf32> to vector<8x1xf32>
    %103 = vector.extract_strided_slice %12 {offsets = [0, 8], sizes = [1, 8], strides = [1, 1]} : vector<5x16xf32> to vector<1x8xf32>
    %104 = vector.broadcast %102 : vector<8x1xf32> to vector<8x8xf32>
    %105 = vector.broadcast %103 : vector<1x8xf32> to vector<8x8xf32>
    %106 = arith.addf %104, %105 : vector<8x8xf32>
    %cst_34 = arith.constant 2.000000e-01 : f32
    %107 = vector.broadcast %cst_34 : f32 to vector<8x8xf32>
    %108 = arith.mulf %107, %106 : vector<8x8xf32>
    %109 = arith.maximumf %106, %108 : vector<8x8xf32>
    %110 = vector.extract_strided_slice %1 {offsets = [1, 0, 0, 0], sizes = [1, 1, 8, 8], strides = [1, 1, 1, 1]} : vector<2x5x8x8xf32> to vector<1x1x8x8xf32>
    %111 = vector.shape_cast %110 : vector<1x1x8x8xf32> to vector<8x8xf32>
    %cst_35 = arith.constant 5.000000e-01 : f32
    %112 = vector.broadcast %cst_35 : f32 to vector<8x8xf32>
    %113 = arith.cmpf ogt, %111, %112 : vector<8x8xf32>
    %cst_36 = arith.constant -9.000000e+15 : f32
    %114 = vector.broadcast %cst_36 : f32 to vector<8x8xf32>
    %115 = arith.select %113, %109, %114 : vector<8x8xi1>, vector<8x8xf32>
    %116 = vector.extract_strided_slice %101 {offsets = [0, 0], sizes = [8, 8], strides = [1, 1]} : vector<8x40xf32> to vector<8x8xf32>
    %117 = vector.extract_strided_slice %10 {offsets = [8, 1], sizes = [8, 1], strides = [1, 1]} : vector<16x5xf32> to vector<8x1xf32>
    %118 = vector.extract_strided_slice %12 {offsets = [1, 8], sizes = [1, 8], strides = [1, 1]} : vector<5x16xf32> to vector<1x8xf32>
    %119 = vector.broadcast %117 : vector<8x1xf32> to vector<8x8xf32>
    %120 = vector.broadcast %118 : vector<1x8xf32> to vector<8x8xf32>
    %121 = arith.addf %119, %120 : vector<8x8xf32>
    %cst_37 = arith.constant 2.000000e-01 : f32
    %122 = vector.broadcast %cst_37 : f32 to vector<8x8xf32>
    %123 = arith.mulf %122, %121 : vector<8x8xf32>
    %124 = arith.maximumf %121, %123 : vector<8x8xf32>
    %125 = vector.extract_strided_slice %1 {offsets = [1, 1, 0, 0], sizes = [1, 1, 8, 8], strides = [1, 1, 1, 1]} : vector<2x5x8x8xf32> to vector<1x1x8x8xf32>
    %126 = vector.shape_cast %125 : vector<1x1x8x8xf32> to vector<8x8xf32>
    %cst_38 = arith.constant 5.000000e-01 : f32
    %127 = vector.broadcast %cst_38 : f32 to vector<8x8xf32>
    %128 = arith.cmpf ogt, %126, %127 : vector<8x8xf32>
    %cst_39 = arith.constant -9.000000e+15 : f32
    %129 = vector.broadcast %cst_39 : f32 to vector<8x8xf32>
    %130 = arith.select %128, %124, %129 : vector<8x8xi1>, vector<8x8xf32>
    %131 = vector.extract_strided_slice %101 {offsets = [0, 8], sizes = [8, 8], strides = [1, 1]} : vector<8x40xf32> to vector<8x8xf32>
    %132 = vector.extract_strided_slice %10 {offsets = [8, 2], sizes = [8, 1], strides = [1, 1]} : vector<16x5xf32> to vector<8x1xf32>
    %133 = vector.extract_strided_slice %12 {offsets = [2, 8], sizes = [1, 8], strides = [1, 1]} : vector<5x16xf32> to vector<1x8xf32>
    %134 = vector.broadcast %132 : vector<8x1xf32> to vector<8x8xf32>
    %135 = vector.broadcast %133 : vector<1x8xf32> to vector<8x8xf32>
    %136 = arith.addf %134, %135 : vector<8x8xf32>
    %cst_40 = arith.constant 2.000000e-01 : f32
    %137 = vector.broadcast %cst_40 : f32 to vector<8x8xf32>
    %138 = arith.mulf %137, %136 : vector<8x8xf32>
    %139 = arith.maximumf %136, %138 : vector<8x8xf32>
    %140 = vector.extract_strided_slice %1 {offsets = [1, 2, 0, 0], sizes = [1, 1, 8, 8], strides = [1, 1, 1, 1]} : vector<2x5x8x8xf32> to vector<1x1x8x8xf32>
    %141 = vector.shape_cast %140 : vector<1x1x8x8xf32> to vector<8x8xf32>
    %cst_41 = arith.constant 5.000000e-01 : f32
    %142 = vector.broadcast %cst_41 : f32 to vector<8x8xf32>
    %143 = arith.cmpf ogt, %141, %142 : vector<8x8xf32>
    %cst_42 = arith.constant -9.000000e+15 : f32
    %144 = vector.broadcast %cst_42 : f32 to vector<8x8xf32>
    %145 = arith.select %143, %139, %144 : vector<8x8xi1>, vector<8x8xf32>
    %146 = vector.extract_strided_slice %101 {offsets = [0, 16], sizes = [8, 8], strides = [1, 1]} : vector<8x40xf32> to vector<8x8xf32>
    %147 = vector.extract_strided_slice %10 {offsets = [8, 3], sizes = [8, 1], strides = [1, 1]} : vector<16x5xf32> to vector<8x1xf32>
    %148 = vector.extract_strided_slice %12 {offsets = [3, 8], sizes = [1, 8], strides = [1, 1]} : vector<5x16xf32> to vector<1x8xf32>
    %149 = vector.broadcast %147 : vector<8x1xf32> to vector<8x8xf32>
    %150 = vector.broadcast %148 : vector<1x8xf32> to vector<8x8xf32>
    %151 = arith.addf %149, %150 : vector<8x8xf32>
    %cst_43 = arith.constant 2.000000e-01 : f32
    %152 = vector.broadcast %cst_43 : f32 to vector<8x8xf32>
    %153 = arith.mulf %152, %151 : vector<8x8xf32>
    %154 = arith.maximumf %151, %153 : vector<8x8xf32>
    %155 = vector.extract_strided_slice %1 {offsets = [1, 3, 0, 0], sizes = [1, 1, 8, 8], strides = [1, 1, 1, 1]} : vector<2x5x8x8xf32> to vector<1x1x8x8xf32>
    %156 = vector.shape_cast %155 : vector<1x1x8x8xf32> to vector<8x8xf32>
    %cst_44 = arith.constant 5.000000e-01 : f32
    %157 = vector.broadcast %cst_44 : f32 to vector<8x8xf32>
    %158 = arith.cmpf ogt, %156, %157 : vector<8x8xf32>
    %cst_45 = arith.constant -9.000000e+15 : f32
    %159 = vector.broadcast %cst_45 : f32 to vector<8x8xf32>
    %160 = arith.select %158, %154, %159 : vector<8x8xi1>, vector<8x8xf32>
    %161 = vector.extract_strided_slice %101 {offsets = [0, 24], sizes = [8, 8], strides = [1, 1]} : vector<8x40xf32> to vector<8x8xf32>
    %162 = vector.extract_strided_slice %10 {offsets = [8, 4], sizes = [8, 1], strides = [1, 1]} : vector<16x5xf32> to vector<8x1xf32>
    %163 = vector.extract_strided_slice %12 {offsets = [4, 8], sizes = [1, 8], strides = [1, 1]} : vector<5x16xf32> to vector<1x8xf32>
    %164 = vector.broadcast %162 : vector<8x1xf32> to vector<8x8xf32>
    %165 = vector.broadcast %163 : vector<1x8xf32> to vector<8x8xf32>
    %166 = arith.addf %164, %165 : vector<8x8xf32>
    %cst_46 = arith.constant 2.000000e-01 : f32
    %167 = vector.broadcast %cst_46 : f32 to vector<8x8xf32>
    %168 = arith.mulf %167, %166 : vector<8x8xf32>
    %169 = arith.maximumf %166, %168 : vector<8x8xf32>
    %170 = vector.extract_strided_slice %1 {offsets = [1, 4, 0, 0], sizes = [1, 1, 8, 8], strides = [1, 1, 1, 1]} : vector<2x5x8x8xf32> to vector<1x1x8x8xf32>
    %171 = vector.shape_cast %170 : vector<1x1x8x8xf32> to vector<8x8xf32>
    %cst_47 = arith.constant 5.000000e-01 : f32
    %172 = vector.broadcast %cst_47 : f32 to vector<8x8xf32>
    %173 = arith.cmpf ogt, %171, %172 : vector<8x8xf32>
    %cst_48 = arith.constant -9.000000e+15 : f32
    %174 = vector.broadcast %cst_48 : f32 to vector<8x8xf32>
    %175 = arith.select %173, %169, %174 : vector<8x8xi1>, vector<8x8xf32>
    %176 = vector.extract_strided_slice %101 {offsets = [0, 32], sizes = [8, 8], strides = [1, 1]} : vector<8x40xf32> to vector<8x8xf32>
    %177 = tpu.concatenate %115, %130, %145, %160, %175 in 1 : vector<8x8xf32>, vector<8x8xf32>, vector<8x8xf32>, vector<8x8xf32>, vector<8x8xf32> -> vector<8x40xf32>
    %178 = tpu.concatenate %116, %131, %146, %161, %176 in 0 : vector<8x8xf32>, vector<8x8xf32>, vector<8x8xf32>, vector<8x8xf32>, vector<8x8xf32> -> vector<40x8xf32>
    %cst_49 = arith.constant dense<0xFF800000> : vector<8xf32>
    %179 = vector.multi_reduction <maximumf>, %177, %cst_49 [1] : vector<8x40xf32> to vector<8xf32>
    %180 = vector.shape_cast %179 : vector<8xf32> to vector<8x1xf32>
    %181 = vector.broadcast %180 : vector<8x1xf32> to vector<8x40xf32>
    %182 = arith.subf %177, %181 : vector<8x40xf32>
    %183 = math.exp %182 : vector<8x40xf32>
    %cst_50 = arith.constant dense<0.000000e+00> : vector<8xf32>
    %184 = vector.multi_reduction <add>, %183, %cst_50 [1] : vector<8x40xf32> to vector<8xf32>
    %185 = vector.shape_cast %184 : vector<8xf32> to vector<8x1xf32>
    %cst_51 = arith.constant dense<0.000000e+00> : vector<8x8xf32>
    %186 = tpu.matmul %183, %178, %cst_51 {dimension_numbers = #tpu.dot_dimension_numbers<[1], [0], [0], [1], [0, 0, 1, 1], [], []>} : vector<8x40xf32>, vector<40x8xf32>, vector<8x8xf32> -> vector<8x8xf32>
    %187 = vector.broadcast %185 : vector<8x1xf32> to vector<8x8xf32>
    %188 = arith.divf %186, %187 : vector<8x8xf32>
    %189 = tpu.concatenate %100, %188 in 0 : vector<8x8xf32>, vector<8x8xf32> -> vector<16x8xf32>
    %cst_52 = arith.constant 2.000000e-01 : f32
    %190 = vector.broadcast %cst_52 : f32 to vector<16x8xf32>
    %191 = arith.mulf %190, %189 : vector<16x8xf32>
    %192 = arith.maximumf %189, %191 : vector<16x8xf32>
    %c0_53 = arith.constant 0 : index
    %c0_54 = arith.constant 0 : index
    %193 = vector.load %arg7[%c0_53, %c0_54] : memref<8x40xf32, #tpu.memory_space<vmem>>, vector<8x40xf32>
    %cst_55 = arith.constant dense<0.000000e+00> : vector<16x40xf32>
    %194 = tpu.matmul %192, %193, %cst_55 {dimension_numbers = #tpu.dot_dimension_numbers<[1], [0], [0], [1], [0, 0, 1, 1], [], []>} : vector<16x8xf32>, vector<8x40xf32>, vector<16x40xf32> -> vector<16x40xf32>
    %c0_56 = arith.constant 0 : index
    %c0_57 = arith.constant 0 : index
    %195 = vector.load %arg8[%c0_56, %c0_57] : memref<1x40xf32, #tpu.memory_space<vmem>>, vector<1x40xf32>
    %196 = vector.broadcast %195 : vector<1x40xf32> to vector<16x40xf32>
    %197 = arith.addf %194, %196 : vector<16x40xf32>
    %c0_58 = arith.constant 0 : index
    %c0_59 = arith.constant 0 : index
    %198 = vector.load %arg9[%c0_58, %c0_59] : memref<40x5xf32, #tpu.memory_space<vmem>>, vector<40x5xf32>
    %cst_60 = arith.constant dense<0.000000e+00> : vector<16x5xf32>
    %199 = tpu.matmul %197, %198, %cst_60 {dimension_numbers = #tpu.dot_dimension_numbers<[1], [0], [0], [1], [0, 0, 1, 1], [], []>} : vector<16x40xf32>, vector<40x5xf32>, vector<16x5xf32> -> vector<16x5xf32>
    %c0_61 = arith.constant 0 : index
    %c0_62 = arith.constant 0 : index
    %200 = vector.load %arg10[%c0_61, %c0_62] : memref<5x40xf32, #tpu.memory_space<vmem>>, vector<5x40xf32>
    %cst_63 = arith.constant dense<0.000000e+00> : vector<5x16xf32>
    %201 = tpu.matmul %200, %197, %cst_63 {dimension_numbers = #tpu.dot_dimension_numbers<[1], [1], [0], [0], [0, 0, 1, 0], [], []>} : vector<5x40xf32>, vector<16x40xf32>, vector<5x16xf32> -> vector<5x16xf32>
    %202 = vector.extract_strided_slice %197 {offsets = [0, 0], sizes = [8, 40], strides = [1, 1]} : vector<16x40xf32> to vector<8x40xf32>
    %203 = vector.extract_strided_slice %199 {offsets = [0, 0], sizes = [8, 1], strides = [1, 1]} : vector<16x5xf32> to vector<8x1xf32>
    %204 = vector.extract_strided_slice %201 {offsets = [0, 0], sizes = [1, 8], strides = [1, 1]} : vector<5x16xf32> to vector<1x8xf32>
    %205 = vector.broadcast %203 : vector<8x1xf32> to vector<8x8xf32>
    %206 = vector.broadcast %204 : vector<1x8xf32> to vector<8x8xf32>
    %207 = arith.addf %205, %206 : vector<8x8xf32>
    %cst_64 = arith.constant 2.000000e-01 : f32
    %208 = vector.broadcast %cst_64 : f32 to vector<8x8xf32>
    %209 = arith.mulf %208, %207 : vector<8x8xf32>
    %210 = arith.maximumf %207, %209 : vector<8x8xf32>
    %211 = vector.extract_strided_slice %1 {offsets = [0, 0, 0, 0], sizes = [1, 1, 8, 8], strides = [1, 1, 1, 1]} : vector<2x5x8x8xf32> to vector<1x1x8x8xf32>
    %212 = vector.shape_cast %211 : vector<1x1x8x8xf32> to vector<8x8xf32>
    %cst_65 = arith.constant 5.000000e-01 : f32
    %213 = vector.broadcast %cst_65 : f32 to vector<8x8xf32>
    %214 = arith.cmpf ogt, %212, %213 : vector<8x8xf32>
    %cst_66 = arith.constant -9.000000e+15 : f32
    %215 = vector.broadcast %cst_66 : f32 to vector<8x8xf32>
    %216 = arith.select %214, %210, %215 : vector<8x8xi1>, vector<8x8xf32>
    %217 = vector.extract_strided_slice %202 {offsets = [0, 0], sizes = [8, 8], strides = [1, 1]} : vector<8x40xf32> to vector<8x8xf32>
    %218 = vector.extract_strided_slice %199 {offsets = [0, 1], sizes = [8, 1], strides = [1, 1]} : vector<16x5xf32> to vector<8x1xf32>
    %219 = vector.extract_strided_slice %201 {offsets = [1, 0], sizes = [1, 8], strides = [1, 1]} : vector<5x16xf32> to vector<1x8xf32>
    %220 = vector.broadcast %218 : vector<8x1xf32> to vector<8x8xf32>
    %221 = vector.broadcast %219 : vector<1x8xf32> to vector<8x8xf32>
    %222 = arith.addf %220, %221 : vector<8x8xf32>
    %cst_67 = arith.constant 2.000000e-01 : f32
    %223 = vector.broadcast %cst_67 : f32 to vector<8x8xf32>
    %224 = arith.mulf %223, %222 : vector<8x8xf32>
    %225 = arith.maximumf %222, %224 : vector<8x8xf32>
    %226 = vector.extract_strided_slice %1 {offsets = [0, 1, 0, 0], sizes = [1, 1, 8, 8], strides = [1, 1, 1, 1]} : vector<2x5x8x8xf32> to vector<1x1x8x8xf32>
    %227 = vector.shape_cast %226 : vector<1x1x8x8xf32> to vector<8x8xf32>
    %cst_68 = arith.constant 5.000000e-01 : f32
    %228 = vector.broadcast %cst_68 : f32 to vector<8x8xf32>
    %229 = arith.cmpf ogt, %227, %228 : vector<8x8xf32>
    %cst_69 = arith.constant -9.000000e+15 : f32
    %230 = vector.broadcast %cst_69 : f32 to vector<8x8xf32>
    %231 = arith.select %229, %225, %230 : vector<8x8xi1>, vector<8x8xf32>
    %232 = vector.extract_strided_slice %202 {offsets = [0, 8], sizes = [8, 8], strides = [1, 1]} : vector<8x40xf32> to vector<8x8xf32>
    %233 = vector.extract_strided_slice %199 {offsets = [0, 2], sizes = [8, 1], strides = [1, 1]} : vector<16x5xf32> to vector<8x1xf32>
    %234 = vector.extract_strided_slice %201 {offsets = [2, 0], sizes = [1, 8], strides = [1, 1]} : vector<5x16xf32> to vector<1x8xf32>
    %235 = vector.broadcast %233 : vector<8x1xf32> to vector<8x8xf32>
    %236 = vector.broadcast %234 : vector<1x8xf32> to vector<8x8xf32>
    %237 = arith.addf %235, %236 : vector<8x8xf32>
    %cst_70 = arith.constant 2.000000e-01 : f32
    %238 = vector.broadcast %cst_70 : f32 to vector<8x8xf32>
    %239 = arith.mulf %238, %237 : vector<8x8xf32>
    %240 = arith.maximumf %237, %239 : vector<8x8xf32>
    %241 = vector.extract_strided_slice %1 {offsets = [0, 2, 0, 0], sizes = [1, 1, 8, 8], strides = [1, 1, 1, 1]} : vector<2x5x8x8xf32> to vector<1x1x8x8xf32>
    %242 = vector.shape_cast %241 : vector<1x1x8x8xf32> to vector<8x8xf32>
    %cst_71 = arith.constant 5.000000e-01 : f32
    %243 = vector.broadcast %cst_71 : f32 to vector<8x8xf32>
    %244 = arith.cmpf ogt, %242, %243 : vector<8x8xf32>
    %cst_72 = arith.constant -9.000000e+15 : f32
    %245 = vector.broadcast %cst_72 : f32 to vector<8x8xf32>
    %246 = arith.select %244, %240, %245 : vector<8x8xi1>, vector<8x8xf32>
    %247 = vector.extract_strided_slice %202 {offsets = [0, 16], sizes = [8, 8], strides = [1, 1]} : vector<8x40xf32> to vector<8x8xf32>
    %248 = vector.extract_strided_slice %199 {offsets = [0, 3], sizes = [8, 1], strides = [1, 1]} : vector<16x5xf32> to vector<8x1xf32>
    %249 = vector.extract_strided_slice %201 {offsets = [3, 0], sizes = [1, 8], strides = [1, 1]} : vector<5x16xf32> to vector<1x8xf32>
    %250 = vector.broadcast %248 : vector<8x1xf32> to vector<8x8xf32>
    %251 = vector.broadcast %249 : vector<1x8xf32> to vector<8x8xf32>
    %252 = arith.addf %250, %251 : vector<8x8xf32>
    %cst_73 = arith.constant 2.000000e-01 : f32
    %253 = vector.broadcast %cst_73 : f32 to vector<8x8xf32>
    %254 = arith.mulf %253, %252 : vector<8x8xf32>
    %255 = arith.maximumf %252, %254 : vector<8x8xf32>
    %256 = vector.extract_strided_slice %1 {offsets = [0, 3, 0, 0], sizes = [1, 1, 8, 8], strides = [1, 1, 1, 1]} : vector<2x5x8x8xf32> to vector<1x1x8x8xf32>
    %257 = vector.shape_cast %256 : vector<1x1x8x8xf32> to vector<8x8xf32>
    %cst_74 = arith.constant 5.000000e-01 : f32
    %258 = vector.broadcast %cst_74 : f32 to vector<8x8xf32>
    %259 = arith.cmpf ogt, %257, %258 : vector<8x8xf32>
    %cst_75 = arith.constant -9.000000e+15 : f32
    %260 = vector.broadcast %cst_75 : f32 to vector<8x8xf32>
    %261 = arith.select %259, %255, %260 : vector<8x8xi1>, vector<8x8xf32>
    %262 = vector.extract_strided_slice %202 {offsets = [0, 24], sizes = [8, 8], strides = [1, 1]} : vector<8x40xf32> to vector<8x8xf32>
    %263 = vector.extract_strided_slice %199 {offsets = [0, 4], sizes = [8, 1], strides = [1, 1]} : vector<16x5xf32> to vector<8x1xf32>
    %264 = vector.extract_strided_slice %201 {offsets = [4, 0], sizes = [1, 8], strides = [1, 1]} : vector<5x16xf32> to vector<1x8xf32>
    %265 = vector.broadcast %263 : vector<8x1xf32> to vector<8x8xf32>
    %266 = vector.broadcast %264 : vector<1x8xf32> to vector<8x8xf32>
    %267 = arith.addf %265, %266 : vector<8x8xf32>
    %cst_76 = arith.constant 2.000000e-01 : f32
    %268 = vector.broadcast %cst_76 : f32 to vector<8x8xf32>
    %269 = arith.mulf %268, %267 : vector<8x8xf32>
    %270 = arith.maximumf %267, %269 : vector<8x8xf32>
    %271 = vector.extract_strided_slice %1 {offsets = [0, 4, 0, 0], sizes = [1, 1, 8, 8], strides = [1, 1, 1, 1]} : vector<2x5x8x8xf32> to vector<1x1x8x8xf32>
    %272 = vector.shape_cast %271 : vector<1x1x8x8xf32> to vector<8x8xf32>
    %cst_77 = arith.constant 5.000000e-01 : f32
    %273 = vector.broadcast %cst_77 : f32 to vector<8x8xf32>
    %274 = arith.cmpf ogt, %272, %273 : vector<8x8xf32>
    %cst_78 = arith.constant -9.000000e+15 : f32
    %275 = vector.broadcast %cst_78 : f32 to vector<8x8xf32>
    %276 = arith.select %274, %270, %275 : vector<8x8xi1>, vector<8x8xf32>
    %277 = vector.extract_strided_slice %202 {offsets = [0, 32], sizes = [8, 8], strides = [1, 1]} : vector<8x40xf32> to vector<8x8xf32>
    %278 = tpu.concatenate %216, %231, %246, %261, %276 in 1 : vector<8x8xf32>, vector<8x8xf32>, vector<8x8xf32>, vector<8x8xf32>, vector<8x8xf32> -> vector<8x40xf32>
    %279 = tpu.concatenate %217, %232, %247, %262, %277 in 0 : vector<8x8xf32>, vector<8x8xf32>, vector<8x8xf32>, vector<8x8xf32>, vector<8x8xf32> -> vector<40x8xf32>
    %cst_79 = arith.constant dense<0xFF800000> : vector<8xf32>
    %280 = vector.multi_reduction <maximumf>, %278, %cst_79 [1] : vector<8x40xf32> to vector<8xf32>
    %281 = vector.shape_cast %280 : vector<8xf32> to vector<8x1xf32>
    %282 = vector.broadcast %281 : vector<8x1xf32> to vector<8x40xf32>
    %283 = arith.subf %278, %282 : vector<8x40xf32>
    %284 = math.exp %283 : vector<8x40xf32>
    %cst_80 = arith.constant dense<0.000000e+00> : vector<8xf32>
    %285 = vector.multi_reduction <add>, %284, %cst_80 [1] : vector<8x40xf32> to vector<8xf32>
    %286 = vector.shape_cast %285 : vector<8xf32> to vector<8x1xf32>
    %cst_81 = arith.constant dense<0.000000e+00> : vector<8x8xf32>
    %287 = tpu.matmul %284, %279, %cst_81 {dimension_numbers = #tpu.dot_dimension_numbers<[1], [0], [0], [1], [0, 0, 1, 1], [], []>} : vector<8x40xf32>, vector<40x8xf32>, vector<8x8xf32> -> vector<8x8xf32>
    %288 = vector.broadcast %286 : vector<8x1xf32> to vector<8x8xf32>
    %289 = arith.divf %287, %288 : vector<8x8xf32>
    %290 = vector.extract_strided_slice %197 {offsets = [8, 0], sizes = [8, 40], strides = [1, 1]} : vector<16x40xf32> to vector<8x40xf32>
    %291 = vector.extract_strided_slice %199 {offsets = [8, 0], sizes = [8, 1], strides = [1, 1]} : vector<16x5xf32> to vector<8x1xf32>
    %292 = vector.extract_strided_slice %201 {offsets = [0, 8], sizes = [1, 8], strides = [1, 1]} : vector<5x16xf32> to vector<1x8xf32>
    %293 = vector.broadcast %291 : vector<8x1xf32> to vector<8x8xf32>
    %294 = vector.broadcast %292 : vector<1x8xf32> to vector<8x8xf32>
    %295 = arith.addf %293, %294 : vector<8x8xf32>
    %cst_82 = arith.constant 2.000000e-01 : f32
    %296 = vector.broadcast %cst_82 : f32 to vector<8x8xf32>
    %297 = arith.mulf %296, %295 : vector<8x8xf32>
    %298 = arith.maximumf %295, %297 : vector<8x8xf32>
    %299 = vector.extract_strided_slice %1 {offsets = [1, 0, 0, 0], sizes = [1, 1, 8, 8], strides = [1, 1, 1, 1]} : vector<2x5x8x8xf32> to vector<1x1x8x8xf32>
    %300 = vector.shape_cast %299 : vector<1x1x8x8xf32> to vector<8x8xf32>
    %cst_83 = arith.constant 5.000000e-01 : f32
    %301 = vector.broadcast %cst_83 : f32 to vector<8x8xf32>
    %302 = arith.cmpf ogt, %300, %301 : vector<8x8xf32>
    %cst_84 = arith.constant -9.000000e+15 : f32
    %303 = vector.broadcast %cst_84 : f32 to vector<8x8xf32>
    %304 = arith.select %302, %298, %303 : vector<8x8xi1>, vector<8x8xf32>
    %305 = vector.extract_strided_slice %290 {offsets = [0, 0], sizes = [8, 8], strides = [1, 1]} : vector<8x40xf32> to vector<8x8xf32>
    %306 = vector.extract_strided_slice %199 {offsets = [8, 1], sizes = [8, 1], strides = [1, 1]} : vector<16x5xf32> to vector<8x1xf32>
    %307 = vector.extract_strided_slice %201 {offsets = [1, 8], sizes = [1, 8], strides = [1, 1]} : vector<5x16xf32> to vector<1x8xf32>
    %308 = vector.broadcast %306 : vector<8x1xf32> to vector<8x8xf32>
    %309 = vector.broadcast %307 : vector<1x8xf32> to vector<8x8xf32>
    %310 = arith.addf %308, %309 : vector<8x8xf32>
    %cst_85 = arith.constant 2.000000e-01 : f32
    %311 = vector.broadcast %cst_85 : f32 to vector<8x8xf32>
    %312 = arith.mulf %311, %310 : vector<8x8xf32>
    %313 = arith.maximumf %310, %312 : vector<8x8xf32>
    %314 = vector.extract_strided_slice %1 {offsets = [1, 1, 0, 0], sizes = [1, 1, 8, 8], strides = [1, 1, 1, 1]} : vector<2x5x8x8xf32> to vector<1x1x8x8xf32>
    %315 = vector.shape_cast %314 : vector<1x1x8x8xf32> to vector<8x8xf32>
    %cst_86 = arith.constant 5.000000e-01 : f32
    %316 = vector.broadcast %cst_86 : f32 to vector<8x8xf32>
    %317 = arith.cmpf ogt, %315, %316 : vector<8x8xf32>
    %cst_87 = arith.constant -9.000000e+15 : f32
    %318 = vector.broadcast %cst_87 : f32 to vector<8x8xf32>
    %319 = arith.select %317, %313, %318 : vector<8x8xi1>, vector<8x8xf32>
    %320 = vector.extract_strided_slice %290 {offsets = [0, 8], sizes = [8, 8], strides = [1, 1]} : vector<8x40xf32> to vector<8x8xf32>
    %321 = vector.extract_strided_slice %199 {offsets = [8, 2], sizes = [8, 1], strides = [1, 1]} : vector<16x5xf32> to vector<8x1xf32>
    %322 = vector.extract_strided_slice %201 {offsets = [2, 8], sizes = [1, 8], strides = [1, 1]} : vector<5x16xf32> to vector<1x8xf32>
    %323 = vector.broadcast %321 : vector<8x1xf32> to vector<8x8xf32>
    %324 = vector.broadcast %322 : vector<1x8xf32> to vector<8x8xf32>
    %325 = arith.addf %323, %324 : vector<8x8xf32>
    %cst_88 = arith.constant 2.000000e-01 : f32
    %326 = vector.broadcast %cst_88 : f32 to vector<8x8xf32>
    %327 = arith.mulf %326, %325 : vector<8x8xf32>
    %328 = arith.maximumf %325, %327 : vector<8x8xf32>
    %329 = vector.extract_strided_slice %1 {offsets = [1, 2, 0, 0], sizes = [1, 1, 8, 8], strides = [1, 1, 1, 1]} : vector<2x5x8x8xf32> to vector<1x1x8x8xf32>
    %330 = vector.shape_cast %329 : vector<1x1x8x8xf32> to vector<8x8xf32>
    %cst_89 = arith.constant 5.000000e-01 : f32
    %331 = vector.broadcast %cst_89 : f32 to vector<8x8xf32>
    %332 = arith.cmpf ogt, %330, %331 : vector<8x8xf32>
    %cst_90 = arith.constant -9.000000e+15 : f32
    %333 = vector.broadcast %cst_90 : f32 to vector<8x8xf32>
    %334 = arith.select %332, %328, %333 : vector<8x8xi1>, vector<8x8xf32>
    %335 = vector.extract_strided_slice %290 {offsets = [0, 16], sizes = [8, 8], strides = [1, 1]} : vector<8x40xf32> to vector<8x8xf32>
    %336 = vector.extract_strided_slice %199 {offsets = [8, 3], sizes = [8, 1], strides = [1, 1]} : vector<16x5xf32> to vector<8x1xf32>
    %337 = vector.extract_strided_slice %201 {offsets = [3, 8], sizes = [1, 8], strides = [1, 1]} : vector<5x16xf32> to vector<1x8xf32>
    %338 = vector.broadcast %336 : vector<8x1xf32> to vector<8x8xf32>
    %339 = vector.broadcast %337 : vector<1x8xf32> to vector<8x8xf32>
    %340 = arith.addf %338, %339 : vector<8x8xf32>
    %cst_91 = arith.constant 2.000000e-01 : f32
    %341 = vector.broadcast %cst_91 : f32 to vector<8x8xf32>
    %342 = arith.mulf %341, %340 : vector<8x8xf32>
    %343 = arith.maximumf %340, %342 : vector<8x8xf32>
    %344 = vector.extract_strided_slice %1 {offsets = [1, 3, 0, 0], sizes = [1, 1, 8, 8], strides = [1, 1, 1, 1]} : vector<2x5x8x8xf32> to vector<1x1x8x8xf32>
    %345 = vector.shape_cast %344 : vector<1x1x8x8xf32> to vector<8x8xf32>
    %cst_92 = arith.constant 5.000000e-01 : f32
    %346 = vector.broadcast %cst_92 : f32 to vector<8x8xf32>
    %347 = arith.cmpf ogt, %345, %346 : vector<8x8xf32>
    %cst_93 = arith.constant -9.000000e+15 : f32
    %348 = vector.broadcast %cst_93 : f32 to vector<8x8xf32>
    %349 = arith.select %347, %343, %348 : vector<8x8xi1>, vector<8x8xf32>
    %350 = vector.extract_strided_slice %290 {offsets = [0, 24], sizes = [8, 8], strides = [1, 1]} : vector<8x40xf32> to vector<8x8xf32>
    %351 = vector.extract_strided_slice %199 {offsets = [8, 4], sizes = [8, 1], strides = [1, 1]} : vector<16x5xf32> to vector<8x1xf32>
    %352 = vector.extract_strided_slice %201 {offsets = [4, 8], sizes = [1, 8], strides = [1, 1]} : vector<5x16xf32> to vector<1x8xf32>
    %353 = vector.broadcast %351 : vector<8x1xf32> to vector<8x8xf32>
    %354 = vector.broadcast %352 : vector<1x8xf32> to vector<8x8xf32>
    %355 = arith.addf %353, %354 : vector<8x8xf32>
    %cst_94 = arith.constant 2.000000e-01 : f32
    %356 = vector.broadcast %cst_94 : f32 to vector<8x8xf32>
    %357 = arith.mulf %356, %355 : vector<8x8xf32>
    %358 = arith.maximumf %355, %357 : vector<8x8xf32>
    %359 = vector.extract_strided_slice %1 {offsets = [1, 4, 0, 0], sizes = [1, 1, 8, 8], strides = [1, 1, 1, 1]} : vector<2x5x8x8xf32> to vector<1x1x8x8xf32>
    %360 = vector.shape_cast %359 : vector<1x1x8x8xf32> to vector<8x8xf32>
    %cst_95 = arith.constant 5.000000e-01 : f32
    %361 = vector.broadcast %cst_95 : f32 to vector<8x8xf32>
    %362 = arith.cmpf ogt, %360, %361 : vector<8x8xf32>
    %cst_96 = arith.constant -9.000000e+15 : f32
    %363 = vector.broadcast %cst_96 : f32 to vector<8x8xf32>
    %364 = arith.select %362, %358, %363 : vector<8x8xi1>, vector<8x8xf32>
    %365 = vector.extract_strided_slice %290 {offsets = [0, 32], sizes = [8, 8], strides = [1, 1]} : vector<8x40xf32> to vector<8x8xf32>
    %366 = tpu.concatenate %304, %319, %334, %349, %364 in 1 : vector<8x8xf32>, vector<8x8xf32>, vector<8x8xf32>, vector<8x8xf32>, vector<8x8xf32> -> vector<8x40xf32>
    %367 = tpu.concatenate %305, %320, %335, %350, %365 in 0 : vector<8x8xf32>, vector<8x8xf32>, vector<8x8xf32>, vector<8x8xf32>, vector<8x8xf32> -> vector<40x8xf32>
    %cst_97 = arith.constant dense<0xFF800000> : vector<8xf32>
    %368 = vector.multi_reduction <maximumf>, %366, %cst_97 [1] : vector<8x40xf32> to vector<8xf32>
    %369 = vector.shape_cast %368 : vector<8xf32> to vector<8x1xf32>
    %370 = vector.broadcast %369 : vector<8x1xf32> to vector<8x40xf32>
    %371 = arith.subf %366, %370 : vector<8x40xf32>
    %372 = math.exp %371 : vector<8x40xf32>
    %cst_98 = arith.constant dense<0.000000e+00> : vector<8xf32>
    %373 = vector.multi_reduction <add>, %372, %cst_98 [1] : vector<8x40xf32> to vector<8xf32>
    %374 = vector.shape_cast %373 : vector<8xf32> to vector<8x1xf32>
    %cst_99 = arith.constant dense<0.000000e+00> : vector<8x8xf32>
    %375 = tpu.matmul %372, %367, %cst_99 {dimension_numbers = #tpu.dot_dimension_numbers<[1], [0], [0], [1], [0, 0, 1, 1], [], []>} : vector<8x40xf32>, vector<40x8xf32>, vector<8x8xf32> -> vector<8x8xf32>
    %376 = vector.broadcast %374 : vector<8x1xf32> to vector<8x8xf32>
    %377 = arith.divf %375, %376 : vector<8x8xf32>
    %378 = tpu.concatenate %289, %377 in 0 : vector<8x8xf32>, vector<8x8xf32> -> vector<16x8xf32>
    %cst_100 = arith.constant 2.000000e-01 : f32
    %379 = vector.broadcast %cst_100 : f32 to vector<16x8xf32>
    %380 = arith.mulf %379, %378 : vector<16x8xf32>
    %381 = arith.maximumf %378, %380 : vector<16x8xf32>
    %c0_101 = arith.constant 0 : index
    %c0_102 = arith.constant 0 : index
    %382 = vector.load %arg11[%c0_101, %c0_102] : memref<8x40xf32, #tpu.memory_space<vmem>>, vector<8x40xf32>
    %cst_103 = arith.constant dense<0.000000e+00> : vector<16x40xf32>
    %383 = tpu.matmul %381, %382, %cst_103 {dimension_numbers = #tpu.dot_dimension_numbers<[1], [0], [0], [1], [0, 0, 1, 1], [], []>} : vector<16x8xf32>, vector<8x40xf32>, vector<16x40xf32> -> vector<16x40xf32>
    %c0_104 = arith.constant 0 : index
    %c0_105 = arith.constant 0 : index
    %384 = vector.load %arg12[%c0_104, %c0_105] : memref<1x40xf32, #tpu.memory_space<vmem>>, vector<1x40xf32>
    %385 = vector.broadcast %384 : vector<1x40xf32> to vector<16x40xf32>
    %386 = arith.addf %383, %385 : vector<16x40xf32>
    %c0_106 = arith.constant 0 : index
    %c0_107 = arith.constant 0 : index
    %387 = vector.load %arg13[%c0_106, %c0_107] : memref<40x5xf32, #tpu.memory_space<vmem>>, vector<40x5xf32>
    %cst_108 = arith.constant dense<0.000000e+00> : vector<16x5xf32>
    %388 = tpu.matmul %386, %387, %cst_108 {dimension_numbers = #tpu.dot_dimension_numbers<[1], [0], [0], [1], [0, 0, 1, 1], [], []>} : vector<16x40xf32>, vector<40x5xf32>, vector<16x5xf32> -> vector<16x5xf32>
    %c0_109 = arith.constant 0 : index
    %c0_110 = arith.constant 0 : index
    %389 = vector.load %arg14[%c0_109, %c0_110] : memref<5x40xf32, #tpu.memory_space<vmem>>, vector<5x40xf32>
    %cst_111 = arith.constant dense<0.000000e+00> : vector<5x16xf32>
    %390 = tpu.matmul %389, %386, %cst_111 {dimension_numbers = #tpu.dot_dimension_numbers<[1], [1], [0], [0], [0, 0, 1, 0], [], []>} : vector<5x40xf32>, vector<16x40xf32>, vector<5x16xf32> -> vector<5x16xf32>
    %391 = vector.extract_strided_slice %386 {offsets = [0, 0], sizes = [8, 40], strides = [1, 1]} : vector<16x40xf32> to vector<8x40xf32>
    %392 = vector.extract_strided_slice %388 {offsets = [0, 0], sizes = [8, 1], strides = [1, 1]} : vector<16x5xf32> to vector<8x1xf32>
    %393 = vector.extract_strided_slice %390 {offsets = [0, 0], sizes = [1, 8], strides = [1, 1]} : vector<5x16xf32> to vector<1x8xf32>
    %394 = vector.broadcast %392 : vector<8x1xf32> to vector<8x8xf32>
    %395 = vector.broadcast %393 : vector<1x8xf32> to vector<8x8xf32>
    %396 = arith.addf %394, %395 : vector<8x8xf32>
    %cst_112 = arith.constant 2.000000e-01 : f32
    %397 = vector.broadcast %cst_112 : f32 to vector<8x8xf32>
    %398 = arith.mulf %397, %396 : vector<8x8xf32>
    %399 = arith.maximumf %396, %398 : vector<8x8xf32>
    %400 = vector.extract_strided_slice %1 {offsets = [0, 0, 0, 0], sizes = [1, 1, 8, 8], strides = [1, 1, 1, 1]} : vector<2x5x8x8xf32> to vector<1x1x8x8xf32>
    %401 = vector.shape_cast %400 : vector<1x1x8x8xf32> to vector<8x8xf32>
    %cst_113 = arith.constant 5.000000e-01 : f32
    %402 = vector.broadcast %cst_113 : f32 to vector<8x8xf32>
    %403 = arith.cmpf ogt, %401, %402 : vector<8x8xf32>
    %cst_114 = arith.constant -9.000000e+15 : f32
    %404 = vector.broadcast %cst_114 : f32 to vector<8x8xf32>
    %405 = arith.select %403, %399, %404 : vector<8x8xi1>, vector<8x8xf32>
    %406 = vector.extract_strided_slice %391 {offsets = [0, 0], sizes = [8, 8], strides = [1, 1]} : vector<8x40xf32> to vector<8x8xf32>
    %407 = vector.extract_strided_slice %388 {offsets = [0, 1], sizes = [8, 1], strides = [1, 1]} : vector<16x5xf32> to vector<8x1xf32>
    %408 = vector.extract_strided_slice %390 {offsets = [1, 0], sizes = [1, 8], strides = [1, 1]} : vector<5x16xf32> to vector<1x8xf32>
    %409 = vector.broadcast %407 : vector<8x1xf32> to vector<8x8xf32>
    %410 = vector.broadcast %408 : vector<1x8xf32> to vector<8x8xf32>
    %411 = arith.addf %409, %410 : vector<8x8xf32>
    %cst_115 = arith.constant 2.000000e-01 : f32
    %412 = vector.broadcast %cst_115 : f32 to vector<8x8xf32>
    %413 = arith.mulf %412, %411 : vector<8x8xf32>
    %414 = arith.maximumf %411, %413 : vector<8x8xf32>
    %415 = vector.extract_strided_slice %1 {offsets = [0, 1, 0, 0], sizes = [1, 1, 8, 8], strides = [1, 1, 1, 1]} : vector<2x5x8x8xf32> to vector<1x1x8x8xf32>
    %416 = vector.shape_cast %415 : vector<1x1x8x8xf32> to vector<8x8xf32>
    %cst_116 = arith.constant 5.000000e-01 : f32
    %417 = vector.broadcast %cst_116 : f32 to vector<8x8xf32>
    %418 = arith.cmpf ogt, %416, %417 : vector<8x8xf32>
    %cst_117 = arith.constant -9.000000e+15 : f32
    %419 = vector.broadcast %cst_117 : f32 to vector<8x8xf32>
    %420 = arith.select %418, %414, %419 : vector<8x8xi1>, vector<8x8xf32>
    %421 = vector.extract_strided_slice %391 {offsets = [0, 8], sizes = [8, 8], strides = [1, 1]} : vector<8x40xf32> to vector<8x8xf32>
    %422 = vector.extract_strided_slice %388 {offsets = [0, 2], sizes = [8, 1], strides = [1, 1]} : vector<16x5xf32> to vector<8x1xf32>
    %423 = vector.extract_strided_slice %390 {offsets = [2, 0], sizes = [1, 8], strides = [1, 1]} : vector<5x16xf32> to vector<1x8xf32>
    %424 = vector.broadcast %422 : vector<8x1xf32> to vector<8x8xf32>
    %425 = vector.broadcast %423 : vector<1x8xf32> to vector<8x8xf32>
    %426 = arith.addf %424, %425 : vector<8x8xf32>
    %cst_118 = arith.constant 2.000000e-01 : f32
    %427 = vector.broadcast %cst_118 : f32 to vector<8x8xf32>
    %428 = arith.mulf %427, %426 : vector<8x8xf32>
    %429 = arith.maximumf %426, %428 : vector<8x8xf32>
    %430 = vector.extract_strided_slice %1 {offsets = [0, 2, 0, 0], sizes = [1, 1, 8, 8], strides = [1, 1, 1, 1]} : vector<2x5x8x8xf32> to vector<1x1x8x8xf32>
    %431 = vector.shape_cast %430 : vector<1x1x8x8xf32> to vector<8x8xf32>
    %cst_119 = arith.constant 5.000000e-01 : f32
    %432 = vector.broadcast %cst_119 : f32 to vector<8x8xf32>
    %433 = arith.cmpf ogt, %431, %432 : vector<8x8xf32>
    %cst_120 = arith.constant -9.000000e+15 : f32
    %434 = vector.broadcast %cst_120 : f32 to vector<8x8xf32>
    %435 = arith.select %433, %429, %434 : vector<8x8xi1>, vector<8x8xf32>
    %436 = vector.extract_strided_slice %391 {offsets = [0, 16], sizes = [8, 8], strides = [1, 1]} : vector<8x40xf32> to vector<8x8xf32>
    %437 = vector.extract_strided_slice %388 {offsets = [0, 3], sizes = [8, 1], strides = [1, 1]} : vector<16x5xf32> to vector<8x1xf32>
    %438 = vector.extract_strided_slice %390 {offsets = [3, 0], sizes = [1, 8], strides = [1, 1]} : vector<5x16xf32> to vector<1x8xf32>
    %439 = vector.broadcast %437 : vector<8x1xf32> to vector<8x8xf32>
    %440 = vector.broadcast %438 : vector<1x8xf32> to vector<8x8xf32>
    %441 = arith.addf %439, %440 : vector<8x8xf32>
    %cst_121 = arith.constant 2.000000e-01 : f32
    %442 = vector.broadcast %cst_121 : f32 to vector<8x8xf32>
    %443 = arith.mulf %442, %441 : vector<8x8xf32>
    %444 = arith.maximumf %441, %443 : vector<8x8xf32>
    %445 = vector.extract_strided_slice %1 {offsets = [0, 3, 0, 0], sizes = [1, 1, 8, 8], strides = [1, 1, 1, 1]} : vector<2x5x8x8xf32> to vector<1x1x8x8xf32>
    %446 = vector.shape_cast %445 : vector<1x1x8x8xf32> to vector<8x8xf32>
    %cst_122 = arith.constant 5.000000e-01 : f32
    %447 = vector.broadcast %cst_122 : f32 to vector<8x8xf32>
    %448 = arith.cmpf ogt, %446, %447 : vector<8x8xf32>
    %cst_123 = arith.constant -9.000000e+15 : f32
    %449 = vector.broadcast %cst_123 : f32 to vector<8x8xf32>
    %450 = arith.select %448, %444, %449 : vector<8x8xi1>, vector<8x8xf32>
    %451 = vector.extract_strided_slice %391 {offsets = [0, 24], sizes = [8, 8], strides = [1, 1]} : vector<8x40xf32> to vector<8x8xf32>
    %452 = vector.extract_strided_slice %388 {offsets = [0, 4], sizes = [8, 1], strides = [1, 1]} : vector<16x5xf32> to vector<8x1xf32>
    %453 = vector.extract_strided_slice %390 {offsets = [4, 0], sizes = [1, 8], strides = [1, 1]} : vector<5x16xf32> to vector<1x8xf32>
    %454 = vector.broadcast %452 : vector<8x1xf32> to vector<8x8xf32>
    %455 = vector.broadcast %453 : vector<1x8xf32> to vector<8x8xf32>
    %456 = arith.addf %454, %455 : vector<8x8xf32>
    %cst_124 = arith.constant 2.000000e-01 : f32
    %457 = vector.broadcast %cst_124 : f32 to vector<8x8xf32>
    %458 = arith.mulf %457, %456 : vector<8x8xf32>
    %459 = arith.maximumf %456, %458 : vector<8x8xf32>
    %460 = vector.extract_strided_slice %1 {offsets = [0, 4, 0, 0], sizes = [1, 1, 8, 8], strides = [1, 1, 1, 1]} : vector<2x5x8x8xf32> to vector<1x1x8x8xf32>
    %461 = vector.shape_cast %460 : vector<1x1x8x8xf32> to vector<8x8xf32>
    %cst_125 = arith.constant 5.000000e-01 : f32
    %462 = vector.broadcast %cst_125 : f32 to vector<8x8xf32>
    %463 = arith.cmpf ogt, %461, %462 : vector<8x8xf32>
    %cst_126 = arith.constant -9.000000e+15 : f32
    %464 = vector.broadcast %cst_126 : f32 to vector<8x8xf32>
    %465 = arith.select %463, %459, %464 : vector<8x8xi1>, vector<8x8xf32>
    %466 = vector.extract_strided_slice %391 {offsets = [0, 32], sizes = [8, 8], strides = [1, 1]} : vector<8x40xf32> to vector<8x8xf32>
    %467 = tpu.concatenate %405, %420, %435, %450, %465 in 1 : vector<8x8xf32>, vector<8x8xf32>, vector<8x8xf32>, vector<8x8xf32>, vector<8x8xf32> -> vector<8x40xf32>
    %468 = tpu.concatenate %406, %421, %436, %451, %466 in 0 : vector<8x8xf32>, vector<8x8xf32>, vector<8x8xf32>, vector<8x8xf32>, vector<8x8xf32> -> vector<40x8xf32>
    %cst_127 = arith.constant dense<0xFF800000> : vector<8xf32>
    %469 = vector.multi_reduction <maximumf>, %467, %cst_127 [1] : vector<8x40xf32> to vector<8xf32>
    %470 = vector.shape_cast %469 : vector<8xf32> to vector<8x1xf32>
    %471 = vector.broadcast %470 : vector<8x1xf32> to vector<8x40xf32>
    %472 = arith.subf %467, %471 : vector<8x40xf32>
    %473 = math.exp %472 : vector<8x40xf32>
    %cst_128 = arith.constant dense<0.000000e+00> : vector<8xf32>
    %474 = vector.multi_reduction <add>, %473, %cst_128 [1] : vector<8x40xf32> to vector<8xf32>
    %475 = vector.shape_cast %474 : vector<8xf32> to vector<8x1xf32>
    %cst_129 = arith.constant dense<0.000000e+00> : vector<8x8xf32>
    %476 = tpu.matmul %473, %468, %cst_129 {dimension_numbers = #tpu.dot_dimension_numbers<[1], [0], [0], [1], [0, 0, 1, 1], [], []>} : vector<8x40xf32>, vector<40x8xf32>, vector<8x8xf32> -> vector<8x8xf32>
    %477 = vector.broadcast %475 : vector<8x1xf32> to vector<8x8xf32>
    %478 = arith.divf %476, %477 : vector<8x8xf32>
    %479 = vector.extract_strided_slice %386 {offsets = [8, 0], sizes = [8, 40], strides = [1, 1]} : vector<16x40xf32> to vector<8x40xf32>
    %480 = vector.extract_strided_slice %388 {offsets = [8, 0], sizes = [8, 1], strides = [1, 1]} : vector<16x5xf32> to vector<8x1xf32>
    %481 = vector.extract_strided_slice %390 {offsets = [0, 8], sizes = [1, 8], strides = [1, 1]} : vector<5x16xf32> to vector<1x8xf32>
    %482 = vector.broadcast %480 : vector<8x1xf32> to vector<8x8xf32>
    %483 = vector.broadcast %481 : vector<1x8xf32> to vector<8x8xf32>
    %484 = arith.addf %482, %483 : vector<8x8xf32>
    %cst_130 = arith.constant 2.000000e-01 : f32
    %485 = vector.broadcast %cst_130 : f32 to vector<8x8xf32>
    %486 = arith.mulf %485, %484 : vector<8x8xf32>
    %487 = arith.maximumf %484, %486 : vector<8x8xf32>
    %488 = vector.extract_strided_slice %1 {offsets = [1, 0, 0, 0], sizes = [1, 1, 8, 8], strides = [1, 1, 1, 1]} : vector<2x5x8x8xf32> to vector<1x1x8x8xf32>
    %489 = vector.shape_cast %488 : vector<1x1x8x8xf32> to vector<8x8xf32>
    %cst_131 = arith.constant 5.000000e-01 : f32
    %490 = vector.broadcast %cst_131 : f32 to vector<8x8xf32>
    %491 = arith.cmpf ogt, %489, %490 : vector<8x8xf32>
    %cst_132 = arith.constant -9.000000e+15 : f32
    %492 = vector.broadcast %cst_132 : f32 to vector<8x8xf32>
    %493 = arith.select %491, %487, %492 : vector<8x8xi1>, vector<8x8xf32>
    %494 = vector.extract_strided_slice %479 {offsets = [0, 0], sizes = [8, 8], strides = [1, 1]} : vector<8x40xf32> to vector<8x8xf32>
    %495 = vector.extract_strided_slice %388 {offsets = [8, 1], sizes = [8, 1], strides = [1, 1]} : vector<16x5xf32> to vector<8x1xf32>
    %496 = vector.extract_strided_slice %390 {offsets = [1, 8], sizes = [1, 8], strides = [1, 1]} : vector<5x16xf32> to vector<1x8xf32>
    %497 = vector.broadcast %495 : vector<8x1xf32> to vector<8x8xf32>
    %498 = vector.broadcast %496 : vector<1x8xf32> to vector<8x8xf32>
    %499 = arith.addf %497, %498 : vector<8x8xf32>
    %cst_133 = arith.constant 2.000000e-01 : f32
    %500 = vector.broadcast %cst_133 : f32 to vector<8x8xf32>
    %501 = arith.mulf %500, %499 : vector<8x8xf32>
    %502 = arith.maximumf %499, %501 : vector<8x8xf32>
    %503 = vector.extract_strided_slice %1 {offsets = [1, 1, 0, 0], sizes = [1, 1, 8, 8], strides = [1, 1, 1, 1]} : vector<2x5x8x8xf32> to vector<1x1x8x8xf32>
    %504 = vector.shape_cast %503 : vector<1x1x8x8xf32> to vector<8x8xf32>
    %cst_134 = arith.constant 5.000000e-01 : f32
    %505 = vector.broadcast %cst_134 : f32 to vector<8x8xf32>
    %506 = arith.cmpf ogt, %504, %505 : vector<8x8xf32>
    %cst_135 = arith.constant -9.000000e+15 : f32
    %507 = vector.broadcast %cst_135 : f32 to vector<8x8xf32>
    %508 = arith.select %506, %502, %507 : vector<8x8xi1>, vector<8x8xf32>
    %509 = vector.extract_strided_slice %479 {offsets = [0, 8], sizes = [8, 8], strides = [1, 1]} : vector<8x40xf32> to vector<8x8xf32>
    %510 = vector.extract_strided_slice %388 {offsets = [8, 2], sizes = [8, 1], strides = [1, 1]} : vector<16x5xf32> to vector<8x1xf32>
    %511 = vector.extract_strided_slice %390 {offsets = [2, 8], sizes = [1, 8], strides = [1, 1]} : vector<5x16xf32> to vector<1x8xf32>
    %512 = vector.broadcast %510 : vector<8x1xf32> to vector<8x8xf32>
    %513 = vector.broadcast %511 : vector<1x8xf32> to vector<8x8xf32>
    %514 = arith.addf %512, %513 : vector<8x8xf32>
    %cst_136 = arith.constant 2.000000e-01 : f32
    %515 = vector.broadcast %cst_136 : f32 to vector<8x8xf32>
    %516 = arith.mulf %515, %514 : vector<8x8xf32>
    %517 = arith.maximumf %514, %516 : vector<8x8xf32>
    %518 = vector.extract_strided_slice %1 {offsets = [1, 2, 0, 0], sizes = [1, 1, 8, 8], strides = [1, 1, 1, 1]} : vector<2x5x8x8xf32> to vector<1x1x8x8xf32>
    %519 = vector.shape_cast %518 : vector<1x1x8x8xf32> to vector<8x8xf32>
    %cst_137 = arith.constant 5.000000e-01 : f32
    %520 = vector.broadcast %cst_137 : f32 to vector<8x8xf32>
    %521 = arith.cmpf ogt, %519, %520 : vector<8x8xf32>
    %cst_138 = arith.constant -9.000000e+15 : f32
    %522 = vector.broadcast %cst_138 : f32 to vector<8x8xf32>
    %523 = arith.select %521, %517, %522 : vector<8x8xi1>, vector<8x8xf32>
    %524 = vector.extract_strided_slice %479 {offsets = [0, 16], sizes = [8, 8], strides = [1, 1]} : vector<8x40xf32> to vector<8x8xf32>
    %525 = vector.extract_strided_slice %388 {offsets = [8, 3], sizes = [8, 1], strides = [1, 1]} : vector<16x5xf32> to vector<8x1xf32>
    %526 = vector.extract_strided_slice %390 {offsets = [3, 8], sizes = [1, 8], strides = [1, 1]} : vector<5x16xf32> to vector<1x8xf32>
    %527 = vector.broadcast %525 : vector<8x1xf32> to vector<8x8xf32>
    %528 = vector.broadcast %526 : vector<1x8xf32> to vector<8x8xf32>
    %529 = arith.addf %527, %528 : vector<8x8xf32>
    %cst_139 = arith.constant 2.000000e-01 : f32
    %530 = vector.broadcast %cst_139 : f32 to vector<8x8xf32>
    %531 = arith.mulf %530, %529 : vector<8x8xf32>
    %532 = arith.maximumf %529, %531 : vector<8x8xf32>
    %533 = vector.extract_strided_slice %1 {offsets = [1, 3, 0, 0], sizes = [1, 1, 8, 8], strides = [1, 1, 1, 1]} : vector<2x5x8x8xf32> to vector<1x1x8x8xf32>
    %534 = vector.shape_cast %533 : vector<1x1x8x8xf32> to vector<8x8xf32>
    %cst_140 = arith.constant 5.000000e-01 : f32
    %535 = vector.broadcast %cst_140 : f32 to vector<8x8xf32>
    %536 = arith.cmpf ogt, %534, %535 : vector<8x8xf32>
    %cst_141 = arith.constant -9.000000e+15 : f32
    %537 = vector.broadcast %cst_141 : f32 to vector<8x8xf32>
    %538 = arith.select %536, %532, %537 : vector<8x8xi1>, vector<8x8xf32>
    %539 = vector.extract_strided_slice %479 {offsets = [0, 24], sizes = [8, 8], strides = [1, 1]} : vector<8x40xf32> to vector<8x8xf32>
    %540 = vector.extract_strided_slice %388 {offsets = [8, 4], sizes = [8, 1], strides = [1, 1]} : vector<16x5xf32> to vector<8x1xf32>
    %541 = vector.extract_strided_slice %390 {offsets = [4, 8], sizes = [1, 8], strides = [1, 1]} : vector<5x16xf32> to vector<1x8xf32>
    %542 = vector.broadcast %540 : vector<8x1xf32> to vector<8x8xf32>
    %543 = vector.broadcast %541 : vector<1x8xf32> to vector<8x8xf32>
    %544 = arith.addf %542, %543 : vector<8x8xf32>
    %cst_142 = arith.constant 2.000000e-01 : f32
    %545 = vector.broadcast %cst_142 : f32 to vector<8x8xf32>
    %546 = arith.mulf %545, %544 : vector<8x8xf32>
    %547 = arith.maximumf %544, %546 : vector<8x8xf32>
    %548 = vector.extract_strided_slice %1 {offsets = [1, 4, 0, 0], sizes = [1, 1, 8, 8], strides = [1, 1, 1, 1]} : vector<2x5x8x8xf32> to vector<1x1x8x8xf32>
    %549 = vector.shape_cast %548 : vector<1x1x8x8xf32> to vector<8x8xf32>
    %cst_143 = arith.constant 5.000000e-01 : f32
    %550 = vector.broadcast %cst_143 : f32 to vector<8x8xf32>
    %551 = arith.cmpf ogt, %549, %550 : vector<8x8xf32>
    %cst_144 = arith.constant -9.000000e+15 : f32
    %552 = vector.broadcast %cst_144 : f32 to vector<8x8xf32>
    %553 = arith.select %551, %547, %552 : vector<8x8xi1>, vector<8x8xf32>
    %554 = vector.extract_strided_slice %479 {offsets = [0, 32], sizes = [8, 8], strides = [1, 1]} : vector<8x40xf32> to vector<8x8xf32>
    %555 = tpu.concatenate %493, %508, %523, %538, %553 in 1 : vector<8x8xf32>, vector<8x8xf32>, vector<8x8xf32>, vector<8x8xf32>, vector<8x8xf32> -> vector<8x40xf32>
    %556 = tpu.concatenate %494, %509, %524, %539, %554 in 0 : vector<8x8xf32>, vector<8x8xf32>, vector<8x8xf32>, vector<8x8xf32>, vector<8x8xf32> -> vector<40x8xf32>
    %cst_145 = arith.constant dense<0xFF800000> : vector<8xf32>
    %557 = vector.multi_reduction <maximumf>, %555, %cst_145 [1] : vector<8x40xf32> to vector<8xf32>
    %558 = vector.shape_cast %557 : vector<8xf32> to vector<8x1xf32>
    %559 = vector.broadcast %558 : vector<8x1xf32> to vector<8x40xf32>
    %560 = arith.subf %555, %559 : vector<8x40xf32>
    %561 = math.exp %560 : vector<8x40xf32>
    %cst_146 = arith.constant dense<0.000000e+00> : vector<8xf32>
    %562 = vector.multi_reduction <add>, %561, %cst_146 [1] : vector<8x40xf32> to vector<8xf32>
    %563 = vector.shape_cast %562 : vector<8xf32> to vector<8x1xf32>
    %cst_147 = arith.constant dense<0.000000e+00> : vector<8x8xf32>
    %564 = tpu.matmul %561, %556, %cst_147 {dimension_numbers = #tpu.dot_dimension_numbers<[1], [0], [0], [1], [0, 0, 1, 1], [], []>} : vector<8x40xf32>, vector<40x8xf32>, vector<8x8xf32> -> vector<8x8xf32>
    %565 = vector.broadcast %563 : vector<8x1xf32> to vector<8x8xf32>
    %566 = arith.divf %564, %565 : vector<8x8xf32>
    %567 = tpu.concatenate %478, %566 in 0 : vector<8x8xf32>, vector<8x8xf32> -> vector<16x8xf32>
    %568 = vector.shape_cast %567 : vector<16x8xf32> to vector<2x8x8xf32>
    %cst_148 = arith.constant dense<0.000000e+00> : vector<2x8xf32>
    %569 = vector.multi_reduction <add>, %568, %cst_148 [1] : vector<2x8x8xf32> to vector<2x8xf32>
    %cst_149 = arith.constant 8.000000e+00 : f32
    %570 = vector.broadcast %cst_149 : f32 to vector<2x8xf32>
    %571 = arith.divf %569, %570 : vector<2x8xf32>
    %cst_150 = arith.constant dense<0xFF800000> : vector<2x8xf32>
    %572 = vector.multi_reduction <maximumf>, %568, %cst_150 [1] : vector<2x8x8xf32> to vector<2x8xf32>
    %c0_151 = arith.constant 0 : index
    %c0_152 = arith.constant 0 : index
    %573 = vector.load %arg15[%c0_151, %c0_152] : memref<8x8xf32, #tpu.memory_space<vmem>>, vector<8x8xf32>
    %cst_153 = arith.constant dense<0.000000e+00> : vector<2x8xf32>
    %574 = tpu.matmul %571, %573, %cst_153 {dimension_numbers = #tpu.dot_dimension_numbers<[1], [0], [0], [1], [0, 0, 1, 1], [], []>} : vector<2x8xf32>, vector<8x8xf32>, vector<2x8xf32> -> vector<2x8xf32>
    %c0_154 = arith.constant 0 : index
    %c0_155 = arith.constant 0 : index
    %575 = vector.load %arg16[%c0_154, %c0_155] : memref<8x8xf32, #tpu.memory_space<vmem>>, vector<8x8xf32>
    %cst_156 = arith.constant dense<0.000000e+00> : vector<2x8xf32>
    %576 = tpu.matmul %572, %575, %cst_156 {dimension_numbers = #tpu.dot_dimension_numbers<[1], [0], [0], [1], [0, 0, 1, 1], [], []>} : vector<2x8xf32>, vector<8x8xf32>, vector<2x8xf32> -> vector<2x8xf32>
    %577 = arith.addf %574, %576 : vector<2x8xf32>
    %c0_157 = arith.constant 0 : index
    %c0_158 = arith.constant 0 : index
    %578 = vector.load %arg17[%c0_157, %c0_158] : memref<1x8xf32, #tpu.memory_space<vmem>>, vector<1x8xf32>
    %579 = vector.broadcast %578 : vector<1x8xf32> to vector<2x8xf32>
    %580 = arith.addf %577, %579 : vector<2x8xf32>
    %cst_159 = arith.constant 2.000000e-01 : f32
    %581 = vector.broadcast %cst_159 : f32 to vector<2x8xf32>
    %582 = arith.mulf %581, %580 : vector<2x8xf32>
    %583 = arith.maximumf %580, %582 : vector<2x8xf32>
    %c0_160 = arith.constant 0 : index
    %c0_161 = arith.constant 0 : index
    %584 = vector.load %arg18[%c0_160, %c0_161] : memref<8x128xf32, #tpu.memory_space<vmem>>, vector<8x128xf32>
    %cst_162 = arith.constant dense<0.000000e+00> : vector<2x128xf32>
    %585 = tpu.matmul %583, %584, %cst_162 {dimension_numbers = #tpu.dot_dimension_numbers<[1], [0], [0], [1], [0, 0, 1, 1], [], []>} : vector<2x8xf32>, vector<8x128xf32>, vector<2x128xf32> -> vector<2x128xf32>
    %c0_163 = arith.constant 0 : index
    %c0_164 = arith.constant 0 : index
    %586 = vector.load %arg19[%c0_163, %c0_164] : memref<1x128xf32, #tpu.memory_space<vmem>>, vector<1x128xf32>
    %587 = vector.broadcast %586 : vector<1x128xf32> to vector<2x128xf32>
    %588 = arith.addf %585, %587 : vector<2x128xf32>
    %589 = vector.shape_cast %588 : vector<2x128xf32> to vector<1x2x128xf32>
    %c0_165 = arith.constant 0 : index
    %c0_166 = arith.constant 0 : index
    %c0_167 = arith.constant 0 : index
    %590 = vector.load %arg20[%c0_165, %c0_166, %c0_167] : memref<1x2x128xf32, #tpu.memory_space<vmem>>, vector<1x2x128xf32>
    tpu.vector_store %arg20[%c0_165, %c0_166, %c0_167], %589 {strides = array<i32>} : memref<1x2x128xf32, #tpu.memory_space<vmem>>, vector<1x2x128xf32>,
    return
  }
  func.func @transform_0(%arg0: i32) -> (i32, i32, i32) {
    %c0_i32 = arith.constant 0 : i32
    %c0_i32_0 = arith.constant 0 : i32
    %c0_i32_1 = arith.constant 0 : i32
    return %arg0, %c0_i32, %c0_i32_0 : i32, i32, i32
  }
  func.func @transform_1(%arg0: i32) -> (i32, i32, i32, i32) {
    %c0_i32 = arith.constant 0 : i32
    %c0_i32_0 = arith.constant 0 : i32
    %c0_i32_1 = arith.constant 0 : i32
    %c0_i32_2 = arith.constant 0 : i32
    return %arg0, %c0_i32, %c0_i32_0, %c0_i32_1 : i32, i32, i32, i32
  }
  func.func @transform_2(%arg0: i32) -> (i32, i32) {
    %c0_i32 = arith.constant 0 : i32
    %c0_i32_0 = arith.constant 0 : i32
    %c0_i32_1 = arith.constant 0 : i32
    return %c0_i32, %c0_i32_0 : i32, i32
  }
  func.func @transform_3(%arg0: i32) -> (i32, i32) {
    %c0_i32 = arith.constant 0 : i32
    %c0_i32_0 = arith.constant 0 : i32
    %c0_i32_1 = arith.constant 0 : i32
    return %c0_i32, %c0_i32_0 : i32, i32
  }
  func.func @transform_4(%arg0: i32) -> (i32, i32) {
    %c0_i32 = arith.constant 0 : i32
    %c0_i32_0 = arith.constant 0 : i32
    %c0_i32_1 = arith.constant 0 : i32
    return %c0_i32, %c0_i32_0 : i32, i32
  }
  func.func @transform_5(%arg0: i32) -> (i32, i32) {
    %c0_i32 = arith.constant 0 : i32
    %c0_i32_0 = arith.constant 0 : i32
    %c0_i32_1 = arith.constant 0 : i32
    return %c0_i32, %c0_i32_0 : i32, i32
  }
  func.func @transform_6(%arg0: i32) -> (i32, i32) {
    %c0_i32 = arith.constant 0 : i32
    %c0_i32_0 = arith.constant 0 : i32
    %c0_i32_1 = arith.constant 0 : i32
    return %c0_i32, %c0_i32_0 : i32, i32
  }
  func.func @transform_7(%arg0: i32) -> (i32, i32) {
    %c0_i32 = arith.constant 0 : i32
    %c0_i32_0 = arith.constant 0 : i32
    %c0_i32_1 = arith.constant 0 : i32
    return %c0_i32, %c0_i32_0 : i32, i32
  }
  func.func @transform_8(%arg0: i32) -> (i32, i32) {
    %c0_i32 = arith.constant 0 : i32
    %c0_i32_0 = arith.constant 0 : i32
    %c0_i32_1 = arith.constant 0 : i32
    return %c0_i32, %c0_i32_0 : i32, i32
  }
  func.func @transform_9(%arg0: i32) -> (i32, i32) {
    %c0_i32 = arith.constant 0 : i32
    %c0_i32_0 = arith.constant 0 : i32
    %c0_i32_1 = arith.constant 0 : i32
    return %c0_i32, %c0_i32_0 : i32, i32
  }
  func.func @transform_10(%arg0: i32) -> (i32, i32) {
    %c0_i32 = arith.constant 0 : i32
    %c0_i32_0 = arith.constant 0 : i32
    %c0_i32_1 = arith.constant 0 : i32
    return %c0_i32, %c0_i32_0 : i32, i32
  }
  func.func @transform_11(%arg0: i32) -> (i32, i32) {
    %c0_i32 = arith.constant 0 : i32
    %c0_i32_0 = arith.constant 0 : i32
    %c0_i32_1 = arith.constant 0 : i32
    return %c0_i32, %c0_i32_0 : i32, i32
  }
  func.func @transform_12(%arg0: i32) -> (i32, i32) {
    %c0_i32 = arith.constant 0 : i32
    %c0_i32_0 = arith.constant 0 : i32
    %c0_i32_1 = arith.constant 0 : i32
    return %c0_i32, %c0_i32_0 : i32, i32
  }
  func.func @transform_13(%arg0: i32) -> (i32, i32) {
    %c0_i32 = arith.constant 0 : i32
    %c0_i32_0 = arith.constant 0 : i32
    %c0_i32_1 = arith.constant 0 : i32
    return %c0_i32, %c0_i32_0 : i32, i32
  }
  func.func @transform_14(%arg0: i32) -> (i32, i32) {
    %c0_i32 = arith.constant 0 : i32
    %c0_i32_0 = arith.constant 0 : i32
    %c0_i32_1 = arith.constant 0 : i32
    return %c0_i32, %c0_i32_0 : i32, i32
  }
  func.func @transform_15(%arg0: i32) -> (i32, i32) {
    %c0_i32 = arith.constant 0 : i32
    %c0_i32_0 = arith.constant 0 : i32
    %c0_i32_1 = arith.constant 0 : i32
    return %c0_i32, %c0_i32_0 : i32, i32
  }
  func.func @transform_16(%arg0: i32) -> (i32, i32) {
    %c0_i32 = arith.constant 0 : i32
    %c0_i32_0 = arith.constant 0 : i32
    %c0_i32_1 = arith.constant 0 : i32
    return %c0_i32, %c0_i32_0 : i32, i32
  }
  func.func @transform_17(%arg0: i32) -> (i32, i32) {
    %c0_i32 = arith.constant 0 : i32
    %c0_i32_0 = arith.constant 0 : i32
    %c0_i32_1 = arith.constant 0 : i32
    return %c0_i32, %c0_i32_0 : i32, i32
  }
  func.func @transform_18(%arg0: i32) -> (i32, i32) {
    %c0_i32 = arith.constant 0 : i32
    %c0_i32_0 = arith.constant 0 : i32
    %c0_i32_1 = arith.constant 0 : i32
    return %c0_i32, %c0_i32_0 : i32, i32
  }
  func.func @transform_19(%arg0: i32) -> (i32, i32, i32) {
    %c0_i32 = arith.constant 0 : i32
    %c0_i32_0 = arith.constant 0 : i32
    %c0_i32_1 = arith.constant 0 : i32
    return %arg0, %c0_i32, %c0_i32_0 : i32, i32, i32
  }
}

</mosaic_0001>

<llo_original>
// kernel: reward_model_forward.1
$region0: #{reward_model_forward.1}
  #allocation0 [shape = 'u32[]', space=smem, size = 0x4, offset = 0x4, fixed_abs, tag = 'smem constant byte address 0x4 - core index']
  #allocation1 [shape = 'u32[144,128]{1,0:T(1,128)}', space=vmem, size = 0x12000, scoped, tag = 'internal scratch']
  %s0 = inlined_call_operand.vmem [shape: f32[4,8,16], index: 0, kind: input, shape index: {}]
  %s1 = inlined_call_operand.vmem [shape: s8[4,5,8,8], index: 1, kind: input, shape index: {}]
  %s2 = inlined_call_operand.vmem [shape: f32[16,40], index: 2, kind: input, shape index: {}]
  %s3 = inlined_call_operand.vmem [shape: f32[1,40], index: 3, kind: input, shape index: {}]
  %s4 = inlined_call_operand.vmem [shape: f32[40,5], index: 4, kind: input, shape index: {}]
  %s5 = inlined_call_operand.vmem [shape: f32[5,40], index: 5, kind: input, shape index: {}]
  %s6 = inlined_call_operand.vmem [shape: f32[8,40], index: 6, kind: input, shape index: {}]
  %s7 = inlined_call_operand.vmem [shape: f32[1,40], index: 7, kind: input, shape index: {}]
  %s8 = inlined_call_operand.vmem [shape: f32[40,5], index: 8, kind: input, shape index: {}]
  %s9 = inlined_call_operand.vmem [shape: f32[5,40], index: 9, kind: input, shape index: {}]
  %s10 = inlined_call_operand.vmem [shape: f32[8,40], index: 10, kind: input, shape index: {}]
  %s11 = inlined_call_operand.vmem [shape: f32[1,40], index: 11, kind: input, shape index: {}]
  %s12 = inlined_call_operand.vmem [shape: f32[40,5], index: 12, kind: input, shape index: {}]
  %s13 = inlined_call_operand.vmem [shape: f32[5,40], index: 13, kind: input, shape index: {}]
  %s14 = inlined_call_operand.vmem [shape: f32[8,8], index: 14, kind: input, shape index: {}]
  %s15 = inlined_call_operand.vmem [shape: f32[8,8], index: 15, kind: input, shape index: {}]
  %s16 = inlined_call_operand.vmem [shape: f32[1,8], index: 16, kind: input, shape index: {}]
  %s17 = inlined_call_operand.vmem [shape: f32[8,128], index: 17, kind: input, shape index: {}]
  %s18 = inlined_call_operand.vmem [shape: f32[1,128], index: 18, kind: input, shape index: {}]
  %s19 = inlined_call_operand.hbm [shape: f32[2,2,128], index: 19, kind: output, shape index: {}]
  %s20 = sld [smem:[#allocation0]]
  $region109: #{reward_model_forward.1} parent=0
    _
  %s22 = ssub.s32 1, %s20
  %s23 = scalar_select 0, %s22, %s20
  $region1: #{reward_model_forward.1} parent=0
    #allocation2 [shape = 'u8[2048]{0}', space=vmem, size = 0x800, scoped, tag = 'output window, operand 0']
    #allocation3 [shape = 's32[2]{0}', space=sflag, size = 0x8, scoped, tag = 'scoped memory for reward_model_forward.1']
    %24 = vsyncpa [#allocation3], 0
    %s25 = scalar_lea.sflag [#allocation3], 1
    %26 = vsyncpa %s25, 0
    loop: start=0, step=1, limit=4
    $region2: #{reward_model_forward.1} parent=1 // loop_pre_header
      _
    $region3: #{reward_model_forward.1} parent=1 // loop_header
      %s28 = sphi 0, %s32
      %p29 = scmp.ge.s32.totalorder %s28, 4
      %s38 = sphi 0, %s40
      %s41 = sphi 0, %s38
      %s42 = sphi 0, %s41
      %s58 = sphi 0, %s42
      %s64 = sphi 0, %s66
      %s67 = sphi 0, %s64
      %s68 = sphi 0, %s67
      %s84 = sphi 0, %s68
      %s88 = sphi 0, %s88
      %s90 = sphi 0, %s88
      %s91 = sphi 0, %s90
      %s105 = sphi 0, %s91
      %s109 = sphi 0, %s109
      %s111 = sphi 0, %s109
      %s112 = sphi 0, %s111
      %s126 = sphi 0, %s112
      %s130 = sphi 0, %s130
      %s132 = sphi 0, %s130
      %s133 = sphi 0, %s132
      %s147 = sphi 0, %s133
      %s151 = sphi 0, %s151
      %s153 = sphi 0, %s151
      %s154 = sphi 0, %s153
      %s168 = sphi 0, %s154
      %s172 = sphi 0, %s172
      %s174 = sphi 0, %s172
      %s175 = sphi 0, %s174
      %s189 = sphi 0, %s175
      %s193 = sphi 0, %s193
      %s195 = sphi 0, %s193
      %s196 = sphi 0, %s195
      %s210 = sphi 0, %s196
      %s214 = sphi 0, %s214
      %s216 = sphi 0, %s214
      %s217 = sphi 0, %s216
      %s231 = sphi 0, %s217
      %s235 = sphi 0, %s235
      %s237 = sphi 0, %s235
      %s238 = sphi 0, %s237
      %s252 = sphi 0, %s238
      %s256 = sphi 0, %s256
      %s258 = sphi 0, %s256
      %s259 = sphi 0, %s258
      %s273 = sphi 0, %s259
      %s277 = sphi 0, %s277
      %s279 = sphi 0, %s277
      %s280 = sphi 0, %s279
      %s294 = sphi 0, %s280
      %s298 = sphi 0, %s298
      %s300 = sphi 0, %s298
      %s301 = sphi 0, %s300
      %s315 = sphi 0, %s301
      %s319 = sphi 0, %s319
      %s321 = sphi 0, %s319
      %s322 = sphi 0, %s321
      %s336 = sphi 0, %s322
      %s340 = sphi 0, %s340
      %s342 = sphi 0, %s340
      %s343 = sphi 0, %s342
      %s357 = sphi 0, %s343
      %s361 = sphi 0, %s361
      %s363 = sphi 0, %s361
      %s364 = sphi 0, %s363
      %s378 = sphi 0, %s364
      %s382 = sphi 0, %s382
      %s384 = sphi 0, %s382
      %s385 = sphi 0, %s384
      %s399 = sphi 0, %s385
      %s403 = sphi 0, %s403
      %s405 = sphi 0, %s403
      %s406 = sphi 0, %s405
      %s420 = sphi 0, %s406
      %s424 = sphi 0, %s424
      %s426 = sphi 0, %s424
      %s427 = sphi 0, %s426
      %s441 = sphi 0, %s427
      %s447 = sphi 0, %s449
      %s450 = sphi 0, %s447
      %s451 = sphi 0, %s450
      %s467 = sphi 0, %s451
    $region4: #{reward_model_forward.1} parent=1 // loop_header_branch
      %31 = sbr.rel (%p29) target = $region8
    $region5: #{reward_model_forward.1} parent=1 // loop_body
      %s33 = ssub.s32 %s28, 1
      %s34 = ssub.s32 %s28, 2
      %s35 = sadd.s32 %s28, 1
      %s36 = ssub.s32 %s28, %s35
      %p37 = scmp.eq.s32.totalorder %s36, 0
      %s39 = sadd.s32 %s38, 1
      %s40 = scalar_select %p37, %s38, %s39
      %p43 = pneg %p37
      %p44 = scmp.eq.s32.totalorder %s28, 1
      %p45 = por %p43, %p44
      %p46 = scmp.ne.s32.totalorder %s38, %s41
      %p47 = scmp.eq.s32.totalorder %s28, 0
      %p48 = por %p46, %p47
      %p49 = scmp.ne.s32.totalorder %s38, %s41
      %p50 = scmp.eq.s32.totalorder %s33, 1
      %p51 = por %p49, %p50
      %p52 = scmp.ne.s32.totalorder %s41, %s42
      %p53 = scmp.eq.s32.totalorder %s33, 0
      %p54 = por %p52, %p53
      %p55 = scmp.ne.s32.totalorder %s41, %s42
      %p56 = scmp.eq.s32.totalorder %s34, 1
      %p57 = por %p55, %p56
      %p59 = scmp.ne.s32.totalorder %s42, %s58
      %p60 = scmp.eq.s32.totalorder %s34, 0
      %p61 = por %p59, %p60
      %s62 = ssub.s32 %s28, %s35
      %p63 = scmp.eq.s32.totalorder %s62, 0
      %s65 = sadd.s32 %s64, 1
      %s66 = scalar_select %p63, %s64, %s65
      %p69 = pneg %p63
      %p70 = scmp.eq.s32.totalorder %s28, 1
      %p71 = por %p69, %p70
      %p72 = scmp.ne.s32.totalorder %s64, %s67
      %p73 = scmp.eq.s32.totalorder %s28, 0
      %p74 = por %p72, %p73
      %p75 = scmp.ne.s32.totalorder %s64, %s67
      %p76 = scmp.eq.s32.totalorder %s33, 1
      %p77 = por %p75, %p76
      %p78 = scmp.ne.s32.totalorder %s67, %s68
      %p79 = scmp.eq.s32.totalorder %s33, 0
      %p80 = por %p78, %p79
      %p81 = scmp.ne.s32.totalorder %s67, %s68
      %p82 = scmp.eq.s32.totalorder %s34, 1
      %p83 = por %p81, %p82
      %p85 = scmp.ne.s32.totalorder %s68, %s84
      %p86 = scmp.eq.s32.totalorder %s34, 0
      %p87 = por %p85, %p86
      %s89 = sadd.s32 %s88, 1
      %p92 = scmp.eq.s32.totalorder %s28, 1
      %p93 = scmp.ne.s32.totalorder %s88, %s90
      %p94 = scmp.eq.s32.totalorder %s28, 0
      %p95 = por %p93, %p94
      %p96 = scmp.ne.s32.totalorder %s88, %s90
      %p97 = scmp.eq.s32.totalorder %s33, 1
      %p98 = por %p96, %p97
      %p99 = scmp.ne.s32.totalorder %s90, %s91
      %p100 = scmp.eq.s32.totalorder %s33, 0
      %p101 = por %p99, %p100
      %p102 = scmp.ne.s32.totalorder %s90, %s91
      %p103 = scmp.eq.s32.totalorder %s34, 1
      %p104 = por %p102, %p103
      %p106 = scmp.ne.s32.totalorder %s91, %s105
      %p107 = scmp.eq.s32.totalorder %s34, 0
      %p108 = por %p106, %p107
      %s110 = sadd.s32 %s109, 1
      %p113 = scmp.eq.s32.totalorder %s28, 1
      %p114 = scmp.ne.s32.totalorder %s109, %s111
      %p115 = scmp.eq.s32.totalorder %s28, 0
      %p116 = por %p114, %p115
      %p117 = scmp.ne.s32.totalorder %s109, %s111
      %p118 = scmp.eq.s32.totalorder %s33, 1
      %p119 = por %p117, %p118
      %p120 = scmp.ne.s32.totalorder %s111, %s112
      %p121 = scmp.eq.s32.totalorder %s33, 0
      %p122 = por %p120, %p121
      %p123 = scmp.ne.s32.totalorder %s111, %s112
      %p124 = scmp.eq.s32.totalorder %s34, 1
      %p125 = por %p123, %p124
      %p127 = scmp.ne.s32.totalorder %s112, %s126
      %p128 = scmp.eq.s32.totalorder %s34, 0
      %p129 = por %p127, %p128
      %s131 = sadd.s32 %s130, 1
      %p134 = scmp.eq.s32.totalorder %s28, 1
      %p135 = scmp.ne.s32.totalorder %s130, %s132
      %p136 = scmp.eq.s32.totalorder %s28, 0
      %p137 = por %p135, %p136
      %p138 = scmp.ne.s32.totalorder %s130, %s132
      %p139 = scmp.eq.s32.totalorder %s33, 1
      %p140 = por %p138, %p139
      %p141 = scmp.ne.s32.totalorder %s132, %s133
      %p142 = scmp.eq.s32.totalorder %s33, 0
      %p143 = por %p141, %p142
      %p144 = scmp.ne.s32.totalorder %s132, %s133
      %p145 = scmp.eq.s32.totalorder %s34, 1
      %p146 = por %p144, %p145
      %p148 = scmp.ne.s32.totalorder %s133, %s147
      %p149 = scmp.eq.s32.totalorder %s34, 0
      %p150 = por %p148, %p149
      %s152 = sadd.s32 %s151, 1
      %p155 = scmp.eq.s32.totalorder %s28, 1
      %p156 = scmp.ne.s32.totalorder %s151, %s153
      %p157 = scmp.eq.s32.totalorder %s28, 0
      %p158 = por %p156, %p157
      %p159 = scmp.ne.s32.totalorder %s151, %s153
      %p160 = scmp.eq.s32.totalorder %s33, 1
      %p161 = por %p159, %p160
      %p162 = scmp.ne.s32.totalorder %s153, %s154
      %p163 = scmp.eq.s32.totalorder %s33, 0
      %p164 = por %p162, %p163
      %p165 = scmp.ne.s32.totalorder %s153, %s154
      %p166 = scmp.eq.s32.totalorder %s34, 1
      %p167 = por %p165, %p166
      %p169 = scmp.ne.s32.totalorder %s154, %s168
      %p170 = scmp.eq.s32.totalorder %s34, 0
      %p171 = por %p169, %p170
      %s173 = sadd.s32 %s172, 1
      %p176 = scmp.eq.s32.totalorder %s28, 1
      %p177 = scmp.ne.s32.totalorder %s172, %s174
      %p178 = scmp.eq.s32.totalorder %s28, 0
      %p179 = por %p177, %p178
      %p180 = scmp.ne.s32.totalorder %s172, %s174
      %p181 = scmp.eq.s32.totalorder %s33, 1
      %p182 = por %p180, %p181
      %p183 = scmp.ne.s32.totalorder %s174, %s175
      %p184 = scmp.eq.s32.totalorder %s33, 0
      %p185 = por %p183, %p184
      %p186 = scmp.ne.s32.totalorder %s174, %s175
      %p187 = scmp.eq.s32.totalorder %s34, 1
      %p188 = por %p186, %p187
      %p190 = scmp.ne.s32.totalorder %s175, %s189
      %p191 = scmp.eq.s32.totalorder %s34, 0
      %p192 = por %p190, %p191
      %s194 = sadd.s32 %s193, 1
      %p197 = scmp.eq.s32.totalorder %s28, 1
      %p198 = scmp.ne.s32.totalorder %s193, %s195
      %p199 = scmp.eq.s32.totalorder %s28, 0
      %p200 = por %p198, %p199
      %p201 = scmp.ne.s32.totalorder %s193, %s195
      %p202 = scmp.eq.s32.totalorder %s33, 1
      %p203 = por %p201, %p202
      %p204 = scmp.ne.s32.totalorder %s195, %s196
      %p205 = scmp.eq.s32.totalorder %s33, 0
      %p206 = por %p204, %p205
      %p207 = scmp.ne.s32.totalorder %s195, %s196
      %p208 = scmp.eq.s32.totalorder %s34, 1
      %p209 = por %p207, %p208
      %p211 = scmp.ne.s32.totalorder %s196, %s210
      %p212 = scmp.eq.s32.totalorder %s34, 0
      %p213 = por %p211, %p212
      %s215 = sadd.s32 %s214, 1
      %p218 = scmp.eq.s32.totalorder %s28, 1
      %p219 = scmp.ne.s32.totalorder %s214, %s216
      %p220 = scmp.eq.s32.totalorder %s28, 0
      %p221 = por %p219, %p220
      %p222 = scmp.ne.s32.totalorder %s214, %s216
      %p223 = scmp.eq.s32.totalorder %s33, 1
      %p224 = por %p222, %p223
      %p225 = scmp.ne.s32.totalorder %s216, %s217
      %p226 = scmp.eq.s32.totalorder %s33, 0
      %p227 = por %p225, %p226
      %p228 = scmp.ne.s32.totalorder %s216, %s217
      %p229 = scmp.eq.s32.totalorder %s34, 1
      %p230 = por %p228, %p229
      %p232 = scmp.ne.s32.totalorder %s217, %s231
      %p233 = scmp.eq.s32.totalorder %s34, 0
      %p234 = por %p232, %p233
      %s236 = sadd.s32 %s235, 1
      %p239 = scmp.eq.s32.totalorder %s28, 1
      %p240 = scmp.ne.s32.totalorder %s235, %s237
      %p241 = scmp.eq.s32.totalorder %s28, 0
      %p242 = por %p240, %p241
      %p243 = scmp.ne.s32.totalorder %s235, %s237
      %p244 = scmp.eq.s32.totalorder %s33, 1
      %p245 = por %p243, %p244
      %p246 = scmp.ne.s32.totalorder %s237, %s238
      %p247 = scmp.eq.s32.totalorder %s33, 0
      %p248 = por %p246, %p247
      %p249 = scmp.ne.s32.totalorder %s237, %s238
      %p250 = scmp.eq.s32.totalorder %s34, 1
      %p251 = por %p249, %p250
      %p253 = scmp.ne.s32.totalorder %s238, %s252
      %p254 = scmp.eq.s32.totalorder %s34, 0
      %p255 = por %p253, %p254
      %s257 = sadd.s32 %s256, 1
      %p260 = scmp.eq.s32.totalorder %s28, 1
      %p261 = scmp.ne.s32.totalorder %s256, %s258
      %p262 = scmp.eq.s32.totalorder %s28, 0
      %p263 = por %p261, %p262
      %p264 = scmp.ne.s32.totalorder %s256, %s258
      %p265 = scmp.eq.s32.totalorder %s33, 1
      %p266 = por %p264, %p265
      %p267 = scmp.ne.s32.totalorder %s258, %s259
      %p268 = scmp.eq.s32.totalorder %s33, 0
      %p269 = por %p267, %p268
      %p270 = scmp.ne.s32.totalorder %s258, %s259
      %p271 = scmp.eq.s32.totalorder %s34, 1
      %p272 = por %p270, %p271
      %p274 = scmp.ne.s32.totalorder %s259, %s273
      %p275 = scmp.eq.s32.totalorder %s34, 0
      %p276 = por %p274, %p275
      %s278 = sadd.s32 %s277, 1
      %p281 = scmp.eq.s32.totalorder %s28, 1
      %p282 = scmp.ne.s32.totalorder %s277, %s279
      %p283 = scmp.eq.s32.totalorder %s28, 0
      %p284 = por %p282, %p283
      %p285 = scmp.ne.s32.totalorder %s277, %s279
      %p286 = scmp.eq.s32.totalorder %s33, 1
      %p287 = por %p285, %p286
      %p288 = scmp.ne.s32.totalorder %s279, %s280
      %p289 = scmp.eq.s32.totalorder %s33, 0
      %p290 = por %p288, %p289
      %p291 = scmp.ne.s32.totalorder %s279, %s280
      %p292 = scmp.eq.s32.totalorder %s34, 1
      %p293 = por %p291, %p292
      %p295 = scmp.ne.s32.totalorder %s280, %s294
      %p296 = scmp.eq.s32.totalorder %s34, 0
      %p297 = por %p295, %p296
      %s299 = sadd.s32 %s298, 1
      %p302 = scmp.eq.s32.totalorder %s28, 1
      %p303 = scmp.ne.s32.totalorder %s298, %s300
      %p304 = scmp.eq.s32.totalorder %s28, 0
      %p305 = por %p303, %p304
      %p306 = scmp.ne.s32.totalorder %s298, %s300
      %p307 = scmp.eq.s32.totalorder %s33, 1
      %p308 = por %p306, %p307
      %p309 = scmp.ne.s32.totalorder %s300, %s301
      %p310 = scmp.eq.s32.totalorder %s33, 0
      %p311 = por %p309, %p310
      %p312 = scmp.ne.s32.totalorder %s300, %s301
      %p313 = scmp.eq.s32.totalorder %s34, 1
      %p314 = por %p312, %p313
      %p316 = scmp.ne.s32.totalorder %s301, %s315
      %p317 = scmp.eq.s32.totalorder %s34, 0
      %p318 = por %p316, %p317
      %s320 = sadd.s32 %s319, 1
      %p323 = scmp.eq.s32.totalorder %s28, 1
      %p324 = scmp.ne.s32.totalorder %s319, %s321
      %p325 = scmp.eq.s32.totalorder %s28, 0
      %p326 = por %p324, %p325
      %p327 = scmp.ne.s32.totalorder %s319, %s321
      %p328 = scmp.eq.s32.totalorder %s33, 1
      %p329 = por %p327, %p328
      %p330 = scmp.ne.s32.totalorder %s321, %s322
      %p331 = scmp.eq.s32.totalorder %s33, 0
      %p332 = por %p330, %p331
      %p333 = scmp.ne.s32.totalorder %s321, %s322
      %p334 = scmp.eq.s32.totalorder %s34, 1
      %p335 = por %p333, %p334
      %p337 = scmp.ne.s32.totalorder %s322, %s336
      %p338 = scmp.eq.s32.totalorder %s34, 0
      %p339 = por %p337, %p338
      %s341 = sadd.s32 %s340, 1
      %p344 = scmp.eq.s32.totalorder %s28, 1
      %p345 = scmp.ne.s32.totalorder %s340, %s342
      %p346 = scmp.eq.s32.totalorder %s28, 0
      %p347 = por %p345, %p346
      %p348 = scmp.ne.s32.totalorder %s340, %s342
      %p349 = scmp.eq.s32.totalorder %s33, 1
      %p350 = por %p348, %p349
      %p351 = scmp.ne.s32.totalorder %s342, %s343
      %p352 = scmp.eq.s32.totalorder %s33, 0
      %p353 = por %p351, %p352
      %p354 = scmp.ne.s32.totalorder %s342, %s343
      %p355 = scmp.eq.s32.totalorder %s34, 1
      %p356 = por %p354, %p355
      %p358 = scmp.ne.s32.totalorder %s343, %s357
      %p359 = scmp.eq.s32.totalorder %s34, 0
      %p360 = por %p358, %p359
      %s362 = sadd.s32 %s361, 1
      %p365 = scmp.eq.s32.totalorder %s28, 1
      %p366 = scmp.ne.s32.totalorder %s361, %s363
      %p367 = scmp.eq.s32.totalorder %s28, 0
      %p368 = por %p366, %p367
      %p369 = scmp.ne.s32.totalorder %s361, %s363
      %p370 = scmp.eq.s32.totalorder %s33, 1
      %p371 = por %p369, %p370
      %p372 = scmp.ne.s32.totalorder %s363, %s364
      %p373 = scmp.eq.s32.totalorder %s33, 0
      %p374 = por %p372, %p373
      %p375 = scmp.ne.s32.totalorder %s363, %s364
      %p376 = scmp.eq.s32.totalorder %s34, 1
      %p377 = por %p375, %p376
      %p379 = scmp.ne.s32.totalorder %s364, %s378
      %p380 = scmp.eq.s32.totalorder %s34, 0
      %p381 = por %p379, %p380
      %s383 = sadd.s32 %s382, 1
      %p386 = scmp.eq.s32.totalorder %s28, 1
      %p387 = scmp.ne.s32.totalorder %s382, %s384
      %p388 = scmp.eq.s32.totalorder %s28, 0
      %p389 = por %p387, %p388
      %p390 = scmp.ne.s32.totalorder %s382, %s384
      %p391 = scmp.eq.s32.totalorder %s33, 1
      %p392 = por %p390, %p391
      %p393 = scmp.ne.s32.totalorder %s384, %s385
      %p394 = scmp.eq.s32.totalorder %s33, 0
      %p395 = por %p393, %p394
      %p396 = scmp.ne.s32.totalorder %s384, %s385
      %p397 = scmp.eq.s32.totalorder %s34, 1
      %p398 = por %p396, %p397
      %p400 = scmp.ne.s32.totalorder %s385, %s399
      %p401 = scmp.eq.s32.totalorder %s34, 0
      %p402 = por %p400, %p401
      %s404 = sadd.s32 %s403, 1
      %p407 = scmp.eq.s32.totalorder %s28, 1
      %p408 = scmp.ne.s32.totalorder %s403, %s405
      %p409 = scmp.eq.s32.totalorder %s28, 0
      %p410 = por %p408, %p409
      %p411 = scmp.ne.s32.totalorder %s403, %s405
      %p412 = scmp.eq.s32.totalorder %s33, 1
      %p413 = por %p411, %p412
      %p414 = scmp.ne.s32.totalorder %s405, %s406
      %p415 = scmp.eq.s32.totalorder %s33, 0
      %p416 = por %p414, %p415
      %p417 = scmp.ne.s32.totalorder %s405, %s406
      %p418 = scmp.eq.s32.totalorder %s34, 1
      %p419 = por %p417, %p418
      %p421 = scmp.ne.s32.totalorder %s406, %s420
      %p422 = scmp.eq.s32.totalorder %s34, 0
      %p423 = por %p421, %p422
      %s425 = sadd.s32 %s424, 1
      %p428 = scmp.eq.s32.totalorder %s28, 1
      %p429 = scmp.ne.s32.totalorder %s424, %s426
      %p430 = scmp.eq.s32.totalorder %s28, 0
      %p431 = por %p429, %p430
      %p432 = scmp.ne.s32.totalorder %s424, %s426
      %p433 = scmp.eq.s32.totalorder %s33, 1
      %p434 = por %p432, %p433
      %p435 = scmp.ne.s32.totalorder %s426, %s427
      %p436 = scmp.eq.s32.totalorder %s33, 0
      %p437 = por %p435, %p436
      %p438 = scmp.ne.s32.totalorder %s426, %s427
      %p439 = scmp.eq.s32.totalorder %s34, 1
      %p440 = por %p438, %p439
      %p442 = scmp.ne.s32.totalorder %s427, %s441
      %p443 = scmp.eq.s32.totalorder %s34, 0
      %p444 = por %p442, %p443
      %s445 = ssub.s32 %s28, %s35
      %p446 = scmp.eq.s32.totalorder %s445, 0
      %s448 = sadd.s32 %s447, 1
      %s449 = scalar_select %p446, %s447, %s448
      %p452 = pneg %p446
      %p453 = scmp.eq.s32.totalorder %s28, 1
      %p454 = por %p452, %p453
      %p455 = scmp.ne.s32.totalorder %s447, %s450
      %p456 = scmp.eq.s32.totalorder %s28, 0
      %p457 = por %p455, %p456
      %p458 = scmp.ne.s32.totalorder %s447, %s450
      %p459 = scmp.eq.s32.totalorder %s33, 1
      %p460 = por %p458, %p459
      %p461 = scmp.ne.s32.totalorder %s450, %s451
      %p462 = scmp.eq.s32.totalorder %s33, 0
      %p463 = por %p461, %p462
      %p464 = scmp.ne.s32.totalorder %s450, %s451
      %p465 = scmp.eq.s32.totalorder %s34, 1
      %p466 = por %p464, %p465
      %p468 = scmp.ne.s32.totalorder %s451, %s467
      %p469 = scmp.eq.s32.totalorder %s34, 0
      %p470 = por %p468, %p469
      %p471 = scmp.le.s32.totalorder 1, %s28
      %p472 = scmp.lt.s32.totalorder %s28, 3
      %p473 = pnand %p471, %p472
      %p474 = pneg %p473
      // Predicated region
      $region9: #{reward_model_forward.1} parent=5 // pred_check
        _
      $region10: #{reward_model_forward.1} parent=5 // pred_check_branch
        %476 = sbr.rel (%p473) target = $region12
      $region11: #{reward_model_forward.1} parent=5 // pred_region
        %s477 = ssub.s32 %s28, 1
        // Predicated region
        $region13: #{reward_model_forward.1} parent=11 // pred_check
          %p478 = pneg %p101
        $region14: #{reward_model_forward.1} parent=11 // pred_check_branch
          %480 = sbr.rel (%p478) target = $region16
        $region15: #{reward_model_forward.1} parent=11 // pred_region
          _
        $region16: #{reward_model_forward.1} parent=11 // pred_fallthru
          _
        // Predicated region
        $region17: #{reward_model_forward.1} parent=11 // pred_check
          %p481 = pneg %p122
        $region18: #{reward_model_forward.1} parent=11 // pred_check_branch
          %483 = sbr.rel (%p481) target = $region20
        $region19: #{reward_model_forward.1} parent=11 // pred_region
          _
        $region20: #{reward_model_forward.1} parent=11 // pred_fallthru
          _
        // Predicated region
        $region21: #{reward_model_forward.1} parent=11 // pred_check
          %p484 = pneg %p143
        $region22: #{reward_model_forward.1} parent=11 // pred_check_branch
          %486 = sbr.rel (%p484) target = $region24
        $region23: #{reward_model_forward.1} parent=11 // pred_region
          _
        $region24: #{reward_model_forward.1} parent=11 // pred_fallthru
          _
        // Predicated region
        $region25: #{reward_model_forward.1} parent=11 // pred_check
          %p487 = pneg %p164
        $region26: #{reward_model_forward.1} parent=11 // pred_check_branch
          %489 = sbr.rel (%p487) target = $region28
        $region27: #{reward_model_forward.1} parent=11 // pred_region
          _
        $region28: #{reward_model_forward.1} parent=11 // pred_fallthru
          _
        // Predicated region
        $region29: #{reward_model_forward.1} parent=11 // pred_check
          %p490 = pneg %p185
        $region30: #{reward_model_forward.1} parent=11 // pred_check_branch
          %492 = sbr.rel (%p490) target = $region32
        $region31: #{reward_model_forward.1} parent=11 // pred_region
          _
        $region32: #{reward_model_forward.1} parent=11 // pred_fallthru
          _
        // Predicated region
        $region33: #{reward_model_forward.1} parent=11 // pred_check
          %p493 = pneg %p206
        $region34: #{reward_model_forward.1} parent=11 // pred_check_branch
          %495 = sbr.rel (%p493) target = $region36
        $region35: #{reward_model_forward.1} parent=11 // pred_region
          _
        $region36: #{reward_model_forward.1} parent=11 // pred_fallthru
          _
        // Predicated region
        $region37: #{reward_model_forward.1} parent=11 // pred_check
          %p496 = pneg %p227
        $region38: #{reward_model_forward.1} parent=11 // pred_check_branch
          %498 = sbr.rel (%p496) target = $region40
        $region39: #{reward_model_forward.1} parent=11 // pred_region
          _
        $region40: #{reward_model_forward.1} parent=11 // pred_fallthru
          _
        // Predicated region
        $region41: #{reward_model_forward.1} parent=11 // pred_check
          %p499 = pneg %p248
        $region42: #{reward_model_forward.1} parent=11 // pred_check_branch
          %501 = sbr.rel (%p499) target = $region44
        $region43: #{reward_model_forward.1} parent=11 // pred_region
          _
        $region44: #{reward_model_forward.1} parent=11 // pred_fallthru
          _
        // Predicated region
        $region45: #{reward_model_forward.1} parent=11 // pred_check
          %p502 = pneg %p269
        $region46: #{reward_model_forward.1} parent=11 // pred_check_branch
          %504 = sbr.rel (%p502) target = $region48
        $region47: #{reward_model_forward.1} parent=11 // pred_region
          _
        $region48: #{reward_model_forward.1} parent=11 // pred_fallthru
          _
        // Predicated region
        $region49: #{reward_model_forward.1} parent=11 // pred_check
          %p505 = pneg %p290
        $region50: #{reward_model_forward.1} parent=11 // pred_check_branch
          %507 = sbr.rel (%p505) target = $region52
        $region51: #{reward_model_forward.1} parent=11 // pred_region
          _
        $region52: #{reward_model_forward.1} parent=11 // pred_fallthru
          _
        // Predicated region
        $region53: #{reward_model_forward.1} parent=11 // pred_check
          %p508 = pneg %p311
        $region54: #{reward_model_forward.1} parent=11 // pred_check_branch
          %510 = sbr.rel (%p508) target = $region56
        $region55: #{reward_model_forward.1} parent=11 // pred_region
          _
        $region56: #{reward_model_forward.1} parent=11 // pred_fallthru
          _
        // Predicated region
        $region57: #{reward_model_forward.1} parent=11 // pred_check
          %p511 = pneg %p332
        $region58: #{reward_model_forward.1} parent=11 // pred_check_branch
          %513 = sbr.rel (%p511) target = $region60
        $region59: #{reward_model_forward.1} parent=11 // pred_region
          _
        $region60: #{reward_model_forward.1} parent=11 // pred_fallthru
          _
        // Predicated region
        $region61: #{reward_model_forward.1} parent=11 // pred_check
          %p514 = pneg %p353
        $region62: #{reward_model_forward.1} parent=11 // pred_check_branch
          %516 = sbr.rel (%p514) target = $region64
        $region63: #{reward_model_forward.1} parent=11 // pred_region
          _
        $region64: #{reward_model_forward.1} parent=11 // pred_fallthru
          _
        // Predicated region
        $region65: #{reward_model_forward.1} parent=11 // pred_check
          %p517 = pneg %p374
        $region66: #{reward_model_forward.1} parent=11 // pred_check_branch
          %519 = sbr.rel (%p517) target = $region68
        $region67: #{reward_model_forward.1} parent=11 // pred_region
          _
        $region68: #{reward_model_forward.1} parent=11 // pred_fallthru
          _
        // Predicated region
        $region69: #{reward_model_forward.1} parent=11 // pred_check
          %p520 = pneg %p395
        $region70: #{reward_model_forward.1} parent=11 // pred_check_branch
          %522 = sbr.rel (%p520) target = $region72
        $region71: #{reward_model_forward.1} parent=11 // pred_region
          _
        $region72: #{reward_model_forward.1} parent=11 // pred_fallthru
          _
        // Predicated region
        $region73: #{reward_model_forward.1} parent=11 // pred_check
          %p523 = pneg %p416
        $region74: #{reward_model_forward.1} parent=11 // pred_check_branch
          %525 = sbr.rel (%p523) target = $region76
        $region75: #{reward_model_forward.1} parent=11 // pred_region
          _
        $region76: #{reward_model_forward.1} parent=11 // pred_fallthru
          _
        // Predicated region
        $region77: #{reward_model_forward.1} parent=11 // pred_check
          %p526 = pneg %p437
        $region78: #{reward_model_forward.1} parent=11 // pred_check_branch
          %528 = sbr.rel (%p526) target = $region80
        $region79: #{reward_model_forward.1} parent=11 // pred_region
          _
        $region80: #{reward_model_forward.1} parent=11 // pred_fallthru
          _
      $region12: #{reward_model_forward.1} parent=5 // pred_fallthru
        _
      %p529 = scmp.lt.s32.totalorder %s28, 2
      // Predicated region
      $region81: #{reward_model_forward.1} parent=5 // pred_check
        %p530 = pneg %p529
      $region82: #{reward_model_forward.1} parent=5 // pred_check_branch
        %532 = sbr.rel (%p530) target = $region84
      $region83: #{reward_model_forward.1} parent=5 // pred_region
        // Predicated region
        $region85: #{reward_model_forward.1} parent=83 // pred_check
          %p533 = pneg %p48
        $region86: #{reward_model_forward.1} parent=83 // pred_check_branch
          %535 = sbr.rel (%p533) target = $region88
        $region87: #{reward_model_forward.1} parent=83 // pred_region
          %s536 = smul.u32 2, %s28
          %p537 = scmp.lt.s32.totalorder %s536, 3
          %s538 = scalar_select %p537, %s536, 3
          %s539 = smul.addr %s538, 8
          %s540 = scalar_lea.vmem %s0, %s539
          %s541 = smul.u32 2, %s28
        $region88: #{reward_model_forward.1} parent=83 // pred_fallthru
          _
        // Predicated region
        $region89: #{reward_model_forward.1} parent=83 // pred_check
          %p542 = pneg %p74
        $region90: #{reward_model_forward.1} parent=83 // pred_check_branch
          %544 = sbr.rel (%p542) target = $region92
        $region91: #{reward_model_forward.1} parent=83 // pred_region
          %s545 = smul.u32 2, %s28
          %p546 = scmp.lt.s32.totalorder %s545, 3
          %s547 = scalar_select %p546, %s545, 3
          %s548 = smul.addr %s547, 5
          %s549 = smul.addr %s548, 2
          %s550 = scalar_lea.vmem %s1, %s549
          %s551 = smul.u32 2, %s28
        $region92: #{reward_model_forward.1} parent=83 // pred_fallthru
          _
      $region84: #{reward_model_forward.1} parent=5 // pred_fallthru
        _
      %p552 = scmp.le.s32.totalorder 1, %s28
      %p553 = scmp.lt.s32.totalorder %s28, 3
      %p554 = pnand %p552, %p553
      %p555 = pneg %p554
      // Predicated region
      $region93: #{reward_model_forward.1} parent=5 // pred_check
        _
      $region94: #{reward_model_forward.1} parent=5 // pred_check_branch
        %557 = sbr.rel (%p554) target = $region96
      $region95: #{reward_model_forward.1} parent=5 // pred_region
        %s558 = ssub.s32 %s28, 1
        %s559 = smul.u32 2, %s33
        %p560 = scmp.lt.s32.totalorder %s559, 3
        %s561 = scalar_select %p560, %s559, 3
        %s562 = smul.addr %s561, 8
        %s563 = scalar_lea.vmem %s0, %s562
        %p564 = pneg %p54
        %p565 = pneg %p51
        %s566 = smul.u32 2, %s33
        %p567 = scmp.lt.s32.totalorder %s566, 3
        %s568 = scalar_select %p567, %s566, 3
        %s569 = smul.addr %s568, 5
        %s570 = smul.addr %s569, 2
        %s571 = scalar_lea.vmem %s1, %s570
        %p572 = pneg %p80
        %p573 = pneg %p77
        %p574 = pneg %p101
        %p575 = pneg %p98
        %p576 = pneg %p122
        %p577 = pneg %p119
        %p578 = pneg %p143
        %p579 = pneg %p140
        %p580 = pneg %p164
        %p581 = pneg %p161
        %p582 = pneg %p185
        %p583 = pneg %p182
        %p584 = pneg %p206
        %p585 = pneg %p203
        %p586 = pneg %p227
        %p587 = pneg %p224
        %p588 = pneg %p248
        %p589 = pneg %p245
        %p590 = pneg %p269
        %p591 = pneg %p266
        %p592 = pneg %p290
        %p593 = pneg %p287
        %p594 = pneg %p311
        %p595 = pneg %p308
        %p596 = pneg %p332
        %p597 = pneg %p329
        %p598 = pneg %p353
        %p599 = pneg %p350
        %p600 = pneg %p374
        %p601 = pneg %p371
        %p602 = pneg %p395
        %p603 = pneg %p392
        %p604 = pneg %p416
        %p605 = pneg %p413
        %p606 = pneg %p437
        %p607 = pneg %p434
        %p608 = pneg %p463
        %p609 = pneg %p460
        %s610 = sand.u32 %s450, 1
        %s611 = scalar_lea.sflag [#allocation3], %s610
        %s612 = sand.u32 %s450, 1
        %s613 = smul.addr %s612, 2
        %s614 = scalar_lea.vmem [#allocation2], %s613
        %s615 = smul.u32 2, %s33
        %p616 = scmp.lt.s32.totalorder %s615, 3
        %s617 = scalar_select %p616, %s615, 3
        %s618 = smul.addr %s617, 8
        %s619 = scalar_lea.vmem %s0, %s618
        %s620 = smul.u32 2, %s33
        %s621 = smul.u32 2, %s33
        %p622 = scmp.lt.s32.totalorder %s621, 3
        %s623 = scalar_select %p622, %s621, 3
        %s624 = smul.addr %s623, 5
        %s625 = smul.addr %s624, 2
        %s626 = scalar_lea.vmem %s1, %s625
        %s627 = smul.u32 2, %s33
        %v628 = vld [vmem:[%s626] sm:$0x3]
        %v629 = vld [vmem:[%s626 + $0x2] sm:$0x3]
        %v630 = vld [vmem:[%s626 + $0x4] sm:$0x3]
        %v631 = vld [vmem:[%s626 + $0x6] sm:$0x3]
        %v632 = vld [vmem:[%s626 + $0x8] sm:$0x3]
        %v633 = vld [vmem:[%s626 + $0xa] sm:$0x3]
        %v634 = vld [vmem:[%s626 + $0xc] sm:$0x3]
        %v635 = vld [vmem:[%s626 + $0xe] sm:$0x3]
        %v636 = vld [vmem:[%s626 + $0x10] sm:$0x3]
        %v637 = vld [vmem:[%s626 + $0x12] sm:$0x3]
        %v638 = vunpack.c.0.s8 %v628
        %v639 = vunpack.c.0.s8 %v629
        %v640 = vunpack.c.0.s8 %v630
        %v641 = vunpack.c.0.s8 %v631
        %v642 = vunpack.c.0.s8 %v632
        %v643 = vunpack.c.0.s8 %v633
        %v644 = vunpack.c.0.s8 %v634
        %v645 = vunpack.c.0.s8 %v635
        %v646 = vunpack.c.0.s8 %v636
        %v647 = vunpack.c.0.s8 %v637
        %v648 = vcvt.s32.f32 %v638
        %v649 = vcvt.s32.f32 %v639
        %v650 = vcvt.s32.f32 %v640
        %v651 = vcvt.s32.f32 %v641
        %v652 = vcvt.s32.f32 %v642
        %v653 = vcvt.s32.f32 %v643
        %v654 = vcvt.s32.f32 %v644
        %v655 = vcvt.s32.f32 %v645
        %v656 = vcvt.s32.f32 %v646
        %v657 = vcvt.s32.f32 %v647
        %v658 = vld [vmem:[%s619] sm:$0xff]
        %v659 = vld [vmem:[%s619 + $0x8] sm:$0xff]
        %v660 = vld [vmem:[%s2] sm:$0xff]
        %v661 = vld [vmem:[%s2 + $0x8] sm:$0xff]
        %v662 = vld [vmem:[%s3] sm:$0x1]
        %v664 = vlaneseq
        %v665 = vshrl.u32 %v664, 7
        %v666 = vsub.s32 0, %v665
        %v667 = vrot.slane %v662, %v666
        %vm669 = vcmask 130048
        %v671 = vsel %vm669, %v658, 0
        %v674 = vsel %vm669, %v659, 0
        %676 = vmatprep.subr.mxu0 0.0
        %677 = vmatpush1.msra.mxu0 %v660
        %678 = vmatprep.subr.mxu0 0.0
        %679 = vmatpush1.msra.mxu0 %v661
        %680 = vmatprep.subr.mxu0 0.0
        %681 = vmatpush1.msra.mxu0 0.0
        %682 = vmatprep.subr.mxu0 0.0
        %683 = vmatpush1.msra.mxu0 0.0
        %684 = vmatprep.subr.mxu0 0.0
        %685 = vmatpush1.msra.mxu0 0.0
        %686 = vmatprep.subr.mxu0 0.0
        %687 = vmatpush1.msra.mxu0 0.0
        %688 = vmatprep.subr.mxu0 0.0
        %689 = vmatpush1.msra.mxu0 0.0
        %690 = vmatprep.subr.mxu0 0.0
        %691 = vmatpush1.msra.mxu0 0.0
        %692 = vmatprep.subr.mxu0 0.0
        %693 = vmatpush1.msra.mxu0 0.0
        %694 = vmatprep.subr.mxu0 0.0
        %695 = vmatpush1.msra.mxu0 0.0
        %696 = vmatprep.subr.mxu0 0.0
        %697 = vmatpush1.msra.mxu0 0.0
        %698 = vmatprep.subr.mxu0 0.0
        %699 = vmatpush1.msra.mxu0 0.0
        %700 = vmatprep.subr.mxu0 0.0
        %701 = vmatpush1.msra.mxu0 0.0
        %702 = vmatprep.subr.mxu0 0.0
        %703 = vmatpush1.msra.mxu0 0.0
        %704 = vmatprep.subr.mxu0 0.0
        %705 = vmatpush1.msra.mxu0 0.0
        %706 = vmatprep.subr.mxu0 0.0
        %707 = vmatpush1.msra.mxu0 0.0
        %708 = vmatprep.subr.mxu0 0.0
        %709 = vmatpush1.msra.mxu0 0.0
        %710 = vmatprep.subr.mxu0 0.0
        %711 = vmatpush1.msra.mxu0 0.0
        %712 = vmatprep.subr.mxu0 0.0
        %713 = vmatpush1.msra.mxu0 0.0
        %714 = vmatprep.subr.mxu0 0.0
        %715 = vmatpush1.msra.mxu0 0.0
        %716 = vmatprep.subr.mxu0 0.0
        %717 = vmatpush1.msra.mxu0 0.0
        %718 = vmatprep.subr.mxu0 0.0
        %719 = vmatpush1.msra.mxu0 0.0
        %720 = vmatprep.subr.mxu0 0.0
        %721 = vmatpush1.msra.mxu0 0.0
        %722 = vmatprep.subr.mxu0 0.0
        %723 = vmatpush1.msra.mxu0 0.0
        %724 = vmatprep.subr.mxu0 0.0
        %725 = vmatpush1.msra.mxu0 0.0
        %726 = vmatprep.subr.mxu0 0.0
        %727 = vmatpush1.msra.mxu0 0.0
        %728 = vmatprep.subr.mxu0 0.0
        %729 = vmatpush1.msra.mxu0 0.0
        %730 = vmatprep.subr.mxu0 0.0
        %731 = vmatpush1.msra.mxu0 0.0
        %732 = vmatprep.subr.mxu0 0.0
        %733 = vmatpush1.msra.mxu0 0.0
        %734 = vmatprep.subr.mxu0 0.0
        %735 = vmatpush1.msra.mxu0 0.0
        %736 = vmatprep.subr.mxu0 0.0
        %737 = vmatpush1.msra.mxu0 0.0
        %738 = vmatprep.subr.mxu0 0.0
        %739 = vmatpush1.msra.mxu0 0.0
        %740 = vmatprep.mubr.f32.mxu0 0.0
        %741 = vmatmul.mubr.f32.gmra.mrb[0].mxu0 %v671
        %v742 = vpop.f32.mrb[0].mxu0
        %v743 = vadd.f32 %v667, %v742
        %v744 = vpop.f32.mrb[0].mxu0
        %745 = vmatprep.mubr.f32.mxu0 0.0
        %746 = vmatmul.mubr.f32.gmra.mrb[0].mxu0 %v674
        %v747 = vpop.f32.mrb[0].mxu0
        %v748 = vadd.f32 %v667, %v747
        %v749 = vpop.f32.mrb[0].mxu0
        %750 = vdwg.mxu0
        %v751 = vld [vmem:[%s4] sm:$0xff]
        %v752 = vld [vmem:[%s4 + $0x8] sm:$0xff]
        %v753 = vld [vmem:[%s4 + $0x10] sm:$0xff]
        %v754 = vld [vmem:[%s4 + $0x18] sm:$0xff]
        %v755 = vld [vmem:[%s4 + $0x20] sm:$0xff]
        %vm756 = vcmask 326656
        %v758 = vsel %vm756, %v743, 0
        %v761 = vsel %vm756, %v748, 0
        %763 = vmatprep.subr.mxu0 0.0
        %764 = vmatpush1.msra.mxu0 %v751
        %765 = vmatprep.subr.mxu0 0.0
        %766 = vmatpush1.msra.mxu0 %v752
        %767 = vmatprep.subr.mxu0 0.0
        %768 = vmatpush1.msra.mxu0 %v753
        %769 = vmatprep.subr.mxu0 0.0
        %770 = vmatpush1.msra.mxu0 %v754
        %771 = vmatprep.subr.mxu0 0.0
        %772 = vmatpush1.msra.mxu0 %v755
        %773 = vmatprep.subr.mxu0 0.0
        %774 = vmatpush1.msra.mxu0 0.0
        %775 = vmatprep.subr.mxu0 0.0
        %776 = vmatpush1.msra.mxu0 0.0
        %777 = vmatprep.subr.mxu0 0.0
        %778 = vmatpush1.msra.mxu0 0.0
        %779 = vmatprep.subr.mxu0 0.0
        %780 = vmatpush1.msra.mxu0 0.0
        %781 = vmatprep.subr.mxu0 0.0
        %782 = vmatpush1.msra.mxu0 0.0
        %783 = vmatprep.subr.mxu0 0.0
        %784 = vmatpush1.msra.mxu0 0.0
        %785 = vmatprep.subr.mxu0 0.0
        %786 = vmatpush1.msra.mxu0 0.0
        %787 = vmatprep.subr.mxu0 0.0
        %788 = vmatpush1.msra.mxu0 0.0
        %789 = vmatprep.subr.mxu0 0.0
        %790 = vmatpush1.msra.mxu0 0.0
        %791 = vmatprep.subr.mxu0 0.0
        %792 = vmatpush1.msra.mxu0 0.0
        %793 = vmatprep.subr.mxu0 0.0
        %794 = vmatpush1.msra.mxu0 0.0
        %795 = vmatprep.subr.mxu0 0.0
        %796 = vmatpush1.msra.mxu0 0.0
        %797 = vmatprep.subr.mxu0 0.0
        %798 = vmatpush1.msra.mxu0 0.0
        %799 = vmatprep.subr.mxu0 0.0
        %800 = vmatpush1.msra.mxu0 0.0
        %801 = vmatprep.subr.mxu0 0.0
        %802 = vmatpush1.msra.mxu0 0.0
        %803 = vmatprep.subr.mxu0 0.0
        %804 = vmatpush1.msra.mxu0 0.0
        %805 = vmatprep.subr.mxu0 0.0
        %806 = vmatpush1.msra.mxu0 0.0
        %807 = vmatprep.subr.mxu0 0.0
        %808 = vmatpush1.msra.mxu0 0.0
        %809 = vmatprep.subr.mxu0 0.0
        %810 = vmatpush1.msra.mxu0 0.0
        %811 = vmatprep.subr.mxu0 0.0
        %812 = vmatpush1.msra.mxu0 0.0
        %813 = vmatprep.subr.mxu0 0.0
        %814 = vmatpush1.msra.mxu0 0.0
        %815 = vmatprep.subr.mxu0 0.0
        %816 = vmatpush1.msra.mxu0 0.0
        %817 = vmatprep.subr.mxu0 0.0
        %818 = vmatpush1.msra.mxu0 0.0
        %819 = vmatprep.subr.mxu0 0.0
        %820 = vmatpush1.msra.mxu0 0.0
        %821 = vmatprep.subr.mxu0 0.0
        %822 = vmatpush1.msra.mxu0 0.0
        %823 = vmatprep.subr.mxu0 0.0
        %824 = vmatpush1.msra.mxu0 0.0
        %825 = vmatprep.subr.mxu0 0.0
        %826 = vmatpush1.msra.mxu0 0.0
        %827 = vmatprep.mubr.f32.mxu0 0.0
        %828 = vmatmul.mubr.f32.gmra.mrb[0].mxu0 %v758
        %v829 = vpop.f32.mrb[0].mxu0
        %v830 = vadd.f32 0.0, %v829
        %v831 = vpop.f32.mrb[0].mxu0
        %832 = vmatprep.mubr.f32.mxu0 0.0
        %833 = vmatmul.mubr.f32.gmra.mrb[0].mxu0 %v761
        %v834 = vpop.f32.mrb[0].mxu0
        %v835 = vadd.f32 0.0, %v834
        %v836 = vpop.f32.mrb[0].mxu0
        %837 = vdwg.mxu0
        %v838 = vld [vmem:[%s5] sm:$0x1f]
        %v840 = vsel %vm756, %v838, 0
        %842 = vmatprep.subr.mxu0 0.0
        %843 = vmatpush1.xpose.msra.mxu0 %v758
        %844 = vmatprep.subr.mxu0 0.0
        %845 = vmatpush1.xpose.msra.mxu0 %v761
        %846 = vmatprep.subr.mxu0 0.0
        %847 = vmatpush1.xpose.msra.mxu0 0.0
        %848 = vmatprep.subr.mxu0 0.0
        %849 = vmatpush1.xpose.msra.mxu0 0.0
        %850 = vmatprep.subr.mxu0 0.0
        %851 = vmatpush1.xpose.msra.mxu0 0.0
        %852 = vmatprep.subr.mxu0 0.0
        %853 = vmatpush1.xpose.msra.mxu0 0.0
        %854 = vmatprep.subr.mxu0 0.0
        %855 = vmatpush1.xpose.msra.mxu0 0.0
        %856 = vmatprep.subr.mxu0 0.0
        %857 = vmatpush1.xpose.msra.mxu0 0.0
        %858 = vmatprep.subr.mxu0 0.0
        %859 = vmatpush1.xpose.msra.mxu0 0.0
        %860 = vmatprep.subr.mxu0 0.0
        %861 = vmatpush1.xpose.msra.mxu0 0.0
        %862 = vmatprep.subr.mxu0 0.0
        %863 = vmatpush1.xpose.msra.mxu0 0.0
        %864 = vmatprep.subr.mxu0 0.0
        %865 = vmatpush1.xpose.msra.mxu0 0.0
        %866 = vmatprep.subr.mxu0 0.0
        %867 = vmatpush1.xpose.msra.mxu0 0.0
        %868 = vmatprep.subr.mxu0 0.0
        %869 = vmatpush1.xpose.msra.mxu0 0.0
        %870 = vmatprep.subr.mxu0 0.0
        %871 = vmatpush1.xpose.msra.mxu0 0.0
        %872 = vmatprep.subr.mxu0 0.0
        %873 = vmatpush1.xpose.msra.mxu0 0.0
        %874 = vmatprep.subr.mxu0 0.0
        %875 = vmatpush1.xpose.msra.mxu0 0.0
        %876 = vmatprep.subr.mxu0 0.0
        %877 = vmatpush1.xpose.msra.mxu0 0.0
        %878 = vmatprep.subr.mxu0 0.0
        %879 = vmatpush1.xpose.msra.mxu0 0.0
        %880 = vmatprep.subr.mxu0 0.0
        %881 = vmatpush1.xpose.msra.mxu0 0.0
        %882 = vmatprep.subr.mxu0 0.0
        %883 = vmatpush1.xpose.msra.mxu0 0.0
        %884 = vmatprep.subr.mxu0 0.0
        %885 = vmatpush1.xpose.msra.mxu0 0.0
        %886 = vmatprep.subr.mxu0 0.0
        %887 = vmatpush1.xpose.msra.mxu0 0.0
        %888 = vmatprep.subr.mxu0 0.0
        %889 = vmatpush1.xpose.msra.mxu0 0.0
        %890 = vmatprep.subr.mxu0 0.0
        %891 = vmatpush1.xpose.msra.mxu0 0.0
        %892 = vmatprep.subr.mxu0 0.0
        %893 = vmatpush1.xpose.msra.mxu0 0.0
        %894 = vmatprep.subr.mxu0 0.0
        %895 = vmatpush1.xpose.msra.mxu0 0.0
        %896 = vmatprep.subr.mxu0 0.0
        %897 = vmatpush1.xpose.msra.mxu0 0.0
        %898 = vmatprep.subr.mxu0 0.0
        %899 = vmatpush1.xpose.msra.mxu0 0.0
        %900 = vmatprep.subr.mxu0 0.0
        %901 = vmatpush1.xpose.msra.mxu0 0.0
        %902 = vmatprep.subr.mxu0 0.0
        %903 = vmatpush1.xpose.msra.mxu0 0.0
        %904 = vmatprep.subr.mxu0 0.0
        %905 = vmatpush1.xpose.msra.mxu0 0.0
        %906 = vmatprep.mubr.f32.mxu0 0.0
        %907 = vmatmul.mubr.f32.gmra.mrb[0].mxu0 %v840
        %v908 = vpop.f32.mrb[0].mxu0
        %v909 = vadd.f32 0.0, %v908
        %v910 = vpop.f32.mrb[0].mxu0
        %911 = vdwg.mxu0
        %913 = vset.pattern.permute.xlu0 0
        %914 = vperm.xlu0 %913, %v830
        %v915 = vpop.permute.xlu0 %914
        %v917 = vlaneseq
        %v918 = vshrl.u32 %v917, 7
        %v919 = vsub.s32 0, %v918
        %v920 = vrot.slane %v909, %v919
        %v921 = vadd.f32 %v915, %v920
        %v922 = vmul.f32 %v921, 0.2
        %v923 = vmax.f32 %v921, %v922
        %vm924 = vcmp.gt.f32.partialorder %v648, 0.5
        %v925 = vsel %vm924, %v923, -9e+15
        %926 = vset.pattern.permute.xlu0 1
        %927 = vperm.xlu0 %926, %v830
        %v928 = vpop.permute.xlu0 %927
        %v930 = vlaneseq
        %v931 = vshrl.u32 %v930, 7
        %v932 = vsub.s32 1, %v931
        %v933 = vrot.slane %v909, %v932
        %v934 = vadd.f32 %v928, %v933
        %v935 = vmul.f32 %v934, 0.2
        %v936 = vmax.f32 %v934, %v935
        %vm937 = vcmp.gt.f32.partialorder %v649, 0.5
        %v938 = vsel %vm937, %v936, -9e+15
        %939 = vset.pattern.permute.xlu0 2
        %940 = vperm.xlu0 %939, %v830
        %v941 = vpop.permute.xlu0 %940
        %v943 = vlaneseq
        %v944 = vshrl.u32 %v943, 7
        %v945 = vsub.s32 2, %v944
        %v946 = vrot.slane %v909, %v945
        %v947 = vadd.f32 %v941, %v946
        %v948 = vmul.f32 %v947, 0.2
        %v949 = vmax.f32 %v947, %v948
        %vm950 = vcmp.gt.f32.partialorder %v650, 0.5
        %v951 = vsel %vm950, %v949, -9e+15
        %952 = vset.pattern.permute.xlu0 3
        %953 = vperm.xlu0 %952, %v830
        %v954 = vpop.permute.xlu0 %953
        %v956 = vlaneseq
        %v957 = vshrl.u32 %v956, 7
        %v958 = vsub.s32 3, %v957
        %v959 = vrot.slane %v909, %v958
        %v960 = vadd.f32 %v954, %v959
        %v961 = vmul.f32 %v960, 0.2
        %v962 = vmax.f32 %v960, %v961
        %vm963 = vcmp.gt.f32.partialorder %v651, 0.5
        %v964 = vsel %vm963, %v962, -9e+15
        %965 = vset.pattern.permute.xlu0 4
        %966 = vperm.xlu0 %965, %v830
        %v967 = vpop.permute.xlu0 %966
        %v969 = vlaneseq
        %v970 = vshrl.u32 %v969, 7
        %v971 = vsub.s32 4, %v970
        %v972 = vrot.slane %v909, %v971
        %v973 = vadd.f32 %v967, %v972
        %v974 = vmul.f32 %v973, 0.2
        %v975 = vmax.f32 %v973, %v974
        %vm976 = vcmp.gt.f32.partialorder %v652, 0.5
        %v977 = vsel %vm976, %v975, -9e+15
        %979 = vrot.lane.b32.xlu0 %v938, 8
        %v980 = vpop.permute.xlu0 %979
        %983 = vrot.lane.b32.xlu0 %v951, 16
        %v984 = vpop.permute.xlu0 %983
        %987 = vrot.lane.b32.xlu0 %v964, 24
        %v988 = vpop.permute.xlu0 %987
        %991 = vrot.lane.b32.xlu0 %v977, 32
        %v992 = vpop.permute.xlu0 %991
        %vm994 = vcmask 64512
        %v995 = vsel %vm994, %v925, %v980
        %v996 = vsel %vm669, %v995, %v984
        %vm997 = vcmask 195584
        %v998 = vsel %vm997, %v996, %v988
        %vm999 = vcmask 261120
        %v1000 = vsel %vm999, %v998, %v992
        %1001 = vrot.lane.b32.xlu0 %v743, 120
        %v1002 = vpop.permute.xlu0 %1001
        %1004 = vrot.lane.b32.xlu0 %v743, 112
        %v1005 = vpop.permute.xlu0 %1004
        %1007 = vrot.lane.b32.xlu0 %v743, 104
        %v1008 = vpop.permute.xlu0 %1007
        %1010 = vrot.lane.b32.xlu0 %v743, 96
        %v1011 = vpop.permute.xlu0 %1010
        %v1013 = vsel %vm756, %v1000, -inf
        %1014 = vmax.xlane.f32.xlu0 %v1013
        %v1015 = vpop.xlane.xlu0 %1014
        %v1016 = vsub.f32 %v1000, %v1015
        %v1017 = vmul.f32 %v1016, 1.442695
        %v1018 = vpow.pop %v1017
        %v1019 = vsel %vm756, %v1018, 0.0
        %1020 = vadd.xlane.f32.xlu0 %v1019
        %v1021 = vpop.xlane.xlu0 %1020
        %v1023 = vsel %vm756, %v1018, 0
        %1025 = vmatprep.subr.mxu0 0.0
        %1026 = vmatpush1.msra.mxu0 %v743
        %1027 = vmatprep.subr.mxu0 0.0
        %1028 = vmatpush1.msra.mxu0 %v1002
        %1029 = vmatprep.subr.mxu0 0.0
        %1030 = vmatpush1.msra.mxu0 %v1005
        %1031 = vmatprep.subr.mxu0 0.0
        %1032 = vmatpush1.msra.mxu0 %v1008
        %1033 = vmatprep.subr.mxu0 0.0
        %1034 = vmatpush1.msra.mxu0 %v1011
        %1035 = vmatprep.subr.mxu0 0.0
        %1036 = vmatpush1.msra.mxu0 0.0
        %1037 = vmatprep.subr.mxu0 0.0
        %1038 = vmatpush1.msra.mxu0 0.0
        %1039 = vmatprep.subr.mxu0 0.0
        %1040 = vmatpush1.msra.mxu0 0.0
        %1041 = vmatprep.subr.mxu0 0.0
        %1042 = vmatpush1.msra.mxu0 0.0
        %1043 = vmatprep.subr.mxu0 0.0
        %1044 = vmatpush1.msra.mxu0 0.0
        %1045 = vmatprep.subr.mxu0 0.0
        %1046 = vmatpush1.msra.mxu0 0.0
        %1047 = vmatprep.subr.mxu0 0.0
        %1048 = vmatpush1.msra.mxu0 0.0
        %1049 = vmatprep.subr.mxu0 0.0
        %1050 = vmatpush1.msra.mxu0 0.0
        %1051 = vmatprep.subr.mxu0 0.0
        %1052 = vmatpush1.msra.mxu0 0.0
        %1053 = vmatprep.subr.mxu0 0.0
        %1054 = vmatpush1.msra.mxu0 0.0
        %1055 = vmatprep.subr.mxu0 0.0
        %1056 = vmatpush1.msra.mxu0 0.0
        %1057 = vmatprep.subr.mxu0 0.0
        %1058 = vmatpush1.msra.mxu0 0.0
        %1059 = vmatprep.subr.mxu0 0.0
        %1060 = vmatpush1.msra.mxu0 0.0
        %1061 = vmatprep.subr.mxu0 0.0
        %1062 = vmatpush1.msra.mxu0 0.0
        %1063 = vmatprep.subr.mxu0 0.0
        %1064 = vmatpush1.msra.mxu0 0.0
        %1065 = vmatprep.subr.mxu0 0.0
        %1066 = vmatpush1.msra.mxu0 0.0
        %1067 = vmatprep.subr.mxu0 0.0
        %1068 = vmatpush1.msra.mxu0 0.0
        %1069 = vmatprep.subr.mxu0 0.0
        %1070 = vmatpush1.msra.mxu0 0.0
        %1071 = vmatprep.subr.mxu0 0.0
        %1072 = vmatpush1.msra.mxu0 0.0
        %1073 = vmatprep.subr.mxu0 0.0
        %1074 = vmatpush1.msra.mxu0 0.0
        %1075 = vmatprep.subr.mxu0 0.0
        %1076 = vmatpush1.msra.mxu0 0.0
        %1077 = vmatprep.subr.mxu0 0.0
        %1078 = vmatpush1.msra.mxu0 0.0
        %1079 = vmatprep.subr.mxu0 0.0
        %1080 = vmatpush1.msra.mxu0 0.0
        %1081 = vmatprep.subr.mxu0 0.0
        %1082 = vmatpush1.msra.mxu0 0.0
        %1083 = vmatprep.subr.mxu0 0.0
        %1084 = vmatpush1.msra.mxu0 0.0
        %1085 = vmatprep.subr.mxu0 0.0
        %1086 = vmatpush1.msra.mxu0 0.0
        %1087 = vmatprep.subr.mxu0 0.0
        %1088 = vmatpush1.msra.mxu0 0.0
        %1089 = vmatprep.mubr.f32.mxu0 0.0
        %1090 = vmatmul.mubr.f32.gmra.mrb[0].mxu0 %v1023
        %v1091 = vpop.f32.mrb[0].mxu0
        %v1092 = vadd.f32 0.0, %v1091
        %v1093 = vpop.f32.mrb[0].mxu0
        %1094 = vdwg.mxu0
        %v1095 = vrcp.pop %v1021
        %v1096 = vmul.f32 %v1092, %v1095
        %1098 = vset.pattern.permute.xlu0 0
        %1099 = vperm.xlu0 %1098, %v835
        %v1100 = vpop.permute.xlu0 %1099
        %v1102 = vadd.f32 %v1100, %v920
        %v1103 = vmul.f32 %v1102, 0.2
        %v1104 = vmax.f32 %v1102, %v1103
        %vm1105 = vcmp.gt.f32.partialorder %v653, 0.5
        %1107 = vrot.lane.b32.xlu0 %v1104, 120
        %v1108 = vpop.permute.xlu0 %1107
        %v1110 = vsel %vm1105, %v1108, -9e+15
        %1111 = vset.pattern.permute.xlu0 1
        %1112 = vperm.xlu0 %1111, %v835
        %v1113 = vpop.permute.xlu0 %1112
        %v1115 = vadd.f32 %v1113, %v933
        %v1116 = vmul.f32 %v1115, 0.2
        %v1117 = vmax.f32 %v1115, %v1116
        %vm1118 = vcmp.gt.f32.partialorder %v654, 0.5
        %1120 = vrot.lane.b32.xlu0 %v1117, 120
        %v1121 = vpop.permute.xlu0 %1120
        %v1123 = vsel %vm1118, %v1121, -9e+15
        %1124 = vset.pattern.permute.xlu0 2
        %1125 = vperm.xlu0 %1124, %v835
        %v1126 = vpop.permute.xlu0 %1125
        %v1128 = vadd.f32 %v1126, %v946
        %v1129 = vmul.f32 %v1128, 0.2
        %v1130 = vmax.f32 %v1128, %v1129
        %vm1131 = vcmp.gt.f32.partialorder %v655, 0.5
        %1133 = vrot.lane.b32.xlu0 %v1130, 120
        %v1134 = vpop.permute.xlu0 %1133
        %v1136 = vsel %vm1131, %v1134, -9e+15
        %1137 = vset.pattern.permute.xlu0 3
        %1138 = vperm.xlu0 %1137, %v835
        %v1139 = vpop.permute.xlu0 %1138
        %v1141 = vadd.f32 %v1139, %v959
        %v1142 = vmul.f32 %v1141, 0.2
        %v1143 = vmax.f32 %v1141, %v1142
        %vm1144 = vcmp.gt.f32.partialorder %v656, 0.5
        %1146 = vrot.lane.b32.xlu0 %v1143, 120
        %v1147 = vpop.permute.xlu0 %1146
        %v1149 = vsel %vm1144, %v1147, -9e+15
        %1150 = vset.pattern.permute.xlu0 4
        %1151 = vperm.xlu0 %1150, %v835
        %v1152 = vpop.permute.xlu0 %1151
        %v1154 = vadd.f32 %v1152, %v972
        %v1155 = vmul.f32 %v1154, 0.2
        %v1156 = vmax.f32 %v1154, %v1155
        %vm1157 = vcmp.gt.f32.partialorder %v657, 0.5
        %1159 = vrot.lane.b32.xlu0 %v1156, 120
        %v1160 = vpop.permute.xlu0 %1159
        %v1162 = vsel %vm1157, %v1160, -9e+15
        %1164 = vrot.lane.b32.xlu0 %v1123, 8
        %v1165 = vpop.permute.xlu0 %1164
        %1168 = vrot.lane.b32.xlu0 %v1136, 16
        %v1169 = vpop.permute.xlu0 %1168
        %1172 = vrot.lane.b32.xlu0 %v1149, 24
        %v1173 = vpop.permute.xlu0 %1172
        %1176 = vrot.lane.b32.xlu0 %v1162, 32
        %v1177 = vpop.permute.xlu0 %1176
        %v1179 = vsel %vm994, %v1110, %v1165
        %v1180 = vsel %vm669, %v1179, %v1169
        %v1181 = vsel %vm997, %v1180, %v1173
        %v1182 = vsel %vm999, %v1181, %v1177
        %1183 = vrot.lane.b32.xlu0 %v748, 120
        %v1184 = vpop.permute.xlu0 %1183
        %1186 = vrot.lane.b32.xlu0 %v748, 112
        %v1187 = vpop.permute.xlu0 %1186
        %1189 = vrot.lane.b32.xlu0 %v748, 104
        %v1190 = vpop.permute.xlu0 %1189
        %1192 = vrot.lane.b32.xlu0 %v748, 96
        %v1193 = vpop.permute.xlu0 %1192
        %v1195 = vsel %vm756, %v1182, -inf
        %1196 = vmax.xlane.f32.xlu0 %v1195
        %v1197 = vpop.xlane.xlu0 %1196
        %v1198 = vsub.f32 %v1182, %v1197
        %v1199 = vmul.f32 %v1198, 1.442695
        %v1200 = vpow.pop %v1199
        %v1201 = vsel %vm756, %v1200, 0.0
        %1202 = vadd.xlane.f32.xlu0 %v1201
        %v1203 = vpop.xlane.xlu0 %1202
        %v1205 = vsel %vm756, %v1200, 0
        %1207 = vmatprep.subr.mxu0 0.0
        %1208 = vmatpush1.msra.mxu0 %v748
        %1209 = vmatprep.subr.mxu0 0.0
        %1210 = vmatpush1.msra.mxu0 %v1184
        %1211 = vmatprep.subr.mxu0 0.0
        %1212 = vmatpush1.msra.mxu0 %v1187
        %1213 = vmatprep.subr.mxu0 0.0
        %1214 = vmatpush1.msra.mxu0 %v1190
        %1215 = vmatprep.subr.mxu0 0.0
        %1216 = vmatpush1.msra.mxu0 %v1193
        %1217 = vmatprep.subr.mxu0 0.0
        %1218 = vmatpush1.msra.mxu0 0.0
        %1219 = vmatprep.subr.mxu0 0.0
        %1220 = vmatpush1.msra.mxu0 0.0
        %1221 = vmatprep.subr.mxu0 0.0
        %1222 = vmatpush1.msra.mxu0 0.0
        %1223 = vmatprep.subr.mxu0 0.0
        %1224 = vmatpush1.msra.mxu0 0.0
        %1225 = vmatprep.subr.mxu0 0.0
        %1226 = vmatpush1.msra.mxu0 0.0
        %1227 = vmatprep.subr.mxu0 0.0
        %1228 = vmatpush1.msra.mxu0 0.0
        %1229 = vmatprep.subr.mxu0 0.0
        %1230 = vmatpush1.msra.mxu0 0.0
        %1231 = vmatprep.subr.mxu0 0.0
        %1232 = vmatpush1.msra.mxu0 0.0
        %1233 = vmatprep.subr.mxu0 0.0
        %1234 = vmatpush1.msra.mxu0 0.0
        %1235 = vmatprep.subr.mxu0 0.0
        %1236 = vmatpush1.msra.mxu0 0.0
        %1237 = vmatprep.subr.mxu0 0.0
        %1238 = vmatpush1.msra.mxu0 0.0
        %1239 = vmatprep.subr.mxu0 0.0
        %1240 = vmatpush1.msra.mxu0 0.0
        %1241 = vmatprep.subr.mxu0 0.0
        %1242 = vmatpush1.msra.mxu0 0.0
        %1243 = vmatprep.subr.mxu0 0.0
        %1244 = vmatpush1.msra.mxu0 0.0
        %1245 = vmatprep.subr.mxu0 0.0
        %1246 = vmatpush1.msra.mxu0 0.0
        %1247 = vmatprep.subr.mxu0 0.0
        %1248 = vmatpush1.msra.mxu0 0.0
        %1249 = vmatprep.subr.mxu0 0.0
        %1250 = vmatpush1.msra.mxu0 0.0
        %1251 = vmatprep.subr.mxu0 0.0
        %1252 = vmatpush1.msra.mxu0 0.0
        %1253 = vmatprep.subr.mxu0 0.0
        %1254 = vmatpush1.msra.mxu0 0.0
        %1255 = vmatprep.subr.mxu0 0.0
        %1256 = vmatpush1.msra.mxu0 0.0
        %1257 = vmatprep.subr.mxu0 0.0
        %1258 = vmatpush1.msra.mxu0 0.0
        %1259 = vmatprep.subr.mxu0 0.0
        %1260 = vmatpush1.msra.mxu0 0.0
        %1261 = vmatprep.subr.mxu0 0.0
        %1262 = vmatpush1.msra.mxu0 0.0
        %1263 = vmatprep.subr.mxu0 0.0
        %1264 = vmatpush1.msra.mxu0 0.0
        %1265 = vmatprep.subr.mxu0 0.0
        %1266 = vmatpush1.msra.mxu0 0.0
        %1267 = vmatprep.subr.mxu0 0.0
        %1268 = vmatpush1.msra.mxu0 0.0
        %1269 = vmatprep.subr.mxu0 0.0
        %1270 = vmatpush1.msra.mxu0 0.0
        %1271 = vmatprep.mubr.f32.mxu0 0.0
        %1272 = vmatmul.mubr.f32.gmra.mrb[0].mxu0 %v1205
        %v1273 = vpop.f32.mrb[0].mxu0
        %v1274 = vadd.f32 0.0, %v1273
        %v1275 = vpop.f32.mrb[0].mxu0
        %1276 = vdwg.mxu0
        %v1277 = vrcp.pop %v1203
        %v1278 = vmul.f32 %v1274, %v1277
        %v1279 = vmul.f32 %v1096, 0.2
        %v1280 = vmul.f32 %v1278, 0.2
        %v1281 = vmax.f32 %v1096, %v1279
        %v1282 = vmax.f32 %v1278, %v1280
        %v1283 = vld [vmem:[%s6] sm:$0xff]
        %v1284 = vld [vmem:[%s7] sm:$0x1]
        %v1286 = vlaneseq
        %v1287 = vshrl.u32 %v1286, 7
        %v1288 = vsub.s32 0, %v1287
        %v1289 = vrot.slane %v1284, %v1288
        %v1292 = vsel %vm994, %v1281, 0
        %v1295 = vsel %vm994, %v1282, 0
        %1297 = vmatprep.subr.mxu0 0.0
        %1298 = vmatpush1.msra.mxu0 %v1283
        %1299 = vmatprep.subr.mxu0 0.0
        %1300 = vmatpush1.msra.mxu0 0.0
        %1301 = vmatprep.subr.mxu0 0.0
        %1302 = vmatpush1.msra.mxu0 0.0
        %1303 = vmatprep.subr.mxu0 0.0
        %1304 = vmatpush1.msra.mxu0 0.0
        %1305 = vmatprep.subr.mxu0 0.0
        %1306 = vmatpush1.msra.mxu0 0.0
        %1307 = vmatprep.subr.mxu0 0.0
        %1308 = vmatpush1.msra.mxu0 0.0
        %1309 = vmatprep.subr.mxu0 0.0
        %1310 = vmatpush1.msra.mxu0 0.0
        %1311 = vmatprep.subr.mxu0 0.0
        %1312 = vmatpush1.msra.mxu0 0.0
        %1313 = vmatprep.subr.mxu0 0.0
        %1314 = vmatpush1.msra.mxu0 0.0
        %1315 = vmatprep.subr.mxu0 0.0
        %1316 = vmatpush1.msra.mxu0 0.0
        %1317 = vmatprep.subr.mxu0 0.0
        %1318 = vmatpush1.msra.mxu0 0.0
        %1319 = vmatprep.subr.mxu0 0.0
        %1320 = vmatpush1.msra.mxu0 0.0
        %1321 = vmatprep.subr.mxu0 0.0
        %1322 = vmatpush1.msra.mxu0 0.0
        %1323 = vmatprep.subr.mxu0 0.0
        %1324 = vmatpush1.msra.mxu0 0.0
        %1325 = vmatprep.subr.mxu0 0.0
        %1326 = vmatpush1.msra.mxu0 0.0
        %1327 = vmatprep.subr.mxu0 0.0
        %1328 = vmatpush1.msra.mxu0 0.0
        %1329 = vmatprep.subr.mxu0 0.0
        %1330 = vmatpush1.msra.mxu0 0.0
        %1331 = vmatprep.subr.mxu0 0.0
        %1332 = vmatpush1.msra.mxu0 0.0
        %1333 = vmatprep.subr.mxu0 0.0
        %1334 = vmatpush1.msra.mxu0 0.0
        %1335 = vmatprep.subr.mxu0 0.0
        %1336 = vmatpush1.msra.mxu0 0.0
        %1337 = vmatprep.subr.mxu0 0.0
        %1338 = vmatpush1.msra.mxu0 0.0
        %1339 = vmatprep.subr.mxu0 0.0
        %1340 = vmatpush1.msra.mxu0 0.0
        %1341 = vmatprep.subr.mxu0 0.0
        %1342 = vmatpush1.msra.mxu0 0.0
        %1343 = vmatprep.subr.mxu0 0.0
        %1344 = vmatpush1.msra.mxu0 0.0
        %1345 = vmatprep.subr.mxu0 0.0
        %1346 = vmatpush1.msra.mxu0 0.0
        %1347 = vmatprep.subr.mxu0 0.0
        %1348 = vmatpush1.msra.mxu0 0.0
        %1349 = vmatprep.subr.mxu0 0.0
        %1350 = vmatpush1.msra.mxu0 0.0
        %1351 = vmatprep.subr.mxu0 0.0
        %1352 = vmatpush1.msra.mxu0 0.0
        %1353 = vmatprep.subr.mxu0 0.0
        %1354 = vmatpush1.msra.mxu0 0.0
        %1355 = vmatprep.subr.mxu0 0.0
        %1356 = vmatpush1.msra.mxu0 0.0
        %1357 = vmatprep.subr.mxu0 0.0
        %1358 = vmatpush1.msra.mxu0 0.0
        %1359 = vmatprep.subr.mxu0 0.0
        %1360 = vmatpush1.msra.mxu0 0.0
        %1361 = vmatprep.mubr.f32.mxu0 0.0
        %1362 = vmatmul.mubr.f32.gmra.mrb[0].mxu0 %v1292
        %v1363 = vpop.f32.mrb[0].mxu0
        %v1364 = vadd.f32 %v1289, %v1363
        %v1365 = vpop.f32.mrb[0].mxu0
        %1366 = vmatprep.mubr.f32.mxu0 0.0
        %1367 = vmatmul.mubr.f32.gmra.mrb[0].mxu0 %v1295
        %v1368 = vpop.f32.mrb[0].mxu0
        %v1369 = vadd.f32 %v1289, %v1368
        %v1370 = vpop.f32.mrb[0].mxu0
        %1371 = vdwg.mxu0
        %v1372 = vld [vmem:[%s8] sm:$0xff]
        %v1373 = vld [vmem:[%s8 + $0x8] sm:$0xff]
        %v1374 = vld [vmem:[%s8 + $0x10] sm:$0xff]
        %v1375 = vld [vmem:[%s8 + $0x18] sm:$0xff]
        %v1376 = vld [vmem:[%s8 + $0x20] sm:$0xff]
        %v1378 = vsel %vm756, %v1364, 0
        %v1381 = vsel %vm756, %v1369, 0
        %1383 = vmatprep.subr.mxu0 0.0
        %1384 = vmatpush1.msra.mxu0 %v1372
        %1385 = vmatprep.subr.mxu0 0.0
        %1386 = vmatpush1.msra.mxu0 %v1373
        %1387 = vmatprep.subr.mxu0 0.0
        %1388 = vmatpush1.msra.mxu0 %v1374
        %1389 = vmatprep.subr.mxu0 0.0
        %1390 = vmatpush1.msra.mxu0 %v1375
        %1391 = vmatprep.subr.mxu0 0.0
        %1392 = vmatpush1.msra.mxu0 %v1376
        %1393 = vmatprep.subr.mxu0 0.0
        %1394 = vmatpush1.msra.mxu0 0.0
        %1395 = vmatprep.subr.mxu0 0.0
        %1396 = vmatpush1.msra.mxu0 0.0
        %1397 = vmatprep.subr.mxu0 0.0
        %1398 = vmatpush1.msra.mxu0 0.0
        %1399 = vmatprep.subr.mxu0 0.0
        %1400 = vmatpush1.msra.mxu0 0.0
        %1401 = vmatprep.subr.mxu0 0.0
        %1402 = vmatpush1.msra.mxu0 0.0
        %1403 = vmatprep.subr.mxu0 0.0
        %1404 = vmatpush1.msra.mxu0 0.0
        %1405 = vmatprep.subr.mxu0 0.0
        %1406 = vmatpush1.msra.mxu0 0.0
        %1407 = vmatprep.subr.mxu0 0.0
        %1408 = vmatpush1.msra.mxu0 0.0
        %1409 = vmatprep.subr.mxu0 0.0
        %1410 = vmatpush1.msra.mxu0 0.0
        %1411 = vmatprep.subr.mxu0 0.0
        %1412 = vmatpush1.msra.mxu0 0.0
        %1413 = vmatprep.subr.mxu0 0.0
        %1414 = vmatpush1.msra.mxu0 0.0
        %1415 = vmatprep.subr.mxu0 0.0
        %1416 = vmatpush1.msra.mxu0 0.0
        %1417 = vmatprep.subr.mxu0 0.0
        %1418 = vmatpush1.msra.mxu0 0.0
        %1419 = vmatprep.subr.mxu0 0.0
        %1420 = vmatpush1.msra.mxu0 0.0
        %1421 = vmatprep.subr.mxu0 0.0
        %1422 = vmatpush1.msra.mxu0 0.0
        %1423 = vmatprep.subr.mxu0 0.0
        %1424 = vmatpush1.msra.mxu0 0.0
        %1425 = vmatprep.subr.mxu0 0.0
        %1426 = vmatpush1.msra.mxu0 0.0
        %1427 = vmatprep.subr.mxu0 0.0
        %1428 = vmatpush1.msra.mxu0 0.0
        %1429 = vmatprep.subr.mxu0 0.0
        %1430 = vmatpush1.msra.mxu0 0.0
        %1431 = vmatprep.subr.mxu0 0.0
        %1432 = vmatpush1.msra.mxu0 0.0
        %1433 = vmatprep.subr.mxu0 0.0
        %1434 = vmatpush1.msra.mxu0 0.0
        %1435 = vmatprep.subr.mxu0 0.0
        %1436 = vmatpush1.msra.mxu0 0.0
        %1437 = vmatprep.subr.mxu0 0.0
        %1438 = vmatpush1.msra.mxu0 0.0
        %1439 = vmatprep.subr.mxu0 0.0
        %1440 = vmatpush1.msra.mxu0 0.0
        %1441 = vmatprep.subr.mxu0 0.0
        %1442 = vmatpush1.msra.mxu0 0.0
        %1443 = vmatprep.subr.mxu0 0.0
        %1444 = vmatpush1.msra.mxu0 0.0
        %1445 = vmatprep.subr.mxu0 0.0
        %1446 = vmatpush1.msra.mxu0 0.0
        %1447 = vmatprep.mubr.f32.mxu0 0.0
        %1448 = vmatmul.mubr.f32.gmra.mrb[0].mxu0 %v1378
        %v1449 = vpop.f32.mrb[0].mxu0
        %v1450 = vadd.f32 0.0, %v1449
        %v1451 = vpop.f32.mrb[0].mxu0
        %1452 = vmatprep.mubr.f32.mxu0 0.0
        %1453 = vmatmul.mubr.f32.gmra.mrb[0].mxu0 %v1381
        %v1454 = vpop.f32.mrb[0].mxu0
        %v1455 = vadd.f32 0.0, %v1454
        %v1456 = vpop.f32.mrb[0].mxu0
        %1457 = vdwg.mxu0
        %v1458 = vld [vmem:[%s9] sm:$0x1f]
        %v1460 = vsel %vm756, %v1458, 0
        %1462 = vmatprep.subr.mxu0 0.0
        %1463 = vmatpush1.xpose.msra.mxu0 %v1378
        %1464 = vmatprep.subr.mxu0 0.0
        %1465 = vmatpush1.xpose.msra.mxu0 %v1381
        %1466 = vmatprep.subr.mxu0 0.0
        %1467 = vmatpush1.xpose.msra.mxu0 0.0
        %1468 = vmatprep.subr.mxu0 0.0
        %1469 = vmatpush1.xpose.msra.mxu0 0.0
        %1470 = vmatprep.subr.mxu0 0.0
        %1471 = vmatpush1.xpose.msra.mxu0 0.0
        %1472 = vmatprep.subr.mxu0 0.0
        %1473 = vmatpush1.xpose.msra.mxu0 0.0
        %1474 = vmatprep.subr.mxu0 0.0
        %1475 = vmatpush1.xpose.msra.mxu0 0.0
        %1476 = vmatprep.subr.mxu0 0.0
        %1477 = vmatpush1.xpose.msra.mxu0 0.0
        %1478 = vmatprep.subr.mxu0 0.0
        %1479 = vmatpush1.xpose.msra.mxu0 0.0
        %1480 = vmatprep.subr.mxu0 0.0
        %1481 = vmatpush1.xpose.msra.mxu0 0.0
        %1482 = vmatprep.subr.mxu0 0.0
        %1483 = vmatpush1.xpose.msra.mxu0 0.0
        %1484 = vmatprep.subr.mxu0 0.0
        %1485 = vmatpush1.xpose.msra.mxu0 0.0
        %1486 = vmatprep.subr.mxu0 0.0
        %1487 = vmatpush1.xpose.msra.mxu0 0.0
        %1488 = vmatprep.subr.mxu0 0.0
        %1489 = vmatpush1.xpose.msra.mxu0 0.0
        %1490 = vmatprep.subr.mxu0 0.0
        %1491 = vmatpush1.xpose.msra.mxu0 0.0
        %1492 = vmatprep.subr.mxu0 0.0
        %1493 = vmatpush1.xpose.msra.mxu0 0.0
        %1494 = vmatprep.subr.mxu0 0.0
        %1495 = vmatpush1.xpose.msra.mxu0 0.0
        %1496 = vmatprep.subr.mxu0 0.0
        %1497 = vmatpush1.xpose.msra.mxu0 0.0
        %1498 = vmatprep.subr.mxu0 0.0
        %1499 = vmatpush1.xpose.msra.mxu0 0.0
        %1500 = vmatprep.subr.mxu0 0.0
        %1501 = vmatpush1.xpose.msra.mxu0 0.0
        %1502 = vmatprep.subr.mxu0 0.0
        %1503 = vmatpush1.xpose.msra.mxu0 0.0
        %1504 = vmatprep.subr.mxu0 0.0
        %1505 = vmatpush1.xpose.msra.mxu0 0.0
        %1506 = vmatprep.subr.mxu0 0.0
        %1507 = vmatpush1.xpose.msra.mxu0 0.0
        %1508 = vmatprep.subr.mxu0 0.0
        %1509 = vmatpush1.xpose.msra.mxu0 0.0
        %1510 = vmatprep.subr.mxu0 0.0
        %1511 = vmatpush1.xpose.msra.mxu0 0.0
        %1512 = vmatprep.subr.mxu0 0.0
        %1513 = vmatpush1.xpose.msra.mxu0 0.0
        %1514 = vmatprep.subr.mxu0 0.0
        %1515 = vmatpush1.xpose.msra.mxu0 0.0
        %1516 = vmatprep.subr.mxu0 0.0
        %1517 = vmatpush1.xpose.msra.mxu0 0.0
        %1518 = vmatprep.subr.mxu0 0.0
        %1519 = vmatpush1.xpose.msra.mxu0 0.0
        %1520 = vmatprep.subr.mxu0 0.0
        %1521 = vmatpush1.xpose.msra.mxu0 0.0
        %1522 = vmatprep.subr.mxu0 0.0
        %1523 = vmatpush1.xpose.msra.mxu0 0.0
        %1524 = vmatprep.subr.mxu0 0.0
        %1525 = vmatpush1.xpose.msra.mxu0 0.0
        %1526 = vmatprep.mubr.f32.mxu0 0.0
        %1527 = vmatmul.mubr.f32.gmra.mrb[0].mxu0 %v1460
        %v1528 = vpop.f32.mrb[0].mxu0
        %v1529 = vadd.f32 0.0, %v1528
        %v1530 = vpop.f32.mrb[0].mxu0
        %1531 = vdwg.mxu0
        %1533 = vset.pattern.permute.xlu0 0
        %1534 = vperm.xlu0 %1533, %v1450
        %v1535 = vpop.permute.xlu0 %1534
        %v1537 = vlaneseq
        %v1538 = vshrl.u32 %v1537, 7
        %v1539 = vsub.s32 0, %v1538
        %v1540 = vrot.slane %v1529, %v1539
        %v1541 = vadd.f32 %v1535, %v1540
        %v1542 = vmul.f32 %v1541, 0.2
        %v1543 = vmax.f32 %v1541, %v1542
        %v1544 = vsel %vm924, %v1543, -9e+15
        %1545 = vset.pattern.permute.xlu0 1
        %1546 = vperm.xlu0 %1545, %v1450
        %v1547 = vpop.permute.xlu0 %1546
        %v1549 = vlaneseq
        %v1550 = vshrl.u32 %v1549, 7
        %v1551 = vsub.s32 1, %v1550
        %v1552 = vrot.slane %v1529, %v1551
        %v1553 = vadd.f32 %v1547, %v1552
        %v1554 = vmul.f32 %v1553, 0.2
        %v1555 = vmax.f32 %v1553, %v1554
        %v1556 = vsel %vm937, %v1555, -9e+15
        %1557 = vset.pattern.permute.xlu0 2
        %1558 = vperm.xlu0 %1557, %v1450
        %v1559 = vpop.permute.xlu0 %1558
        %v1561 = vlaneseq
        %v1562 = vshrl.u32 %v1561, 7
        %v1563 = vsub.s32 2, %v1562
        %v1564 = vrot.slane %v1529, %v1563
        %v1565 = vadd.f32 %v1559, %v1564
        %v1566 = vmul.f32 %v1565, 0.2
        %v1567 = vmax.f32 %v1565, %v1566
        %v1568 = vsel %vm950, %v1567, -9e+15
        %1569 = vset.pattern.permute.xlu0 3
        %1570 = vperm.xlu0 %1569, %v1450
        %v1571 = vpop.permute.xlu0 %1570
        %v1573 = vlaneseq
        %v1574 = vshrl.u32 %v1573, 7
        %v1575 = vsub.s32 3, %v1574
        %v1576 = vrot.slane %v1529, %v1575
        %v1577 = vadd.f32 %v1571, %v1576
        %v1578 = vmul.f32 %v1577, 0.2
        %v1579 = vmax.f32 %v1577, %v1578
        %v1580 = vsel %vm963, %v1579, -9e+15
        %1581 = vset.pattern.permute.xlu0 4
        %1582 = vperm.xlu0 %1581, %v1450
        %v1583 = vpop.permute.xlu0 %1582
        %v1585 = vlaneseq
        %v1586 = vshrl.u32 %v1585, 7
        %v1587 = vsub.s32 4, %v1586
        %v1588 = vrot.slane %v1529, %v1587
        %v1589 = vadd.f32 %v1583, %v1588
        %v1590 = vmul.f32 %v1589, 0.2
        %v1591 = vmax.f32 %v1589, %v1590
        %v1592 = vsel %vm976, %v1591, -9e+15
        %1594 = vrot.lane.b32.xlu0 %v1556, 8
        %v1595 = vpop.permute.xlu0 %1594
        %1598 = vrot.lane.b32.xlu0 %v1568, 16
        %v1599 = vpop.permute.xlu0 %1598
        %1602 = vrot.lane.b32.xlu0 %v1580, 24
        %v1603 = vpop.permute.xlu0 %1602
        %1606 = vrot.lane.b32.xlu0 %v1592, 32
        %v1607 = vpop.permute.xlu0 %1606
        %v1609 = vsel %vm994, %v1544, %v1595
        %v1610 = vsel %vm669, %v1609, %v1599
        %v1611 = vsel %vm997, %v1610, %v1603
        %v1612 = vsel %vm999, %v1611, %v1607
        %1613 = vrot.lane.b32.xlu0 %v1364, 120
        %v1614 = vpop.permute.xlu0 %1613
        %1616 = vrot.lane.b32.xlu0 %v1364, 112
        %v1617 = vpop.permute.xlu0 %1616
        %1619 = vrot.lane.b32.xlu0 %v1364, 104
        %v1620 = vpop.permute.xlu0 %1619
        %1622 = vrot.lane.b32.xlu0 %v1364, 96
        %v1623 = vpop.permute.xlu0 %1622
        %v1625 = vsel %vm756, %v1612, -inf
        %1626 = vmax.xlane.f32.xlu0 %v1625
        %v1627 = vpop.xlane.xlu0 %1626
        %v1628 = vsub.f32 %v1612, %v1627
        %v1629 = vmul.f32 %v1628, 1.442695
        %v1630 = vpow.pop %v1629
        %v1631 = vsel %vm756, %v1630, 0.0
        %1632 = vadd.xlane.f32.xlu0 %v1631
        %v1633 = vpop.xlane.xlu0 %1632
        %v1635 = vsel %vm756, %v1630, 0
        %1637 = vmatprep.subr.mxu0 0.0
        %1638 = vmatpush1.msra.mxu0 %v1364
        %1639 = vmatprep.subr.mxu0 0.0
        %1640 = vmatpush1.msra.mxu0 %v1614
        %1641 = vmatprep.subr.mxu0 0.0
        %1642 = vmatpush1.msra.mxu0 %v1617
        %1643 = vmatprep.subr.mxu0 0.0
        %1644 = vmatpush1.msra.mxu0 %v1620
        %1645 = vmatprep.subr.mxu0 0.0
        %1646 = vmatpush1.msra.mxu0 %v1623
        %1647 = vmatprep.subr.mxu0 0.0
        %1648 = vmatpush1.msra.mxu0 0.0
        %1649 = vmatprep.subr.mxu0 0.0
        %1650 = vmatpush1.msra.mxu0 0.0
        %1651 = vmatprep.subr.mxu0 0.0
        %1652 = vmatpush1.msra.mxu0 0.0
        %1653 = vmatprep.subr.mxu0 0.0
        %1654 = vmatpush1.msra.mxu0 0.0
        %1655 = vmatprep.subr.mxu0 0.0
        %1656 = vmatpush1.msra.mxu0 0.0
        %1657 = vmatprep.subr.mxu0 0.0
        %1658 = vmatpush1.msra.mxu0 0.0
        %1659 = vmatprep.subr.mxu0 0.0
        %1660 = vmatpush1.msra.mxu0 0.0
        %1661 = vmatprep.subr.mxu0 0.0
        %1662 = vmatpush1.msra.mxu0 0.0
        %1663 = vmatprep.subr.mxu0 0.0
        %1664 = vmatpush1.msra.mxu0 0.0
        %1665 = vmatprep.subr.mxu0 0.0
        %1666 = vmatpush1.msra.mxu0 0.0
        %1667 = vmatprep.subr.mxu0 0.0
        %1668 = vmatpush1.msra.mxu0 0.0
        %1669 = vmatprep.subr.mxu0 0.0
        %1670 = vmatpush1.msra.mxu0 0.0
        %1671 = vmatprep.subr.mxu0 0.0
        %1672 = vmatpush1.msra.mxu0 0.0
        %1673 = vmatprep.subr.mxu0 0.0
        %1674 = vmatpush1.msra.mxu0 0.0
        %1675 = vmatprep.subr.mxu0 0.0
        %1676 = vmatpush1.msra.mxu0 0.0
        %1677 = vmatprep.subr.mxu0 0.0
        %1678 = vmatpush1.msra.mxu0 0.0
        %1679 = vmatprep.subr.mxu0 0.0
        %1680 = vmatpush1.msra.mxu0 0.0
        %1681 = vmatprep.subr.mxu0 0.0
        %1682 = vmatpush1.msra.mxu0 0.0
        %1683 = vmatprep.subr.mxu0 0.0
        %1684 = vmatpush1.msra.mxu0 0.0
        %1685 = vmatprep.subr.mxu0 0.0
        %1686 = vmatpush1.msra.mxu0 0.0
        %1687 = vmatprep.subr.mxu0 0.0
        %1688 = vmatpush1.msra.mxu0 0.0
        %1689 = vmatprep.subr.mxu0 0.0
        %1690 = vmatpush1.msra.mxu0 0.0
        %1691 = vmatprep.subr.mxu0 0.0
        %1692 = vmatpush1.msra.mxu0 0.0
        %1693 = vmatprep.subr.mxu0 0.0
        %1694 = vmatpush1.msra.mxu0 0.0
        %1695 = vmatprep.subr.mxu0 0.0
        %1696 = vmatpush1.msra.mxu0 0.0
        %1697 = vmatprep.subr.mxu0 0.0
        %1698 = vmatpush1.msra.mxu0 0.0
        %1699 = vmatprep.subr.mxu0 0.0
        %1700 = vmatpush1.msra.mxu0 0.0
        %1701 = vmatprep.mubr.f32.mxu0 0.0
        %1702 = vmatmul.mubr.f32.gmra.mrb[0].mxu0 %v1635
        %v1703 = vpop.f32.mrb[0].mxu0
        %v1704 = vadd.f32 0.0, %v1703
        %v1705 = vpop.f32.mrb[0].mxu0
        %1706 = vdwg.mxu0
        %v1707 = vrcp.pop %v1633
        %v1708 = vmul.f32 %v1704, %v1707
        %1710 = vset.pattern.permute.xlu0 0
        %1711 = vperm.xlu0 %1710, %v1455
        %v1712 = vpop.permute.xlu0 %1711
        %v1714 = vadd.f32 %v1712, %v1540
        %v1715 = vmul.f32 %v1714, 0.2
        %v1716 = vmax.f32 %v1714, %v1715
        %1718 = vrot.lane.b32.xlu0 %v1716, 120
        %v1719 = vpop.permute.xlu0 %1718
        %v1721 = vsel %vm1105, %v1719, -9e+15
        %1722 = vset.pattern.permute.xlu0 1
        %1723 = vperm.xlu0 %1722, %v1455
        %v1724 = vpop.permute.xlu0 %1723
        %v1726 = vadd.f32 %v1724, %v1552
        %v1727 = vmul.f32 %v1726, 0.2
        %v1728 = vmax.f32 %v1726, %v1727
        %1730 = vrot.lane.b32.xlu0 %v1728, 120
        %v1731 = vpop.permute.xlu0 %1730
        %v1733 = vsel %vm1118, %v1731, -9e+15
        %1734 = vset.pattern.permute.xlu0 2
        %1735 = vperm.xlu0 %1734, %v1455
        %v1736 = vpop.permute.xlu0 %1735
        %v1738 = vadd.f32 %v1736, %v1564
        %v1739 = vmul.f32 %v1738, 0.2
        %v1740 = vmax.f32 %v1738, %v1739
        %1742 = vrot.lane.b32.xlu0 %v1740, 120
        %v1743 = vpop.permute.xlu0 %1742
        %v1745 = vsel %vm1131, %v1743, -9e+15
        %1746 = vset.pattern.permute.xlu0 3
        %1747 = vperm.xlu0 %1746, %v1455
        %v1748 = vpop.permute.xlu0 %1747
        %v1750 = vadd.f32 %v1748, %v1576
        %v1751 = vmul.f32 %v1750, 0.2
        %v1752 = vmax.f32 %v1750, %v1751
        %1754 = vrot.lane.b32.xlu0 %v1752, 120
        %v1755 = vpop.permute.xlu0 %1754
        %v1757 = vsel %vm1144, %v1755, -9e+15
        %1758 = vset.pattern.permute.xlu0 4
        %1759 = vperm.xlu0 %1758, %v1455
        %v1760 = vpop.permute.xlu0 %1759
        %v1762 = vadd.f32 %v1760, %v1588
        %v1763 = vmul.f32 %v1762, 0.2
        %v1764 = vmax.f32 %v1762, %v1763
        %1766 = vrot.lane.b32.xlu0 %v1764, 120
        %v1767 = vpop.permute.xlu0 %1766
        %v1769 = vsel %vm1157, %v1767, -9e+15
        %1771 = vrot.lane.b32.xlu0 %v1733, 8
        %v1772 = vpop.permute.xlu0 %1771
        %1775 = vrot.lane.b32.xlu0 %v1745, 16
        %v1776 = vpop.permute.xlu0 %1775
        %1779 = vrot.lane.b32.xlu0 %v1757, 24
        %v1780 = vpop.permute.xlu0 %1779
        %1783 = vrot.lane.b32.xlu0 %v1769, 32
        %v1784 = vpop.permute.xlu0 %1783
        %v1786 = vsel %vm994, %v1721, %v1772
        %v1787 = vsel %vm669, %v1786, %v1776
        %v1788 = vsel %vm997, %v1787, %v1780
        %v1789 = vsel %vm999, %v1788, %v1784
        %1790 = vrot.lane.b32.xlu0 %v1369, 120
        %v1791 = vpop.permute.xlu0 %1790
        %1793 = vrot.lane.b32.xlu0 %v1369, 112
        %v1794 = vpop.permute.xlu0 %1793
        %1796 = vrot.lane.b32.xlu0 %v1369, 104
        %v1797 = vpop.permute.xlu0 %1796
        %1799 = vrot.lane.b32.xlu0 %v1369, 96
        %v1800 = vpop.permute.xlu0 %1799
        %v1802 = vsel %vm756, %v1789, -inf
        %1803 = vmax.xlane.f32.xlu0 %v1802
        %v1804 = vpop.xlane.xlu0 %1803
        %v1805 = vsub.f32 %v1789, %v1804
        %v1806 = vmul.f32 %v1805, 1.442695
        %v1807 = vpow.pop %v1806
        %v1808 = vsel %vm756, %v1807, 0.0
        %1809 = vadd.xlane.f32.xlu0 %v1808
        %v1810 = vpop.xlane.xlu0 %1809
        %v1812 = vsel %vm756, %v1807, 0
        %1814 = vmatprep.subr.mxu0 0.0
        %1815 = vmatpush1.msra.mxu0 %v1369
        %1816 = vmatprep.subr.mxu0 0.0
        %1817 = vmatpush1.msra.mxu0 %v1791
        %1818 = vmatprep.subr.mxu0 0.0
        %1819 = vmatpush1.msra.mxu0 %v1794
        %1820 = vmatprep.subr.mxu0 0.0
        %1821 = vmatpush1.msra.mxu0 %v1797
        %1822 = vmatprep.subr.mxu0 0.0
        %1823 = vmatpush1.msra.mxu0 %v1800
        %1824 = vmatprep.subr.mxu0 0.0
        %1825 = vmatpush1.msra.mxu0 0.0
        %1826 = vmatprep.subr.mxu0 0.0
        %1827 = vmatpush1.msra.mxu0 0.0
        %1828 = vmatprep.subr.mxu0 0.0
        %1829 = vmatpush1.msra.mxu0 0.0
        %1830 = vmatprep.subr.mxu0 0.0
        %1831 = vmatpush1.msra.mxu0 0.0
        %1832 = vmatprep.subr.mxu0 0.0
        %1833 = vmatpush1.msra.mxu0 0.0
        %1834 = vmatprep.subr.mxu0 0.0
        %1835 = vmatpush1.msra.mxu0 0.0
        %1836 = vmatprep.subr.mxu0 0.0
        %1837 = vmatpush1.msra.mxu0 0.0
        %1838 = vmatprep.subr.mxu0 0.0
        %1839 = vmatpush1.msra.mxu0 0.0
        %1840 = vmatprep.subr.mxu0 0.0
        %1841 = vmatpush1.msra.mxu0 0.0
        %1842 = vmatprep.subr.mxu0 0.0
        %1843 = vmatpush1.msra.mxu0 0.0
        %1844 = vmatprep.subr.mxu0 0.0
        %1845 = vmatpush1.msra.mxu0 0.0
        %1846 = vmatprep.subr.mxu0 0.0
        %1847 = vmatpush1.msra.mxu0 0.0
        %1848 = vmatprep.subr.mxu0 0.0
        %1849 = vmatpush1.msra.mxu0 0.0
        %1850 = vmatprep.subr.mxu0 0.0
        %1851 = vmatpush1.msra.mxu0 0.0
        %1852 = vmatprep.subr.mxu0 0.0
        %1853 = vmatpush1.msra.mxu0 0.0
        %1854 = vmatprep.subr.mxu0 0.0
        %1855 = vmatpush1.msra.mxu0 0.0
        %1856 = vmatprep.subr.mxu0 0.0
        %1857 = vmatpush1.msra.mxu0 0.0
        %1858 = vmatprep.subr.mxu0 0.0
        %1859 = vmatpush1.msra.mxu0 0.0
        %1860 = vmatprep.subr.mxu0 0.0
        %1861 = vmatpush1.msra.mxu0 0.0
        %1862 = vmatprep.subr.mxu0 0.0
        %1863 = vmatpush1.msra.mxu0 0.0
        %1864 = vmatprep.subr.mxu0 0.0
        %1865 = vmatpush1.msra.mxu0 0.0
        %1866 = vmatprep.subr.mxu0 0.0
        %1867 = vmatpush1.msra.mxu0 0.0
        %1868 = vmatprep.subr.mxu0 0.0
        %1869 = vmatpush1.msra.mxu0 0.0
        %1870 = vmatprep.subr.mxu0 0.0
        %1871 = vmatpush1.msra.mxu0 0.0
        %1872 = vmatprep.subr.mxu0 0.0
        %1873 = vmatpush1.msra.mxu0 0.0
        %1874 = vmatprep.subr.mxu0 0.0
        %1875 = vmatpush1.msra.mxu0 0.0
        %1876 = vmatprep.subr.mxu0 0.0
        %1877 = vmatpush1.msra.mxu0 0.0
        %1878 = vmatprep.mubr.f32.mxu0 0.0
        %1879 = vmatmul.mubr.f32.gmra.mrb[0].mxu0 %v1812
        %v1880 = vpop.f32.mrb[0].mxu0
        %v1881 = vadd.f32 0.0, %v1880
        %v1882 = vpop.f32.mrb[0].mxu0
        %1883 = vdwg.mxu0
        %v1884 = vrcp.pop %v1810
        %v1885 = vmul.f32 %v1881, %v1884
        %v1886 = vmul.f32 %v1708, 0.2
        %v1887 = vmul.f32 %v1885, 0.2
        %v1888 = vmax.f32 %v1708, %v1886
        %v1889 = vmax.f32 %v1885, %v1887
        %v1890 = vld [vmem:[%s10] sm:$0xff]
        %v1891 = vld [vmem:[%s11] sm:$0x1]
        %v1893 = vlaneseq
        %v1894 = vshrl.u32 %v1893, 7
        %v1895 = vsub.s32 0, %v1894
        %v1896 = vrot.slane %v1891, %v1895
        %v1899 = vsel %vm994, %v1888, 0
        %v1902 = vsel %vm994, %v1889, 0
        %1904 = vmatprep.subr.mxu0 0.0
        %1905 = vmatpush1.msra.mxu0 %v1890
        %1906 = vmatprep.subr.mxu0 0.0
        %1907 = vmatpush1.msra.mxu0 0.0
        %1908 = vmatprep.subr.mxu0 0.0
        %1909 = vmatpush1.msra.mxu0 0.0
        %1910 = vmatprep.subr.mxu0 0.0
        %1911 = vmatpush1.msra.mxu0 0.0
        %1912 = vmatprep.subr.mxu0 0.0
        %1913 = vmatpush1.msra.mxu0 0.0
        %1914 = vmatprep.subr.mxu0 0.0
        %1915 = vmatpush1.msra.mxu0 0.0
        %1916 = vmatprep.subr.mxu0 0.0
        %1917 = vmatpush1.msra.mxu0 0.0
        %1918 = vmatprep.subr.mxu0 0.0
        %1919 = vmatpush1.msra.mxu0 0.0
        %1920 = vmatprep.subr.mxu0 0.0
        %1921 = vmatpush1.msra.mxu0 0.0
        %1922 = vmatprep.subr.mxu0 0.0
        %1923 = vmatpush1.msra.mxu0 0.0
        %1924 = vmatprep.subr.mxu0 0.0
        %1925 = vmatpush1.msra.mxu0 0.0
        %1926 = vmatprep.subr.mxu0 0.0
        %1927 = vmatpush1.msra.mxu0 0.0
        %1928 = vmatprep.subr.mxu0 0.0
        %1929 = vmatpush1.msra.mxu0 0.0
        %1930 = vmatprep.subr.mxu0 0.0
        %1931 = vmatpush1.msra.mxu0 0.0
        %1932 = vmatprep.subr.mxu0 0.0
        %1933 = vmatpush1.msra.mxu0 0.0
        %1934 = vmatprep.subr.mxu0 0.0
        %1935 = vmatpush1.msra.mxu0 0.0
        %1936 = vmatprep.subr.mxu0 0.0
        %1937 = vmatpush1.msra.mxu0 0.0
        %1938 = vmatprep.subr.mxu0 0.0
        %1939 = vmatpush1.msra.mxu0 0.0
        %1940 = vmatprep.subr.mxu0 0.0
        %1941 = vmatpush1.msra.mxu0 0.0
        %1942 = vmatprep.subr.mxu0 0.0
        %1943 = vmatpush1.msra.mxu0 0.0
        %1944 = vmatprep.subr.mxu0 0.0
        %1945 = vmatpush1.msra.mxu0 0.0
        %1946 = vmatprep.subr.mxu0 0.0
        %1947 = vmatpush1.msra.mxu0 0.0
        %1948 = vmatprep.subr.mxu0 0.0
        %1949 = vmatpush1.msra.mxu0 0.0
        %1950 = vmatprep.subr.mxu0 0.0
        %1951 = vmatpush1.msra.mxu0 0.0
        %1952 = vmatprep.subr.mxu0 0.0
        %1953 = vmatpush1.msra.mxu0 0.0
        %1954 = vmatprep.subr.mxu0 0.0
        %1955 = vmatpush1.msra.mxu0 0.0
        %1956 = vmatprep.subr.mxu0 0.0
        %1957 = vmatpush1.msra.mxu0 0.0
        %1958 = vmatprep.subr.mxu0 0.0
        %1959 = vmatpush1.msra.mxu0 0.0
        %1960 = vmatprep.subr.mxu0 0.0
        %1961 = vmatpush1.msra.mxu0 0.0
        %1962 = vmatprep.subr.mxu0 0.0
        %1963 = vmatpush1.msra.mxu0 0.0
        %1964 = vmatprep.subr.mxu0 0.0
        %1965 = vmatpush1.msra.mxu0 0.0
        %1966 = vmatprep.subr.mxu0 0.0
        %1967 = vmatpush1.msra.mxu0 0.0
        %1968 = vmatprep.mubr.f32.mxu0 0.0
        %1969 = vmatmul.mubr.f32.gmra.mrb[0].mxu0 %v1899
        %v1970 = vpop.f32.mrb[0].mxu0
        %v1971 = vadd.f32 %v1896, %v1970
        %v1972 = vpop.f32.mrb[0].mxu0
        %1973 = vmatprep.mubr.f32.mxu0 0.0
        %1974 = vmatmul.mubr.f32.gmra.mrb[0].mxu0 %v1902
        %v1975 = vpop.f32.mrb[0].mxu0
        %v1976 = vadd.f32 %v1896, %v1975
        %v1977 = vpop.f32.mrb[0].mxu0
        %1978 = vdwg.mxu0
        %v1979 = vld [vmem:[%s12] sm:$0xff]
        %v1980 = vld [vmem:[%s12 + $0x8] sm:$0xff]
        %v1981 = vld [vmem:[%s12 + $0x10] sm:$0xff]
        %v1982 = vld [vmem:[%s12 + $0x18] sm:$0xff]
        %v1983 = vld [vmem:[%s12 + $0x20] sm:$0xff]
        %v1985 = vsel %vm756, %v1971, 0
        %v1988 = vsel %vm756, %v1976, 0
        %1990 = vmatprep.subr.mxu0 0.0
        %1991 = vmatpush1.msra.mxu0 %v1979
        %1992 = vmatprep.subr.mxu0 0.0
        %1993 = vmatpush1.msra.mxu0 %v1980
        %1994 = vmatprep.subr.mxu0 0.0
        %1995 = vmatpush1.msra.mxu0 %v1981
        %1996 = vmatprep.subr.mxu0 0.0
        %1997 = vmatpush1.msra.mxu0 %v1982
        %1998 = vmatprep.subr.mxu0 0.0
        %1999 = vmatpush1.msra.mxu0 %v1983
        %2000 = vmatprep.subr.mxu0 0.0
        %2001 = vmatpush1.msra.mxu0 0.0
        %2002 = vmatprep.subr.mxu0 0.0
        %2003 = vmatpush1.msra.mxu0 0.0
        %2004 = vmatprep.subr.mxu0 0.0
        %2005 = vmatpush1.msra.mxu0 0.0
        %2006 = vmatprep.subr.mxu0 0.0
        %2007 = vmatpush1.msra.mxu0 0.0
        %2008 = vmatprep.subr.mxu0 0.0
        %2009 = vmatpush1.msra.mxu0 0.0
        %2010 = vmatprep.subr.mxu0 0.0
        %2011 = vmatpush1.msra.mxu0 0.0
        %2012 = vmatprep.subr.mxu0 0.0
        %2013 = vmatpush1.msra.mxu0 0.0
        %2014 = vmatprep.subr.mxu0 0.0
        %2015 = vmatpush1.msra.mxu0 0.0
        %2016 = vmatprep.subr.mxu0 0.0
        %2017 = vmatpush1.msra.mxu0 0.0
        %2018 = vmatprep.subr.mxu0 0.0
        %2019 = vmatpush1.msra.mxu0 0.0
        %2020 = vmatprep.subr.mxu0 0.0
        %2021 = vmatpush1.msra.mxu0 0.0
        %2022 = vmatprep.subr.mxu0 0.0
        %2023 = vmatpush1.msra.mxu0 0.0
        %2024 = vmatprep.subr.mxu0 0.0
        %2025 = vmatpush1.msra.mxu0 0.0
        %2026 = vmatprep.subr.mxu0 0.0
        %2027 = vmatpush1.msra.mxu0 0.0
        %2028 = vmatprep.subr.mxu0 0.0
        %2029 = vmatpush1.msra.mxu0 0.0
        %2030 = vmatprep.subr.mxu0 0.0
        %2031 = vmatpush1.msra.mxu0 0.0
        %2032 = vmatprep.subr.mxu0 0.0
        %2033 = vmatpush1.msra.mxu0 0.0
        %2034 = vmatprep.subr.mxu0 0.0
        %2035 = vmatpush1.msra.mxu0 0.0
        %2036 = vmatprep.subr.mxu0 0.0
        %2037 = vmatpush1.msra.mxu0 0.0
        %2038 = vmatprep.subr.mxu0 0.0
        %2039 = vmatpush1.msra.mxu0 0.0
        %2040 = vmatprep.subr.mxu0 0.0
        %2041 = vmatpush1.msra.mxu0 0.0
        %2042 = vmatprep.subr.mxu0 0.0
        %2043 = vmatpush1.msra.mxu0 0.0
        %2044 = vmatprep.subr.mxu0 0.0
        %2045 = vmatpush1.msra.mxu0 0.0
        %2046 = vmatprep.subr.mxu0 0.0
        %2047 = vmatpush1.msra.mxu0 0.0
        %2048 = vmatprep.subr.mxu0 0.0
        %2049 = vmatpush1.msra.mxu0 0.0
        %2050 = vmatprep.subr.mxu0 0.0
        %2051 = vmatpush1.msra.mxu0 0.0
        %2052 = vmatprep.subr.mxu0 0.0
        %2053 = vmatpush1.msra.mxu0 0.0
        %2054 = vmatprep.mubr.f32.mxu0 0.0
        %2055 = vmatmul.mubr.f32.gmra.mrb[0].mxu0 %v1985
        %v2056 = vpop.f32.mrb[0].mxu0
        %v2057 = vadd.f32 0.0, %v2056
        %v2058 = vpop.f32.mrb[0].mxu0
        %2059 = vmatprep.mubr.f32.mxu0 0.0
        %2060 = vmatmul.mubr.f32.gmra.mrb[0].mxu0 %v1988
        %v2061 = vpop.f32.mrb[0].mxu0
        %v2062 = vadd.f32 0.0, %v2061
        %v2063 = vpop.f32.mrb[0].mxu0
        %2064 = vdwg.mxu0
        %v2065 = vld [vmem:[%s13] sm:$0x1f]
        %v2067 = vsel %vm756, %v2065, 0
        %2069 = vmatprep.subr.mxu0 0.0
        %2070 = vmatpush1.xpose.msra.mxu0 %v1985
        %2071 = vmatprep.subr.mxu0 0.0
        %2072 = vmatpush1.xpose.msra.mxu0 %v1988
        %2073 = vmatprep.subr.mxu0 0.0
        %2074 = vmatpush1.xpose.msra.mxu0 0.0
        %2075 = vmatprep.subr.mxu0 0.0
        %2076 = vmatpush1.xpose.msra.mxu0 0.0
        %2077 = vmatprep.subr.mxu0 0.0
        %2078 = vmatpush1.xpose.msra.mxu0 0.0
        %2079 = vmatprep.subr.mxu0 0.0
        %2080 = vmatpush1.xpose.msra.mxu0 0.0
        %2081 = vmatprep.subr.mxu0 0.0
        %2082 = vmatpush1.xpose.msra.mxu0 0.0
        %2083 = vmatprep.subr.mxu0 0.0
        %2084 = vmatpush1.xpose.msra.mxu0 0.0
        %2085 = vmatprep.subr.mxu0 0.0
        %2086 = vmatpush1.xpose.msra.mxu0 0.0
        %2087 = vmatprep.subr.mxu0 0.0
        %2088 = vmatpush1.xpose.msra.mxu0 0.0
        %2089 = vmatprep.subr.mxu0 0.0
        %2090 = vmatpush1.xpose.msra.mxu0 0.0
        %2091 = vmatprep.subr.mxu0 0.0
        %2092 = vmatpush1.xpose.msra.mxu0 0.0
        %2093 = vmatprep.subr.mxu0 0.0
        %2094 = vmatpush1.xpose.msra.mxu0 0.0
        %2095 = vmatprep.subr.mxu0 0.0
        %2096 = vmatpush1.xpose.msra.mxu0 0.0
        %2097 = vmatprep.subr.mxu0 0.0
        %2098 = vmatpush1.xpose.msra.mxu0 0.0
        %2099 = vmatprep.subr.mxu0 0.0
        %2100 = vmatpush1.xpose.msra.mxu0 0.0
        %2101 = vmatprep.subr.mxu0 0.0
        %2102 = vmatpush1.xpose.msra.mxu0 0.0
        %2103 = vmatprep.subr.mxu0 0.0
        %2104 = vmatpush1.xpose.msra.mxu0 0.0
        %2105 = vmatprep.subr.mxu0 0.0
        %2106 = vmatpush1.xpose.msra.mxu0 0.0
        %2107 = vmatprep.subr.mxu0 0.0
        %2108 = vmatpush1.xpose.msra.mxu0 0.0
        %2109 = vmatprep.subr.mxu0 0.0
        %2110 = vmatpush1.xpose.msra.mxu0 0.0
        %2111 = vmatprep.subr.mxu0 0.0
        %2112 = vmatpush1.xpose.msra.mxu0 0.0
        %2113 = vmatprep.subr.mxu0 0.0
        %2114 = vmatpush1.xpose.msra.mxu0 0.0
        %2115 = vmatprep.subr.mxu0 0.0
        %2116 = vmatpush1.xpose.msra.mxu0 0.0
        %2117 = vmatprep.subr.mxu0 0.0
        %2118 = vmatpush1.xpose.msra.mxu0 0.0
        %2119 = vmatprep.subr.mxu0 0.0
        %2120 = vmatpush1.xpose.msra.mxu0 0.0
        %2121 = vmatprep.subr.mxu0 0.0
        %2122 = vmatpush1.xpose.msra.mxu0 0.0
        %2123 = vmatprep.subr.mxu0 0.0
        %2124 = vmatpush1.xpose.msra.mxu0 0.0
        %2125 = vmatprep.subr.mxu0 0.0
        %2126 = vmatpush1.xpose.msra.mxu0 0.0
        %2127 = vmatprep.subr.mxu0 0.0
        %2128 = vmatpush1.xpose.msra.mxu0 0.0
        %2129 = vmatprep.subr.mxu0 0.0
        %2130 = vmatpush1.xpose.msra.mxu0 0.0
        %2131 = vmatprep.subr.mxu0 0.0
        %2132 = vmatpush1.xpose.msra.mxu0 0.0
        %2133 = vmatprep.mubr.f32.mxu0 0.0
        %2134 = vmatmul.mubr.f32.gmra.mrb[0].mxu0 %v2067
        %v2135 = vpop.f32.mrb[0].mxu0
        %v2136 = vadd.f32 0.0, %v2135
        %v2137 = vpop.f32.mrb[0].mxu0
        %2138 = vdwg.mxu0
        %2140 = vset.pattern.permute.xlu0 0
        %2141 = vperm.xlu0 %2140, %v2057
        %v2142 = vpop.permute.xlu0 %2141
        %v2144 = vlaneseq
        %v2145 = vshrl.u32 %v2144, 7
        %v2146 = vsub.s32 0, %v2145
        %v2147 = vrot.slane %v2136, %v2146
        %v2148 = vadd.f32 %v2142, %v2147
        %v2149 = vmul.f32 %v2148, 0.2
        %v2150 = vmax.f32 %v2148, %v2149
        %v2151 = vsel %vm924, %v2150, -9e+15
        %2152 = vset.pattern.permute.xlu0 1
        %2153 = vperm.xlu0 %2152, %v2057
        %v2154 = vpop.permute.xlu0 %2153
        %v2156 = vlaneseq
        %v2157 = vshrl.u32 %v2156, 7
        %v2158 = vsub.s32 1, %v2157
        %v2159 = vrot.slane %v2136, %v2158
        %v2160 = vadd.f32 %v2154, %v2159
        %v2161 = vmul.f32 %v2160, 0.2
        %v2162 = vmax.f32 %v2160, %v2161
        %v2163 = vsel %vm937, %v2162, -9e+15
        %2164 = vset.pattern.permute.xlu0 2
        %2165 = vperm.xlu0 %2164, %v2057
        %v2166 = vpop.permute.xlu0 %2165
        %v2168 = vlaneseq
        %v2169 = vshrl.u32 %v2168, 7
        %v2170 = vsub.s32 2, %v2169
        %v2171 = vrot.slane %v2136, %v2170
        %v2172 = vadd.f32 %v2166, %v2171
        %v2173 = vmul.f32 %v2172, 0.2
        %v2174 = vmax.f32 %v2172, %v2173
        %v2175 = vsel %vm950, %v2174, -9e+15
        %2176 = vset.pattern.permute.xlu0 3
        %2177 = vperm.xlu0 %2176, %v2057
        %v2178 = vpop.permute.xlu0 %2177
        %v2180 = vlaneseq
        %v2181 = vshrl.u32 %v2180, 7
        %v2182 = vsub.s32 3, %v2181
        %v2183 = vrot.slane %v2136, %v2182
        %v2184 = vadd.f32 %v2178, %v2183
        %v2185 = vmul.f32 %v2184, 0.2
        %v2186 = vmax.f32 %v2184, %v2185
        %v2187 = vsel %vm963, %v2186, -9e+15
        %2188 = vset.pattern.permute.xlu0 4
        %2189 = vperm.xlu0 %2188, %v2057
        %v2190 = vpop.permute.xlu0 %2189
        %v2192 = vlaneseq
        %v2193 = vshrl.u32 %v2192, 7
        %v2194 = vsub.s32 4, %v2193
        %v2195 = vrot.slane %v2136, %v2194
        %v2196 = vadd.f32 %v2190, %v2195
        %v2197 = vmul.f32 %v2196, 0.2
        %v2198 = vmax.f32 %v2196, %v2197
        %v2199 = vsel %vm976, %v2198, -9e+15
        %2201 = vrot.lane.b32.xlu0 %v2163, 8
        %v2202 = vpop.permute.xlu0 %2201
        %2205 = vrot.lane.b32.xlu0 %v2175, 16
        %v2206 = vpop.permute.xlu0 %2205
        %2209 = vrot.lane.b32.xlu0 %v2187, 24
        %v2210 = vpop.permute.xlu0 %2209
        %2213 = vrot.lane.b32.xlu0 %v2199, 32
        %v2214 = vpop.permute.xlu0 %2213
        %v2216 = vsel %vm994, %v2151, %v2202
        %v2217 = vsel %vm669, %v2216, %v2206
        %v2218 = vsel %vm997, %v2217, %v2210
        %v2219 = vsel %vm999, %v2218, %v2214
        %2220 = vrot.lane.b32.xlu0 %v1971, 120
        %v2221 = vpop.permute.xlu0 %2220
        %2223 = vrot.lane.b32.xlu0 %v1971, 112
        %v2224 = vpop.permute.xlu0 %2223
        %2226 = vrot.lane.b32.xlu0 %v1971, 104
        %v2227 = vpop.permute.xlu0 %2226
        %2229 = vrot.lane.b32.xlu0 %v1971, 96
        %v2230 = vpop.permute.xlu0 %2229
        %v2232 = vsel %vm756, %v2219, -inf
        %2233 = vmax.xlane.f32.xlu0 %v2232
        %v2234 = vpop.xlane.xlu0 %2233
        %v2235 = vsub.f32 %v2219, %v2234
        %v2236 = vmul.f32 %v2235, 1.442695
        %v2237 = vpow.pop %v2236
        %v2238 = vsel %vm756, %v2237, 0.0
        %2239 = vadd.xlane.f32.xlu0 %v2238
        %v2240 = vpop.xlane.xlu0 %2239
        %v2242 = vsel %vm756, %v2237, 0
        %2244 = vmatprep.subr.mxu0 0.0
        %2245 = vmatpush1.msra.mxu0 %v1971
        %2246 = vmatprep.subr.mxu0 0.0
        %2247 = vmatpush1.msra.mxu0 %v2221
        %2248 = vmatprep.subr.mxu0 0.0
        %2249 = vmatpush1.msra.mxu0 %v2224
        %2250 = vmatprep.subr.mxu0 0.0
        %2251 = vmatpush1.msra.mxu0 %v2227
        %2252 = vmatprep.subr.mxu0 0.0
        %2253 = vmatpush1.msra.mxu0 %v2230
        %2254 = vmatprep.subr.mxu0 0.0
        %2255 = vmatpush1.msra.mxu0 0.0
        %2256 = vmatprep.subr.mxu0 0.0
        %2257 = vmatpush1.msra.mxu0 0.0
        %2258 = vmatprep.subr.mxu0 0.0
        %2259 = vmatpush1.msra.mxu0 0.0
        %2260 = vmatprep.subr.mxu0 0.0
        %2261 = vmatpush1.msra.mxu0 0.0
        %2262 = vmatprep.subr.mxu0 0.0
        %2263 = vmatpush1.msra.mxu0 0.0
        %2264 = vmatprep.subr.mxu0 0.0
        %2265 = vmatpush1.msra.mxu0 0.0
        %2266 = vmatprep.subr.mxu0 0.0
        %2267 = vmatpush1.msra.mxu0 0.0
        %2268 = vmatprep.subr.mxu0 0.0
        %2269 = vmatpush1.msra.mxu0 0.0
        %2270 = vmatprep.subr.mxu0 0.0
        %2271 = vmatpush1.msra.mxu0 0.0
        %2272 = vmatprep.subr.mxu0 0.0
        %2273 = vmatpush1.msra.mxu0 0.0
        %2274 = vmatprep.subr.mxu0 0.0
        %2275 = vmatpush1.msra.mxu0 0.0
        %2276 = vmatprep.subr.mxu0 0.0
        %2277 = vmatpush1.msra.mxu0 0.0
        %2278 = vmatprep.subr.mxu0 0.0
        %2279 = vmatpush1.msra.mxu0 0.0
        %2280 = vmatprep.subr.mxu0 0.0
        %2281 = vmatpush1.msra.mxu0 0.0
        %2282 = vmatprep.subr.mxu0 0.0
        %2283 = vmatpush1.msra.mxu0 0.0
        %2284 = vmatprep.subr.mxu0 0.0
        %2285 = vmatpush1.msra.mxu0 0.0
        %2286 = vmatprep.subr.mxu0 0.0
        %2287 = vmatpush1.msra.mxu0 0.0
        %2288 = vmatprep.subr.mxu0 0.0
        %2289 = vmatpush1.msra.mxu0 0.0
        %2290 = vmatprep.subr.mxu0 0.0
        %2291 = vmatpush1.msra.mxu0 0.0
        %2292 = vmatprep.subr.mxu0 0.0
        %2293 = vmatpush1.msra.mxu0 0.0
        %2294 = vmatprep.subr.mxu0 0.0
        %2295 = vmatpush1.msra.mxu0 0.0
        %2296 = vmatprep.subr.mxu0 0.0
        %2297 = vmatpush1.msra.mxu0 0.0
        %2298 = vmatprep.subr.mxu0 0.0
        %2299 = vmatpush1.msra.mxu0 0.0
        %2300 = vmatprep.subr.mxu0 0.0
        %2301 = vmatpush1.msra.mxu0 0.0
        %2302 = vmatprep.subr.mxu0 0.0
        %2303 = vmatpush1.msra.mxu0 0.0
        %2304 = vmatprep.subr.mxu0 0.0
        %2305 = vmatpush1.msra.mxu0 0.0
        %2306 = vmatprep.subr.mxu0 0.0
        %2307 = vmatpush1.msra.mxu0 0.0
        %2308 = vmatprep.mubr.f32.mxu0 0.0
        %2309 = vmatmul.mubr.f32.gmra.mrb[0].mxu0 %v2242
        %v2310 = vpop.f32.mrb[0].mxu0
        %v2311 = vadd.f32 0.0, %v2310
        %v2312 = vpop.f32.mrb[0].mxu0
        %2313 = vdwg.mxu0
        %v2314 = vrcp.pop %v2240
        %v2315 = vmul.f32 %v2311, %v2314
        %2317 = vset.pattern.permute.xlu0 0
        %2318 = vperm.xlu0 %2317, %v2062
        %v2319 = vpop.permute.xlu0 %2318
        %v2321 = vadd.f32 %v2319, %v2147
        %v2322 = vmul.f32 %v2321, 0.2
        %v2323 = vmax.f32 %v2321, %v2322
        %2325 = vrot.lane.b32.xlu0 %v2323, 120
        %v2326 = vpop.permute.xlu0 %2325
        %v2328 = vsel %vm1105, %v2326, -9e+15
        %2329 = vset.pattern.permute.xlu0 1
        %2330 = vperm.xlu0 %2329, %v2062
        %v2331 = vpop.permute.xlu0 %2330
        %v2333 = vadd.f32 %v2331, %v2159
        %v2334 = vmul.f32 %v2333, 0.2
        %v2335 = vmax.f32 %v2333, %v2334
        %2337 = vrot.lane.b32.xlu0 %v2335, 120
        %v2338 = vpop.permute.xlu0 %2337
        %v2340 = vsel %vm1118, %v2338, -9e+15
        %2341 = vset.pattern.permute.xlu0 2
        %2342 = vperm.xlu0 %2341, %v2062
        %v2343 = vpop.permute.xlu0 %2342
        %v2345 = vadd.f32 %v2343, %v2171
        %v2346 = vmul.f32 %v2345, 0.2
        %v2347 = vmax.f32 %v2345, %v2346
        %2349 = vrot.lane.b32.xlu0 %v2347, 120
        %v2350 = vpop.permute.xlu0 %2349
        %v2352 = vsel %vm1131, %v2350, -9e+15
        %2353 = vset.pattern.permute.xlu0 3
        %2354 = vperm.xlu0 %2353, %v2062
        %v2355 = vpop.permute.xlu0 %2354
        %v2357 = vadd.f32 %v2355, %v2183
        %v2358 = vmul.f32 %v2357, 0.2
        %v2359 = vmax.f32 %v2357, %v2358
        %2361 = vrot.lane.b32.xlu0 %v2359, 120
        %v2362 = vpop.permute.xlu0 %2361
        %v2364 = vsel %vm1144, %v2362, -9e+15
        %2365 = vset.pattern.permute.xlu0 4
        %2366 = vperm.xlu0 %2365, %v2062
        %v2367 = vpop.permute.xlu0 %2366
        %v2369 = vadd.f32 %v2367, %v2195
        %v2370 = vmul.f32 %v2369, 0.2
        %v2371 = vmax.f32 %v2369, %v2370
        %2373 = vrot.lane.b32.xlu0 %v2371, 120
        %v2374 = vpop.permute.xlu0 %2373
        %v2376 = vsel %vm1157, %v2374, -9e+15
        %2378 = vrot.lane.b32.xlu0 %v2340, 8
        %v2379 = vpop.permute.xlu0 %2378
        %2382 = vrot.lane.b32.xlu0 %v2352, 16
        %v2383 = vpop.permute.xlu0 %2382
        %2386 = vrot.lane.b32.xlu0 %v2364, 24
        %v2387 = vpop.permute.xlu0 %2386
        %2390 = vrot.lane.b32.xlu0 %v2376, 32
        %v2391 = vpop.permute.xlu0 %2390
        %v2393 = vsel %vm994, %v2328, %v2379
        %v2394 = vsel %vm669, %v2393, %v2383
        %v2395 = vsel %vm997, %v2394, %v2387
        %v2396 = vsel %vm999, %v2395, %v2391
        %2397 = vrot.lane.b32.xlu0 %v1976, 120
        %v2398 = vpop.permute.xlu0 %2397
        %2400 = vrot.lane.b32.xlu0 %v1976, 112
        %v2401 = vpop.permute.xlu0 %2400
        %2403 = vrot.lane.b32.xlu0 %v1976, 104
        %v2404 = vpop.permute.xlu0 %2403
        %2406 = vrot.lane.b32.xlu0 %v1976, 96
        %v2407 = vpop.permute.xlu0 %2406
        %v2409 = vsel %vm756, %v2396, -inf
        %2410 = vmax.xlane.f32.xlu0 %v2409
        %v2411 = vpop.xlane.xlu0 %2410
        %v2412 = vsub.f32 %v2396, %v2411
        %v2413 = vmul.f32 %v2412, 1.442695
        %v2414 = vpow.pop %v2413
        %v2415 = vsel %vm756, %v2414, 0.0
        %2416 = vadd.xlane.f32.xlu0 %v2415
        %v2417 = vpop.xlane.xlu0 %2416
        %v2419 = vsel %vm756, %v2414, 0
        %2421 = vmatprep.subr.mxu0 0.0
        %2422 = vmatpush1.msra.mxu0 %v1976
        %2423 = vmatprep.subr.mxu0 0.0
        %2424 = vmatpush1.msra.mxu0 %v2398
        %2425 = vmatprep.subr.mxu0 0.0
        %2426 = vmatpush1.msra.mxu0 %v2401
        %2427 = vmatprep.subr.mxu0 0.0
        %2428 = vmatpush1.msra.mxu0 %v2404
        %2429 = vmatprep.subr.mxu0 0.0
        %2430 = vmatpush1.msra.mxu0 %v2407
        %2431 = vmatprep.subr.mxu0 0.0
        %2432 = vmatpush1.msra.mxu0 0.0
        %2433 = vmatprep.subr.mxu0 0.0
        %2434 = vmatpush1.msra.mxu0 0.0
        %2435 = vmatprep.subr.mxu0 0.0
        %2436 = vmatpush1.msra.mxu0 0.0
        %2437 = vmatprep.subr.mxu0 0.0
        %2438 = vmatpush1.msra.mxu0 0.0
        %2439 = vmatprep.subr.mxu0 0.0
        %2440 = vmatpush1.msra.mxu0 0.0
        %2441 = vmatprep.subr.mxu0 0.0
        %2442 = vmatpush1.msra.mxu0 0.0
        %2443 = vmatprep.subr.mxu0 0.0
        %2444 = vmatpush1.msra.mxu0 0.0
        %2445 = vmatprep.subr.mxu0 0.0
        %2446 = vmatpush1.msra.mxu0 0.0
        %2447 = vmatprep.subr.mxu0 0.0
        %2448 = vmatpush1.msra.mxu0 0.0
        %2449 = vmatprep.subr.mxu0 0.0
        %2450 = vmatpush1.msra.mxu0 0.0
        %2451 = vmatprep.subr.mxu0 0.0
        %2452 = vmatpush1.msra.mxu0 0.0
        %2453 = vmatprep.subr.mxu0 0.0
        %2454 = vmatpush1.msra.mxu0 0.0
        %2455 = vmatprep.subr.mxu0 0.0
        %2456 = vmatpush1.msra.mxu0 0.0
        %2457 = vmatprep.subr.mxu0 0.0
        %2458 = vmatpush1.msra.mxu0 0.0
        %2459 = vmatprep.subr.mxu0 0.0
        %2460 = vmatpush1.msra.mxu0 0.0
        %2461 = vmatprep.subr.mxu0 0.0
        %2462 = vmatpush1.msra.mxu0 0.0
        %2463 = vmatprep.subr.mxu0 0.0
        %2464 = vmatpush1.msra.mxu0 0.0
        %2465 = vmatprep.subr.mxu0 0.0
        %2466 = vmatpush1.msra.mxu0 0.0
        %2467 = vmatprep.subr.mxu0 0.0
        %2468 = vmatpush1.msra.mxu0 0.0
        %2469 = vmatprep.subr.mxu0 0.0
        %2470 = vmatpush1.msra.mxu0 0.0
        %2471 = vmatprep.subr.mxu0 0.0
        %2472 = vmatpush1.msra.mxu0 0.0
        %2473 = vmatprep.subr.mxu0 0.0
        %2474 = vmatpush1.msra.mxu0 0.0
        %2475 = vmatprep.subr.mxu0 0.0
        %2476 = vmatpush1.msra.mxu0 0.0
        %2477 = vmatprep.subr.mxu0 0.0
        %2478 = vmatpush1.msra.mxu0 0.0
        %2479 = vmatprep.subr.mxu0 0.0
        %2480 = vmatpush1.msra.mxu0 0.0
        %2481 = vmatprep.subr.mxu0 0.0
        %2482 = vmatpush1.msra.mxu0 0.0
        %2483 = vmatprep.subr.mxu0 0.0
        %2484 = vmatpush1.msra.mxu0 0.0
        %2485 = vmatprep.mubr.f32.mxu0 0.0
        %2486 = vmatmul.mubr.f32.gmra.mrb[0].mxu0 %v2419
        %v2487 = vpop.f32.mrb[0].mxu0
        %v2488 = vadd.f32 0.0, %v2487
        %v2489 = vpop.f32.mrb[0].mxu0
        %2490 = vdwg.mxu0
        %v2491 = vrcp.pop %v2417
        %v2492 = vmul.f32 %v2488, %v2491
        %v2493 = vsel %vm994, %v2315, 0.0
        %v2494 = vrot.slane %v2493, 4
        %v2495 = vadd.f32 %v2493, %v2494
        %v2496 = vrot.slane %v2495, 2
        %v2497 = vadd.f32 %v2495, %v2496
        %v2498 = vrot.slane %v2497, 1
        %v2499 = vadd.f32 %v2497, %v2498
        %v2500 = vsel %vm994, %v2492, 0.0
        %v2501 = vrot.slane %v2500, 4
        %v2502 = vadd.f32 %v2500, %v2501
        %v2503 = vrot.slane %v2502, 2
        %v2504 = vadd.f32 %v2502, %v2503
        %v2505 = vrot.slane %v2504, 1
        %v2506 = vadd.f32 %v2504, %v2505
        %v2507 = vrcp.pop 8.0
        %v2508 = vmul.f32 %v2499, %v2507
        %v2509 = vmul.f32 %v2506, %v2507
        %v2510 = vsel %vm994, %v2315, -inf
        %v2511 = vrot.slane %v2510, 4
        %v2512 = vmax.f32 %v2510, %v2511
        %v2513 = vrot.slane %v2512, 2
        %v2514 = vmax.f32 %v2512, %v2513
        %v2515 = vrot.slane %v2514, 1
        %v2516 = vmax.f32 %v2514, %v2515
        %v2517 = vsel %vm994, %v2492, -inf
        %v2518 = vrot.slane %v2517, 4
        %v2519 = vmax.f32 %v2517, %v2518
        %v2520 = vrot.slane %v2519, 2
        %v2521 = vmax.f32 %v2519, %v2520
        %v2522 = vrot.slane %v2521, 1
        %v2523 = vmax.f32 %v2521, %v2522
        %v2524 = vld [vmem:[%s14] sm:$0xff]
        %v2525 = vld [vmem:[%s15] sm:$0xff]
        %vm2528 = vcmask 1041409
        %v2529 = vsel %vm2528, %v2523, %v2516
        %v2530 = vsel %vm994, %v2529, 0
        %2532 = vmatprep.subr.mxu0 0.0
        %2533 = vmatpush1.msra.mxu0 %v2525
        %2534 = vmatprep.subr.mxu0 0.0
        %2535 = vmatpush1.msra.mxu0 0.0
        %2536 = vmatprep.subr.mxu0 0.0
        %2537 = vmatpush1.msra.mxu0 0.0
        %2538 = vmatprep.subr.mxu0 0.0
        %2539 = vmatpush1.msra.mxu0 0.0
        %2540 = vmatprep.subr.mxu0 0.0
        %2541 = vmatpush1.msra.mxu0 0.0
        %2542 = vmatprep.subr.mxu0 0.0
        %2543 = vmatpush1.msra.mxu0 0.0
        %2544 = vmatprep.subr.mxu0 0.0
        %2545 = vmatpush1.msra.mxu0 0.0
        %2546 = vmatprep.subr.mxu0 0.0
        %2547 = vmatpush1.msra.mxu0 0.0
        %2548 = vmatprep.subr.mxu0 0.0
        %2549 = vmatpush1.msra.mxu0 0.0
        %2550 = vmatprep.subr.mxu0 0.0
        %2551 = vmatpush1.msra.mxu0 0.0
        %2552 = vmatprep.subr.mxu0 0.0
        %2553 = vmatpush1.msra.mxu0 0.0
        %2554 = vmatprep.subr.mxu0 0.0
        %2555 = vmatpush1.msra.mxu0 0.0
        %2556 = vmatprep.subr.mxu0 0.0
        %2557 = vmatpush1.msra.mxu0 0.0
        %2558 = vmatprep.subr.mxu0 0.0
        %2559 = vmatpush1.msra.mxu0 0.0
        %2560 = vmatprep.subr.mxu0 0.0
        %2561 = vmatpush1.msra.mxu0 0.0
        %2562 = vmatprep.subr.mxu0 0.0
        %2563 = vmatpush1.msra.mxu0 0.0
        %2564 = vmatprep.subr.mxu0 0.0
        %2565 = vmatpush1.msra.mxu0 0.0
        %2566 = vmatprep.subr.mxu0 0.0
        %2567 = vmatpush1.msra.mxu0 0.0
        %2568 = vmatprep.subr.mxu0 0.0
        %2569 = vmatpush1.msra.mxu0 0.0
        %2570 = vmatprep.subr.mxu0 0.0
        %2571 = vmatpush1.msra.mxu0 0.0
        %2572 = vmatprep.subr.mxu0 0.0
        %2573 = vmatpush1.msra.mxu0 0.0
        %2574 = vmatprep.subr.mxu0 0.0
        %2575 = vmatpush1.msra.mxu0 0.0
        %2576 = vmatprep.subr.mxu0 0.0
        %2577 = vmatpush1.msra.mxu0 0.0
        %2578 = vmatprep.subr.mxu0 0.0
        %2579 = vmatpush1.msra.mxu0 0.0
        %2580 = vmatprep.subr.mxu0 0.0
        %2581 = vmatpush1.msra.mxu0 0.0
        %2582 = vmatprep.subr.mxu0 0.0
        %2583 = vmatpush1.msra.mxu0 0.0
        %2584 = vmatprep.subr.mxu0 0.0
        %2585 = vmatpush1.msra.mxu0 0.0
        %2586 = vmatprep.subr.mxu0 0.0
        %2587 = vmatpush1.msra.mxu0 0.0
        %2588 = vmatprep.subr.mxu0 0.0
        %2589 = vmatpush1.msra.mxu0 0.0
        %2590 = vmatprep.subr.mxu0 0.0
        %2591 = vmatpush1.msra.mxu0 0.0
        %2592 = vmatprep.subr.mxu0 0.0
        %2593 = vmatpush1.msra.mxu0 0.0
        %2594 = vmatprep.subr.mxu0 0.0
        %2595 = vmatpush1.msra.mxu0 0.0
        %2596 = vmatprep.mubr.f32.mxu0 0.0
        %2597 = vmatmul.mubr.f32.gmra.mrb[0].mxu0 %v2530
        %v2598 = vpop.f32.mrb[0].mxu0
        %v2599 = vadd.f32 0.0, %v2598
        %v2600 = vpop.f32.mrb[0].mxu0
        %2601 = vdwg.mxu0
        %v2604 = vsel %vm2528, %v2509, %v2508
        %v2605 = vsel %vm994, %v2604, 0
        %2607 = vmatprep.subr.mxu0 0.0
        %2608 = vmatpush1.msra.mxu0 %v2524
        %2609 = vmatprep.subr.mxu0 0.0
        %2610 = vmatpush1.msra.mxu0 0.0
        %2611 = vmatprep.subr.mxu0 0.0
        %2612 = vmatpush1.msra.mxu0 0.0
        %2613 = vmatprep.subr.mxu0 0.0
        %2614 = vmatpush1.msra.mxu0 0.0
        %2615 = vmatprep.subr.mxu0 0.0
        %2616 = vmatpush1.msra.mxu0 0.0
        %2617 = vmatprep.subr.mxu0 0.0
        %2618 = vmatpush1.msra.mxu0 0.0
        %2619 = vmatprep.subr.mxu0 0.0
        %2620 = vmatpush1.msra.mxu0 0.0
        %2621 = vmatprep.subr.mxu0 0.0
        %2622 = vmatpush1.msra.mxu0 0.0
        %2623 = vmatprep.subr.mxu0 0.0
        %2624 = vmatpush1.msra.mxu0 0.0
        %2625 = vmatprep.subr.mxu0 0.0
        %2626 = vmatpush1.msra.mxu0 0.0
        %2627 = vmatprep.subr.mxu0 0.0
        %2628 = vmatpush1.msra.mxu0 0.0
        %2629 = vmatprep.subr.mxu0 0.0
        %2630 = vmatpush1.msra.mxu0 0.0
        %2631 = vmatprep.subr.mxu0 0.0
        %2632 = vmatpush1.msra.mxu0 0.0
        %2633 = vmatprep.subr.mxu0 0.0
        %2634 = vmatpush1.msra.mxu0 0.0
        %2635 = vmatprep.subr.mxu0 0.0
        %2636 = vmatpush1.msra.mxu0 0.0
        %2637 = vmatprep.subr.mxu0 0.0
        %2638 = vmatpush1.msra.mxu0 0.0
        %2639 = vmatprep.subr.mxu0 0.0
        %2640 = vmatpush1.msra.mxu0 0.0
        %2641 = vmatprep.subr.mxu0 0.0
        %2642 = vmatpush1.msra.mxu0 0.0
        %2643 = vmatprep.subr.mxu0 0.0
        %2644 = vmatpush1.msra.mxu0 0.0
        %2645 = vmatprep.subr.mxu0 0.0
        %2646 = vmatpush1.msra.mxu0 0.0
        %2647 = vmatprep.subr.mxu0 0.0
        %2648 = vmatpush1.msra.mxu0 0.0
        %2649 = vmatprep.subr.mxu0 0.0
        %2650 = vmatpush1.msra.mxu0 0.0
        %2651 = vmatprep.subr.mxu0 0.0
        %2652 = vmatpush1.msra.mxu0 0.0
        %2653 = vmatprep.subr.mxu0 0.0
        %2654 = vmatpush1.msra.mxu0 0.0
        %2655 = vmatprep.subr.mxu0 0.0
        %2656 = vmatpush1.msra.mxu0 0.0
        %2657 = vmatprep.subr.mxu0 0.0
        %2658 = vmatpush1.msra.mxu0 0.0
        %2659 = vmatprep.subr.mxu0 0.0
        %2660 = vmatpush1.msra.mxu0 0.0
        %2661 = vmatprep.subr.mxu0 0.0
        %2662 = vmatpush1.msra.mxu0 0.0
        %2663 = vmatprep.subr.mxu0 0.0
        %2664 = vmatpush1.msra.mxu0 0.0
        %2665 = vmatprep.subr.mxu0 0.0
        %2666 = vmatpush1.msra.mxu0 0.0
        %2667 = vmatprep.subr.mxu0 0.0
        %2668 = vmatpush1.msra.mxu0 0.0
        %2669 = vmatprep.subr.mxu0 0.0
        %2670 = vmatpush1.msra.mxu0 0.0
        %2671 = vmatprep.mubr.f32.mxu0 0.0
        %2672 = vmatmul.mubr.f32.gmra.mrb[0].mxu0 %v2605
        %v2673 = vpop.f32.mrb[0].mxu0
        %v2674 = vadd.f32 %v2599, %v2673
        %v2675 = vpop.f32.mrb[0].mxu0
        %2676 = vdwg.mxu0
        %v2677 = vld [vmem:[%s16] sm:$0x1]
        %v2679 = vlaneseq
        %v2680 = vshrl.u32 %v2679, 7
        %v2681 = vsub.s32 0, %v2680
        %v2682 = vrot.slane %v2677, %v2681
        %v2684 = vadd.f32 %v2674, %v2682
        %v2685 = vmul.f32 %v2684, 0.2
        %v2686 = vmax.f32 %v2684, %v2685
        %v2687 = vld [vmem:[%s17] sm:$0xff]
        %v2688 = vld [vmem:[%s18] sm:$0x1]
        %v2690 = vlaneseq
        %v2691 = vshrl.u32 %v2690, 7
        %v2692 = vsub.s32 0, %v2691
        %v2693 = vrot.slane %v2688, %v2692
        %v2696 = vsel %vm994, %v2686, 0
        %2698 = vmatprep.subr.mxu0 0.0
        %2699 = vmatpush1.msra.mxu0 %v2687
        %2700 = vmatprep.subr.mxu0 0.0
        %2701 = vmatpush1.msra.mxu0 0.0
        %2702 = vmatprep.subr.mxu0 0.0
        %2703 = vmatpush1.msra.mxu0 0.0
        %2704 = vmatprep.subr.mxu0 0.0
        %2705 = vmatpush1.msra.mxu0 0.0
        %2706 = vmatprep.subr.mxu0 0.0
        %2707 = vmatpush1.msra.mxu0 0.0
        %2708 = vmatprep.subr.mxu0 0.0
        %2709 = vmatpush1.msra.mxu0 0.0
        %2710 = vmatprep.subr.mxu0 0.0
        %2711 = vmatpush1.msra.mxu0 0.0
        %2712 = vmatprep.subr.mxu0 0.0
        %2713 = vmatpush1.msra.mxu0 0.0
        %2714 = vmatprep.subr.mxu0 0.0
        %2715 = vmatpush1.msra.mxu0 0.0
        %2716 = vmatprep.subr.mxu0 0.0
        %2717 = vmatpush1.msra.mxu0 0.0
        %2718 = vmatprep.subr.mxu0 0.0
        %2719 = vmatpush1.msra.mxu0 0.0
        %2720 = vmatprep.subr.mxu0 0.0
        %2721 = vmatpush1.msra.mxu0 0.0
        %2722 = vmatprep.subr.mxu0 0.0
        %2723 = vmatpush1.msra.mxu0 0.0
        %2724 = vmatprep.subr.mxu0 0.0
        %2725 = vmatpush1.msra.mxu0 0.0
        %2726 = vmatprep.subr.mxu0 0.0
        %2727 = vmatpush1.msra.mxu0 0.0
        %2728 = vmatprep.subr.mxu0 0.0
        %2729 = vmatpush1.msra.mxu0 0.0
        %2730 = vmatprep.subr.mxu0 0.0
        %2731 = vmatpush1.msra.mxu0 0.0
        %2732 = vmatprep.subr.mxu0 0.0
        %2733 = vmatpush1.msra.mxu0 0.0
        %2734 = vmatprep.subr.mxu0 0.0
        %2735 = vmatpush1.msra.mxu0 0.0
        %2736 = vmatprep.subr.mxu0 0.0
        %2737 = vmatpush1.msra.mxu0 0.0
        %2738 = vmatprep.subr.mxu0 0.0
        %2739 = vmatpush1.msra.mxu0 0.0
        %2740 = vmatprep.subr.mxu0 0.0
        %2741 = vmatpush1.msra.mxu0 0.0
        %2742 = vmatprep.subr.mxu0 0.0
        %2743 = vmatpush1.msra.mxu0 0.0
        %2744 = vmatprep.subr.mxu0 0.0
        %2745 = vmatpush1.msra.mxu0 0.0
        %2746 = vmatprep.subr.mxu0 0.0
        %2747 = vmatpush1.msra.mxu0 0.0
        %2748 = vmatprep.subr.mxu0 0.0
        %2749 = vmatpush1.msra.mxu0 0.0
        %2750 = vmatprep.subr.mxu0 0.0
        %2751 = vmatpush1.msra.mxu0 0.0
        %2752 = vmatprep.subr.mxu0 0.0
        %2753 = vmatpush1.msra.mxu0 0.0
        %2754 = vmatprep.subr.mxu0 0.0
        %2755 = vmatpush1.msra.mxu0 0.0
        %2756 = vmatprep.subr.mxu0 0.0
        %2757 = vmatpush1.msra.mxu0 0.0
        %2758 = vmatprep.subr.mxu0 0.0
        %2759 = vmatpush1.msra.mxu0 0.0
        %2760 = vmatprep.subr.mxu0 0.0
        %2761 = vmatpush1.msra.mxu0 0.0
        %2762 = vmatprep.mubr.f32.mxu0 0.0
        %2763 = vmatmul.mubr.f32.gmra.mrb[0].mxu0 %v2696
        %v2764 = vpop.f32.mrb[0].mxu0
        %v2765 = vadd.f32 %v2693, %v2764
        %v2766 = vpop.f32.mrb[0].mxu0
        %2767 = vdwg.mxu0
        %2768 = vst [vmem:[%s614] sm:$0x3] %v2765
        %s2769 = sand.u32 %s450, 1
        %s2770 = scalar_lea.sflag [#allocation3], %s2769
        %s2771 = sand.u32 %s450, 1
        %s2772 = smul.addr %s2771, 2
        %s2773 = scalar_lea.vmem [#allocation2], %s2772
        // Predicated region
        $region97: #{reward_model_forward.1} parent=95 // pred_check
          %p2774 = pneg %p460
        $region98: #{reward_model_forward.1} parent=95 // pred_check_branch
          %2776 = sbr.rel (%p2774) target = $region100
        $region99: #{reward_model_forward.1} parent=95 // pred_region
          %s2778 = ssub.s32 32, 32
          %2779 = vsyncadd %s2770, %s2778
          %s2780 = smul.addr %s33, 32
          %s2781 = scalar_lea.hbm %s19, %s2780
          %s2783 = sshll.u32 %s2773, 4
          %s2784 = int_to_ptr.vmem [resolvable:$true] %s2783
          %2786 = dma.vmem_to_hbm [thread:$0]  %s2784, 32, %s2781, %s2770
        $region100: #{reward_model_forward.1} parent=95 // pred_fallthru
          _
      $region96: #{reward_model_forward.1} parent=5 // pred_fallthru
        _
      %p2787 = scmp.le.s32.totalorder 2, %s28
      // Predicated region
      $region101: #{reward_model_forward.1} parent=5 // pred_check
        %p2788 = pneg %p2787
      $region102: #{reward_model_forward.1} parent=5 // pred_check_branch
        %2790 = sbr.rel (%p2788) target = $region104
      $region103: #{reward_model_forward.1} parent=5 // pred_region
        %s2791 = ssub.s32 %s28, 2
        // Predicated region
        $region105: #{reward_model_forward.1} parent=103 // pred_check
          %p2792 = pneg %p466
        $region106: #{reward_model_forward.1} parent=103 // pred_check_branch
          %2794 = sbr.rel (%p2792) target = $region108
        $region107: #{reward_model_forward.1} parent=103 // pred_region
          %s2795 = sand.u32 %s451, 1
          %s2796 = scalar_lea.sflag [#allocation3], %s2795
          %s2797 = sand.u32 %s451, 1
          %s2798 = smul.addr %s2797, 2
          %s2799 = scalar_lea.vmem [#allocation2], %s2798
          %2800 = dma.done %s2796, 32
        $region108: #{reward_model_forward.1} parent=103 // pred_fallthru
          _
      $region104: #{reward_model_forward.1} parent=5 // pred_fallthru
        _
    $region6: #{reward_model_forward.1} parent=1 // loop_footer
      %s32 = sadd.s32 1, %s28
    $region7: #{reward_model_forward.1} parent=1 // loop_footer_branch
      %27 = sbr.rel target = $region3
    $region8: #{reward_model_forward.1} parent=1 // loop_exit
      _
    %2801 = vsyncpa [#allocation3], 1
    %s2802 = scalar_lea.sflag [#allocation3], 1
    %2803 = vsyncpa %s2802, 1

</llo_original>
